<compile_context>
chip_gen: v7x
topology: tpu7x:2x2x1
jax: 0.10.0
libtpu: 0.0.40
codegen_flags: <defaults>
</compile_context>

<pallas_src>
import functools

import jax
import jax.numpy as jnp
from jax.experimental import pallas as pl
from jax.experimental.pallas import tpu as pltpu

ACT_BIT = 8
WEIGHT_BIT = 8
BIAS_BIT = 32
BN_EPS = 1e-5


# --------------------------------------------------------------------------
# VMEM budget helper (review: compute the limit from the real footprint,
# including 128-lane / sublane tile padding, instead of a blanket constant).
# --------------------------------------------------------------------------
def _roundup(x, m):
    return ((x + m - 1) // m) * m


def _padded_bytes(shape, dtype):
    itemsize = jnp.dtype(dtype).itemsize
    if not shape:
        return itemsize
    s = list(shape)
    s[-1] = _roundup(s[-1], 128)                          # lane padding
    if len(s) >= 2:
        s[-2] = _roundup(s[-2], max(8, 32 // itemsize))   # sublane (packed) padding
    n = 1
    for d in s:
        n *= d
    return n * itemsize


def _vmem_limit(blocks, scratch=()):
    """blocks: (shape, dtype) of pipelined in/out blocks (double-buffered).
    scratch: (shape, dtype) of persistent VMEM scratch (single-buffered)."""
    total = 2 * sum(_padded_bytes(s, d) for s, d in blocks)
    total += sum(_padded_bytes(s, d) for s, d in scratch)
    total += 4 * 1024 * 1024                              # compiler headroom
    # floor keeps tiny shapes comfortable; cap stays under v7x's 64 MiB physical.
    return int(min(max(total, 16 * 1024 * 1024), 56 * 1024 * 1024))


# --------------------------------------------------------------------------
# Pallas kernels
# --------------------------------------------------------------------------
def _minmax_kernel(x_ref, pmin_ref, pmax_ref):
    x = x_ref[...]
    pmin_ref[...] = jnp.full(pmin_ref.shape, jnp.min(x), jnp.float32)
    pmax_ref[...] = jnp.full(pmax_ref.shape, jnp.max(x), jnp.float32)


def minmax_pallas(x_flat):
    """Global min/max of the raw input, read as lane-dense flat slabs."""
    N, M = x_flat.shape
    x3 = x_flat.reshape(N, 1, M)
    vmem = _vmem_limit([((1, 1, M), jnp.float32),
                        ((1, 1, 128), jnp.float32),
                        ((1, 1, 128), jnp.float32)])
    pmin, pmax = pl.pallas_call(
        _minmax_kernel,
        grid=(N,),
        in_specs=[pl.BlockSpec((1, 1, M), lambda i: (i, 0, 0))],
        out_specs=(pl.BlockSpec((1, 1, 128), lambda i: (i, 0, 0)),
                   pl.BlockSpec((1, 1, 128), lambda i: (i, 0, 0))),
        out_shape=(jax.ShapeDtypeStruct((N, 1, 128), jnp.float32),
                   jax.ShapeDtypeStruct((N, 1, 128), jnp.float32)),
        compiler_params=pltpu.CompilerParams(
            dimension_semantics=("parallel",), vmem_limit_bytes=vmem),
    )(x3)
    return jnp.min(pmin), jnp.max(pmax)


def _qconv_compute(x_ref, rq_ref, w_ref, b_ref, qbuf, col, *, H, W, Cin, relu):
    # In-kernel re-quantization onto the new integer grid (HAWQ fixedpoint_fn,
    # multiply-only form):  q = clamp(round(round(x*inv_pre) * pre/new), -128, 127)
    inv = rq_ref[:, 0:1]
    ratio = rq_ref[:, 1:2]
    q = jnp.clip(jnp.round(jnp.round(x_ref[0] * inv) * ratio), -128.0, 127.0)

    # Zero-pad into the persistent padded scratch: only the 1-pixel halo is
    # cleared (interior is fully overwritten every grid step).
    qbuf[:, 0:1, :] = jnp.zeros((Cin, 1, W + 2), jnp.float32)
    qbuf[:, H + 1:H + 2, :] = jnp.zeros((Cin, 1, W + 2), jnp.float32)
    qbuf[:, 1:H + 1, 0:1] = jnp.zeros((Cin, H, 1), jnp.float32)
    qbuf[:, 1:H + 1, W + 1:W + 2] = jnp.zeros((Cin, H, 1), jnp.float32)
    qbuf[:, 1:H + 1, 1:W + 1] = q.reshape(Cin, H, W)

    # im2col slab (9*Cin, H*W): tap-major rows, matching weight_to_mat().
    for t in range(9):
        kh, kw = divmod(t, 3)
        col[t * Cin:(t + 1) * Cin, :] = (
            qbuf[:, kh:kh + H, kw:kw + W].reshape(Cin, H * W))

    # Single MXU matmul (Cout, 9*Cin) @ (9*Cin, H*W); bf16 operands are exact
    # for int8-range values (single cast of the whole slab), f32 accumulation.
    z = jnp.dot(w_ref[...], col[...].astype(jnp.bfloat16),
                preferred_element_type=jnp.float32)
    z = z + b_ref[...]                              # int32 bias (exact in f32)
    if relu:
        z = jnp.maximum(z, 0.0)
    return z                                        # integer-valued accumulator


def _qconv_kernel(x_ref, rq_ref, w_ref, b_ref, sc_ref,
                  z_ref, pmin_ref, pmax_ref, qbuf, col, *, H, W, Cin, relu):
    z = _qconv_compute(x_ref, rq_ref, w_ref, b_ref, qbuf, col,
                       H=H, W=W, Cin=Cin, relu=relu)
    z_ref[0] = z
    # Fused activation-range epilogue on the real-valued activation.
    y = z * sc_ref[...]
    pmin_ref[...] = jnp.full(pmin_ref.shape, jnp.min(y), jnp.float32)
    pmax_ref[...] = jnp.full(pmax_ref.shape, jnp.max(y), jnp.float32)


def _qconv_res_kernel(x_ref, id_ref, rq_ref, w_ref, b_ref, sc_ref,
                      z_ref, pmin_ref, pmax_ref, qbuf, col, *, H, W, Cin, relu):
    z = _qconv_compute(x_ref, rq_ref, w_ref, b_ref, qbuf, col,
                       H=H, W=W, Cin=Cin, relu=relu)
    z_ref[0] = z
    # Residual sum is only needed for the activation range -> never hits HBM.
    r = z * sc_ref[...] + id_ref[0]
    pmin_ref[...] = jnp.full(pmin_ref.shape, jnp.min(r), jnp.float32)
    pmax_ref[...] = jnp.full(pmax_ref.shape, jnp.max(r), jnp.float32)


def qconv3x3_pallas(x_flat, w_mat, bias_int, out_scale, rq, *,
                    H, W, relu, identity=None):
    """Fused: requant -> 3x3 folded-BN int conv (single im2col matmul) ->
    int bias (-> ReLU) -> integer accumulator out, plus per-image partial
    min/max of y = z*scale (or of y + identity)."""
    N, Cin, HW = x_flat.shape
    assert HW == H * W
    Cout = w_mat.shape[0]

    in_specs = [pl.BlockSpec((1, Cin, HW), lambda i: (i, 0, 0))]
    args = [x_flat]
    kernel = _qconv_kernel
    if identity is not None:
        in_specs.append(pl.BlockSpec((1, Cout, HW), lambda i: (i, 0, 0)))
        args.append(identity)
        kernel = _qconv_res_kernel
    in_specs += [
        pl.BlockSpec((Cin, 2), lambda i: (0, 0)),             # requant params
        pl.BlockSpec((Cout, 9 * Cin), lambda i: (0, 0)),      # folded int weights (bf16)
        pl.BlockSpec((Cout, 1), lambda i: (0, 0)),            # int32 bias (f32-exact)
        pl.BlockSpec((Cout, 1), lambda i: (0, 0)),            # per-channel output scale
    ]
    args += [rq.astype(jnp.float32),
             w_mat.astype(jnp.bfloat16),
             bias_int.astype(jnp.float32).reshape(Cout, 1),
             out_scale.astype(jnp.float32).reshape(Cout, 1)]

    blocks = [((1, Cin, HW), jnp.float32), ((1, Cout, HW), jnp.float32),
              ((1, 1, 128), jnp.float32), ((1, 1, 128), jnp.float32),
              ((Cin, 2), jnp.float32), ((Cout, 9 * Cin), jnp.bfloat16),
              ((Cout, 1), jnp.float32), ((Cout, 1), jnp.float32)]
    if identity is not None:
        blocks.append(((1, Cout, HW), jnp.float32))
    scratch = [((Cin, H + 2, W + 2), jnp.float32), ((9 * Cin, HW), jnp.float32)]
    vmem = _vmem_limit(blocks, scratch)

    return pl.pallas_call(
        functools.partial(kernel, H=H, W=W, Cin=Cin, relu=relu),
        grid=(N,),
        in_specs=in_specs,
        out_specs=(pl.BlockSpec((1, Cout, HW), lambda i: (i, 0, 0)),
                   pl.BlockSpec((1, 1, 128), lambda i: (i, 0, 0)),
                   pl.BlockSpec((1, 1, 128), lambda i: (i, 0, 0))),
        out_shape=(jax.ShapeDtypeStruct((N, Cout, HW), jnp.float32),
                   jax.ShapeDtypeStruct((N, 1, 128), jnp.float32),
                   jax.ShapeDtypeStruct((N, 1, 128), jnp.float32)),
        scratch_shapes=[pltpu.VMEM((Cin, H + 2, W + 2), jnp.float32),
                        pltpu.VMEM((9 * Cin, HW), jnp.float32)],
        compiler_params=pltpu.CompilerParams(
            dimension_semantics=("parallel",), vmem_limit_bytes=vmem),
    )(*args)


def _res_requant_kernel(z_ref, id_ref, rq_ref, o_ref):
    # HAWQ fixedpoint_fn with identity branch + final block ReLU:
    #   q_main = round(z2 * (s1*sw2)/s2)          (z2 is already integer-valued)
    #   q_id   = round(round(id / s_in) * s_in/s2)
    #   out    = relu(clamp(q_main + q_id, -128, 127)) * s2
    z = z_ref[0]
    idn = id_ref[0]
    q_m = jnp.round(z * rq_ref[:, 0:1])
    q_i = jnp.round(jnp.round(idn * rq_ref[:, 1:2]) * rq_ref[:, 2:3])
    q = jnp.clip(q_m + q_i, -128.0, 127.0)
    o_ref[0] = jnp.maximum(q, 0.0) * rq_ref[:, 3:4]


def res_requant_pallas(z2, identity, rq):
    N, C, HW = z2.shape
    spec = pl.BlockSpec((1, C, HW), lambda i: (i, 0, 0))
    vmem = _vmem_limit([((1, C, HW), jnp.float32)] * 3 + [((C, 4), jnp.float32)])
    return pl.pallas_call(
        _res_requant_kernel,
        grid=(N,),
        in_specs=[spec, spec, pl.BlockSpec((C, 4), lambda i: (0, 0))],
        out_specs=spec,
        out_shape=jax.ShapeDtypeStruct((N, C, HW), jnp.float32),
        compiler_params=pltpu.CompilerParams(
            dimension_semantics=("parallel",), vmem_limit_bytes=vmem),
    )(z2, identity, rq.astype(jnp.float32))


# --------------------------------------------------------------------------
# Plain-JAX glue (scale math, BN folding) — tiny scalar / per-channel work
# --------------------------------------------------------------------------
def symmetric_scale(x_min, x_max, num_bits):
    n = 2 ** (num_bits - 1) - 1
    return jnp.clip(jnp.maximum(jnp.abs(x_min), jnp.abs(x_max)), 1e-8, None) / n


def symmetric_quant(x, num_bits, scale):
    n = 2 ** (num_bits - 1) - 1
    return jnp.clip(jnp.round(x / scale), float(-n - 1), float(n))


def fold_bn_quantize(conv_w, gamma, beta, mean, var, pre_act_scale):
    """QuantBnConv2d.set_param + fix_BN=True folding + per-channel weight quant."""
    running_std = jnp.sqrt(var + BN_EPS)
    scale_factor = gamma / running_std
    scaled_w = conv_w * scale_factor[:, None, None, None]          # (Co,Ci,3,3)
    scaled_b = (0.0 - mean) * scale_factor + beta                  # conv has no bias
    w2 = scaled_w.reshape(scaled_w.shape[0], -1)
    w_scale = symmetric_scale(w2.min(axis=1), w2.max(axis=1), WEIGHT_BIT)   # (Co,)
    w_int = symmetric_quant(scaled_w, WEIGHT_BIT, w_scale[:, None, None, None])
    bias_scale = w_scale * pre_act_scale                           # (Co,)
    b_int = symmetric_quant(scaled_b, BIAS_BIT, bias_scale)
    return w_int, b_int, w_scale, bias_scale


def weight_to_mat(w_int):
    """(Cout, Cin, 3, 3) int-valued -> (Cout, 9*Cin), tap-major columns
    (column index = (3*kh + kw)*Cin + cin, matching the im2col slab)."""
    Cout, Cin = w_int.shape[0], w_int.shape[1]
    return jnp.transpose(w_int, (0, 2, 3, 1)).reshape(Cout, 9 * Cin)


# --------------------------------------------------------------------------
# Q_ResBlockBn forward (resize_identity = False)
# --------------------------------------------------------------------------
def q_resblockbn_forward(x_nchw, scaling_factor_int32, params):
    N, C, H, W = x_nchw.shape
    HW = H * W
    s_in = jnp.asarray(scaling_factor_int32, jnp.float32).reshape(())
    x = x_nchw.astype(jnp.float32)
    x_flat = x.reshape(N, C, HW)               # free view of contiguous NCHW

    # ---- self.quant_act: activation range of the raw input ------------------
    x_min, x_max = minmax_pallas(x.reshape(N, C * HW))
    s0 = symmetric_scale(x_min, x_max, ACT_BIT)

    # ---- self.quant_convbn1 + ReLU (requant + conv + range, fused) ----------
    w1_int, b1_int, w1_scale, bias1_scale = fold_bn_quantize(
        params["conv1_w"], params["bn1_gamma"], params["bn1_beta"],
        params["bn1_mean"], params["bn1_var"], s0)
    rq1 = jnp.stack([jnp.broadcast_to(1.0 / s_in, (C,)),
                     jnp.broadcast_to(s_in / s0, (C,))], axis=1)       # (C, 2)
    z1, p1min, p1max = qconv3x3_pallas(
        x_flat, weight_to_mat(w1_int), b1_int, bias1_scale, rq1,
        H=H, W=W, relu=True)

    # ---- self.quant_act1 -----------------------------------------------------
    s1 = symmetric_scale(jnp.min(p1min), jnp.max(p1max), ACT_BIT)

    # ---- self.quant_convbn2 (requant + conv + residual range, fused) --------
    w2_int, b2_int, w2_scale, bias2_scale = fold_bn_quantize(
        params["conv2_w"], params["bn2_gamma"], params["bn2_beta"],
        params["bn2_mean"], params["bn2_var"], s1)
    pre1 = s0 * w1_scale                                               # (C,)
    rq2 = jnp.stack([jnp.ones((C,), jnp.float32),                      # z1 already integer
                     pre1 / s1], axis=1)                               # (C, 2)
    z2, p2min, p2max = qconv3x3_pallas(
        z1, weight_to_mat(w2_int), b2_int, bias2_scale, rq2,
        H=H, W=W, relu=False, identity=x_flat)

    # ---- result = x + identity ; self.quant_act_int32 ; ReLU -----------------
    s2 = symmetric_scale(jnp.min(p2min), jnp.max(p2max), ACT_BIT)
    pre2 = s1 * w2_scale                                               # (C,)
    rqr = jnp.stack([pre2 / s2,
                     jnp.broadcast_to(1.0 / s_in, (C,)),
                     jnp.broadcast_to(s_in / s2, (C,)),
                     jnp.broadcast_to(s2, (C,))], axis=1)              # (C, 4)
    out_flat = res_requant_pallas(z2, x_flat, rqr)

    return out_flat.reshape(N, C, H, W), s2.reshape(1)


# --------------------------------------------------------------------------
if __name__ == "__main__":
    key = jax.random.PRNGKey(0)
    ks = jax.random.split(key, 11)
    N, C, H, W = 2, 4, 16, 16

    # Input is assumed already quantized at scale s_in (scaling_factor_int32).
    s_in = jnp.float32(0.05)
    raw = jax.random.normal(ks[0], (N, C, H, W), jnp.float32)
    x = jnp.clip(jnp.round(raw / s_in), -128, 127) * s_in

    params = {
        "conv1_w":   jax.random.normal(ks[1], (C, C, 3, 3), jnp.float32) * 0.1,
        "bn1_gamma": jax.random.uniform(ks[2], (C,), jnp.float32, 0.5, 1.5),
        "bn1_beta":  jax.random.normal(ks[3], (C,), jnp.float32) * 0.1,
        "bn1_mean":  jax.random.normal(ks[4], (C,), jnp.float32) * 0.1,
        "bn1_var":   jax.random.uniform(ks[5], (C,), jnp.float32, 0.5, 1.5),
        "conv2_w":   jax.random.normal(ks[6], (C, C, 3, 3), jnp.float32) * 0.1,
        "bn2_gamma": jax.random.uniform(ks[7], (C,), jnp.float32, 0.5, 1.5),
        "bn2_beta":  jax.random.normal(ks[8], (C,), jnp.float32) * 0.1,
        "bn2_mean":  jax.random.normal(ks[9], (C,), jnp.float32) * 0.1,
        "bn2_var":   jax.random.uniform(ks[10], (C,), jnp.float32, 0.5, 1.5),
    }

    fwd = jax.jit(q_resblockbn_forward)
    out, act_scale = fwd(x, s_in, params)
    out = jax.block_until_ready(out)
    act_scale = jax.block_until_ready(act_scale)

    assert out.shape == (N, C, H, W)
    assert act_scale.shape == (1,)
    assert bool(jnp.all(jnp.isfinite(out)))
    assert bool(act_scale[0] > 0.0)
    assert bool(jnp.all(out >= 0.0))                     # final ReLU
    qgrid = out / act_scale[0]                           # output lies on the s2 grid
    assert bool(jnp.all(qgrid <= 127.0 + 1e-3))          # 8-bit ceiling
    assert bool(jnp.max(jnp.abs(qgrid - jnp.round(qgrid))) < 1e-3)
    print("KERNEL_OK")
</pallas_src>

<mosaic_0001>
module attributes {stable_mosaic.version = 11 : i64} {
  func.func @_minmax_kernel(%arg0: i32, %arg1: memref<1x1x1024xf32, #tpu.memory_space<vmem>>, %arg2: memref<1x1x128xf32, #tpu.memory_space<vmem>>, %arg3: memref<1x1x128xf32, #tpu.memory_space<vmem>>) attributes {dimension_semantics = [#tpu.dimension_semantics<parallel>], iteration_bounds = array<i64: 2>, scalar_prefetch = 0 : i64, scratch_operands = 0 : i64, tpu.core_type = #tpu.core_type<tc>, window_params = [{transform_indices = @transform_0, window_bounds = array<i64: 1, 1, 1024>}, {transform_indices = @transform_1, window_bounds = array<i64: 1, 1, 128>}, {transform_indices = @transform_2, window_bounds = array<i64: 1, 1, 128>}]} {
    %c0 = arith.constant 0 : index
    %c0_0 = arith.constant 0 : index
    %c0_1 = arith.constant 0 : index
    %0 = vector.load %arg1[%c0, %c0_0, %c0_1] : memref<1x1x1024xf32, #tpu.memory_space<vmem>>, vector<1x1x1024xf32>
    %1 = vector.shape_cast %0 : vector<1x1x1024xf32> to vector<1x1x1x1024xf32>
    %cst = arith.constant dense<0x7F800000> : vector<1xf32>
    %2 = vector.multi_reduction <minimumf>, %1, %cst [1, 2, 3] : vector<1x1x1x1024xf32> to vector<1xf32>
    %3 = vector.shape_cast %2 : vector<1xf32> to vector<1x1x1x1xf32>
    %4 = vector.extract %3[0, 0, 0, 0] : f32 from vector<1x1x1x1xf32>
    %5 = vector.broadcast %4 : f32 to vector<1x1x128xf32>
    %c0_2 = arith.constant 0 : index
    %c0_3 = arith.constant 0 : index
    %c0_4 = arith.constant 0 : index
    %6 = vector.load %arg2[%c0_2, %c0_3, %c0_4] : memref<1x1x128xf32, #tpu.memory_space<vmem>>, vector<1x1x128xf32>
    tpu.vector_store %arg2[%c0_2, %c0_3, %c0_4], %5 {strides = array<i32>} : memref<1x1x128xf32, #tpu.memory_space<vmem>>, vector<1x1x128xf32>,
    %7 = vector.shape_cast %0 : vector<1x1x1024xf32> to vector<1x1x1x1024xf32>
    %cst_5 = arith.constant dense<0xFF800000> : vector<1xf32>
    %8 = vector.multi_reduction <maximumf>, %7, %cst_5 [1, 2, 3] : vector<1x1x1x1024xf32> to vector<1xf32>
    %9 = vector.shape_cast %8 : vector<1xf32> to vector<1x1x1x1xf32>
    %10 = vector.extract %9[0, 0, 0, 0] : f32 from vector<1x1x1x1xf32>
    %11 = vector.broadcast %10 : f32 to vector<1x1x128xf32>
    %c0_6 = arith.constant 0 : index
    %c0_7 = arith.constant 0 : index
    %c0_8 = arith.constant 0 : index
    %12 = vector.load %arg3[%c0_6, %c0_7, %c0_8] : memref<1x1x128xf32, #tpu.memory_space<vmem>>, vector<1x1x128xf32>
    tpu.vector_store %arg3[%c0_6, %c0_7, %c0_8], %11 {strides = array<i32>} : memref<1x1x128xf32, #tpu.memory_space<vmem>>, vector<1x1x128xf32>,
    return
  }
  func.func @transform_0(%arg0: i32) -> (i32, i32, i32) {
    %c0_i32 = arith.constant 0 : i32
    %c0_i32_0 = arith.constant 0 : i32
    %c0_i32_1 = arith.constant 0 : i32
    return %arg0, %c0_i32, %c0_i32_0 : i32, i32, i32
  }
  func.func @transform_1(%arg0: i32) -> (i32, i32, i32) {
    %c0_i32 = arith.constant 0 : i32
    %c0_i32_0 = arith.constant 0 : i32
    %c0_i32_1 = arith.constant 0 : i32
    return %arg0, %c0_i32, %c0_i32_0 : i32, i32, i32
  }
  func.func @transform_2(%arg0: i32) -> (i32, i32, i32) {
    %c0_i32 = arith.constant 0 : i32
    %c0_i32_0 = arith.constant 0 : i32
    %c0_i32_1 = arith.constant 0 : i32
    return %arg0, %c0_i32, %c0_i32_0 : i32, i32, i32
  }
}

module attributes {stable_mosaic.version = 11 : i64} {
  func.func @_qconv_kernel(%arg0: i32, %arg1: memref<1x4x256xf32, #tpu.memory_space<vmem>>, %arg2: memref<4x2xf32, #tpu.memory_space<vmem>>, %arg3: memref<4x36xbf16, #tpu.memory_space<vmem>>, %arg4: memref<4x1xf32, #tpu.memory_space<vmem>>, %arg5: memref<4x1xf32, #tpu.memory_space<vmem>>, %arg6: memref<1x4x256xf32, #tpu.memory_space<vmem>>, %arg7: memref<1x1x128xf32, #tpu.memory_space<vmem>>, %arg8: memref<1x1x128xf32, #tpu.memory_space<vmem>>, %arg9: memref<4x18x18xf32, #tpu.memory_space<vmem>>, %arg10: memref<36x256xf32, #tpu.memory_space<vmem>>) attributes {dimension_semantics = [#tpu.dimension_semantics<parallel>], iteration_bounds = array<i64: 2>, scalar_prefetch = 0 : i64, scratch_operands = 2 : i64, tpu.core_type = #tpu.core_type<tc>, window_params = [{transform_indices = @transform_0, window_bounds = array<i64: 1, 4, 256>}, {pipeline_mode = #tpu.pipeline_mode<synchronous>, transform_indices = @transform_1, window_bounds = array<i64: 4, 2>}, {pipeline_mode = #tpu.pipeline_mode<synchronous>, transform_indices = @transform_2, window_bounds = array<i64: 4, 36>}, {pipeline_mode = #tpu.pipeline_mode<synchronous>, transform_indices = @transform_3, window_bounds = array<i64: 4, 1>}, {pipeline_mode = #tpu.pipeline_mode<synchronous>, transform_indices = @transform_4, window_bounds = array<i64: 4, 1>}, {transform_indices = @transform_5, window_bounds = array<i64: 1, 4, 256>}, {transform_indices = @transform_6, window_bounds = array<i64: 1, 1, 128>}, {transform_indices = @transform_7, window_bounds = array<i64: 1, 1, 128>}]} {
    %c0 = arith.constant 0 : index
    %c0_0 = arith.constant 0 : index
    %0 = vector.load %arg2[%c0, %c0_0] : memref<4x2xf32, #tpu.memory_space<vmem>>, vector<4x1xf32>
    %c0_1 = arith.constant 0 : index
    %c1 = arith.constant 1 : index
    %1 = vector.load %arg2[%c0_1, %c1] : memref<4x2xf32, #tpu.memory_space<vmem>>, vector<4x1xf32>
    %c0_2 = arith.constant 0 : index
    %c0_3 = arith.constant 0 : index
    %c0_4 = arith.constant 0 : index
    %2 = vector.load %arg1[%c0_2, %c0_3, %c0_4] : memref<1x4x256xf32, #tpu.memory_space<vmem>>, vector<1x4x256xf32>
    %3 = vector.shape_cast %2 : vector<1x4x256xf32> to vector<4x256xf32>
    %4 = vector.broadcast %0 : vector<4x1xf32> to vector<4x256xf32>
    %5 = arith.mulf %3, %4 : vector<4x256xf32>
    %6 = math.roundeven %5 : vector<4x256xf32>
    %7 = vector.broadcast %1 : vector<4x1xf32> to vector<4x256xf32>
    %8 = arith.mulf %6, %7 : vector<4x256xf32>
    %9 = math.roundeven %8 : vector<4x256xf32>
    %cst = arith.constant -1.280000e+02 : f32
    %cst_5 = arith.constant 1.270000e+02 : f32
    %10 = vector.broadcast %cst : f32 to vector<4x256xf32>
    %11 = arith.maximumf %10, %9 : vector<4x256xf32>
    %12 = vector.broadcast %cst_5 : f32 to vector<4x256xf32>
    %13 = arith.minimumf %12, %11 : vector<4x256xf32>
    %cst_6 = arith.constant 0.000000e+00 : f32
    %14 = vector.broadcast %cst_6 : f32 to vector<4x1x18xf32>
    %c0_7 = arith.constant 0 : index
    %c0_8 = arith.constant 0 : index
    %c0_9 = arith.constant 0 : index
    %15 = vector.load %arg9[%c0_7, %c0_8, %c0_9] : memref<4x18x18xf32, #tpu.memory_space<vmem>>, vector<4x1x18xf32>
    tpu.vector_store %arg9[%c0_7, %c0_8, %c0_9], %14 {strides = array<i32>} : memref<4x18x18xf32, #tpu.memory_space<vmem>>, vector<4x1x18xf32>,
    %cst_10 = arith.constant 0.000000e+00 : f32
    %16 = vector.broadcast %cst_10 : f32 to vector<4x1x18xf32>
    %c0_11 = arith.constant 0 : index
    %c17 = arith.constant 17 : index
    %c0_12 = arith.constant 0 : index
    %17 = vector.load %arg9[%c0_11, %c17, %c0_12] : memref<4x18x18xf32, #tpu.memory_space<vmem>>, vector<4x1x18xf32>
    tpu.vector_store %arg9[%c0_11, %c17, %c0_12], %16 {strides = array<i32>} : memref<4x18x18xf32, #tpu.memory_space<vmem>>, vector<4x1x18xf32>,
    %cst_13 = arith.constant 0.000000e+00 : f32
    %18 = vector.broadcast %cst_13 : f32 to vector<4x16x1xf32>
    %c0_14 = arith.constant 0 : index
    %c1_15 = arith.constant 1 : index
    %c0_16 = arith.constant 0 : index
    %19 = vector.load %arg9[%c0_14, %c1_15, %c0_16] : memref<4x18x18xf32, #tpu.memory_space<vmem>>, vector<4x16x1xf32>
    tpu.vector_store %arg9[%c0_14, %c1_15, %c0_16], %18 {strides = array<i32>} : memref<4x18x18xf32, #tpu.memory_space<vmem>>, vector<4x16x1xf32>,
    %cst_17 = arith.constant 0.000000e+00 : f32
    %20 = vector.broadcast %cst_17 : f32 to vector<4x16x1xf32>
    %c0_18 = arith.constant 0 : index
    %c1_19 = arith.constant 1 : index
    %c17_20 = arith.constant 17 : index
    %21 = vector.load %arg9[%c0_18, %c1_19, %c17_20] : memref<4x18x18xf32, #tpu.memory_space<vmem>>, vector<4x16x1xf32>
    tpu.vector_store %arg9[%c0_18, %c1_19, %c17_20], %20 {strides = array<i32>} : memref<4x18x18xf32, #tpu.memory_space<vmem>>, vector<4x16x1xf32>,
    %22 = vector.shape_cast %13 : vector<4x256xf32> to vector<4x16x16xf32>
    %c0_21 = arith.constant 0 : index
    %c1_22 = arith.constant 1 : index
    %c1_23 = arith.constant 1 : index
    %23 = vector.load %arg9[%c0_21, %c1_22, %c1_23] : memref<4x18x18xf32, #tpu.memory_space<vmem>>, vector<4x16x16xf32>
    tpu.vector_store %arg9[%c0_21, %c1_22, %c1_23], %22 {strides = array<i32>} : memref<4x18x18xf32, #tpu.memory_space<vmem>>, vector<4x16x16xf32>,
    %c0_24 = arith.constant 0 : index
    %c0_25 = arith.constant 0 : index
    %c0_26 = arith.constant 0 : index
    %24 = vector.load %arg9[%c0_24, %c0_25, %c0_26] : memref<4x18x18xf32, #tpu.memory_space<vmem>>, vector<4x16x16xf32>
    %25 = vector.shape_cast %24 : vector<4x16x16xf32> to vector<4x256xf32>
    %c0_27 = arith.constant 0 : index
    %c0_28 = arith.constant 0 : index
    %26 = vector.load %arg10[%c0_27, %c0_28] : memref<36x256xf32, #tpu.memory_space<vmem>>, vector<4x256xf32>
    tpu.vector_store %arg10[%c0_27, %c0_28], %25 {strides = array<i32>} : memref<36x256xf32, #tpu.memory_space<vmem>>, vector<4x256xf32>,
    %c0_29 = arith.constant 0 : index
    %c0_30 = arith.constant 0 : index
    %c1_31 = arith.constant 1 : index
    %27 = vector.load %arg9[%c0_29, %c0_30, %c1_31] : memref<4x18x18xf32, #tpu.memory_space<vmem>>, vector<4x16x16xf32>
    %28 = vector.shape_cast %27 : vector<4x16x16xf32> to vector<4x256xf32>
    %c4 = arith.constant 4 : index
    %c0_32 = arith.constant 0 : index
    %29 = vector.load %arg10[%c4, %c0_32] : memref<36x256xf32, #tpu.memory_space<vmem>>, vector<4x256xf32>
    tpu.vector_store %arg10[%c4, %c0_32], %28 {strides = array<i32>} : memref<36x256xf32, #tpu.memory_space<vmem>>, vector<4x256xf32>,
    %c0_33 = arith.constant 0 : index
    %c0_34 = arith.constant 0 : index
    %c2 = arith.constant 2 : index
    %30 = vector.load %arg9[%c0_33, %c0_34, %c2] : memref<4x18x18xf32, #tpu.memory_space<vmem>>, vector<4x16x16xf32>
    %31 = vector.shape_cast %30 : vector<4x16x16xf32> to vector<4x256xf32>
    %c8 = arith.constant 8 : index
    %c0_35 = arith.constant 0 : index
    %32 = vector.load %arg10[%c8, %c0_35] : memref<36x256xf32, #tpu.memory_space<vmem>>, vector<4x256xf32>
    tpu.vector_store %arg10[%c8, %c0_35], %31 {strides = array<i32>} : memref<36x256xf32, #tpu.memory_space<vmem>>, vector<4x256xf32>,
    %c0_36 = arith.constant 0 : index
    %c1_37 = arith.constant 1 : index
    %c0_38 = arith.constant 0 : index
    %33 = vector.load %arg9[%c0_36, %c1_37, %c0_38] : memref<4x18x18xf32, #tpu.memory_space<vmem>>, vector<4x16x16xf32>
    %34 = vector.shape_cast %33 : vector<4x16x16xf32> to vector<4x256xf32>
    %c12 = arith.constant 12 : index
    %c0_39 = arith.constant 0 : index
    %35 = vector.load %arg10[%c12, %c0_39] : memref<36x256xf32, #tpu.memory_space<vmem>>, vector<4x256xf32>
    tpu.vector_store %arg10[%c12, %c0_39], %34 {strides = array<i32>} : memref<36x256xf32, #tpu.memory_space<vmem>>, vector<4x256xf32>,
    %c0_40 = arith.constant 0 : index
    %c1_41 = arith.constant 1 : index
    %c1_42 = arith.constant 1 : index
    %36 = vector.load %arg9[%c0_40, %c1_41, %c1_42] : memref<4x18x18xf32, #tpu.memory_space<vmem>>, vector<4x16x16xf32>
    %37 = vector.shape_cast %36 : vector<4x16x16xf32> to vector<4x256xf32>
    %c16 = arith.constant 16 : index
    %c0_43 = arith.constant 0 : index
    %38 = vector.load %arg10[%c16, %c0_43] : memref<36x256xf32, #tpu.memory_space<vmem>>, vector<4x256xf32>
    tpu.vector_store %arg10[%c16, %c0_43], %37 {strides = array<i32>} : memref<36x256xf32, #tpu.memory_space<vmem>>, vector<4x256xf32>,
    %c0_44 = arith.constant 0 : index
    %c1_45 = arith.constant 1 : index
    %c2_46 = arith.constant 2 : index
    %39 = vector.load %arg9[%c0_44, %c1_45, %c2_46] : memref<4x18x18xf32, #tpu.memory_space<vmem>>, vector<4x16x16xf32>
    %40 = vector.shape_cast %39 : vector<4x16x16xf32> to vector<4x256xf32>
    %c20 = arith.constant 20 : index
    %c0_47 = arith.constant 0 : index
    %41 = vector.load %arg10[%c20, %c0_47] : memref<36x256xf32, #tpu.memory_space<vmem>>, vector<4x256xf32>
    tpu.vector_store %arg10[%c20, %c0_47], %40 {strides = array<i32>} : memref<36x256xf32, #tpu.memory_space<vmem>>, vector<4x256xf32>,
    %c0_48 = arith.constant 0 : index
    %c2_49 = arith.constant 2 : index
    %c0_50 = arith.constant 0 : index
    %42 = vector.load %arg9[%c0_48, %c2_49, %c0_50] : memref<4x18x18xf32, #tpu.memory_space<vmem>>, vector<4x16x16xf32>
    %43 = vector.shape_cast %42 : vector<4x16x16xf32> to vector<4x256xf32>
    %c24 = arith.constant 24 : index
    %c0_51 = arith.constant 0 : index
    %44 = vector.load %arg10[%c24, %c0_51] : memref<36x256xf32, #tpu.memory_space<vmem>>, vector<4x256xf32>
    tpu.vector_store %arg10[%c24, %c0_51], %43 {strides = array<i32>} : memref<36x256xf32, #tpu.memory_space<vmem>>, vector<4x256xf32>,
    %c0_52 = arith.constant 0 : index
    %c2_53 = arith.constant 2 : index
    %c1_54 = arith.constant 1 : index
    %45 = vector.load %arg9[%c0_52, %c2_53, %c1_54] : memref<4x18x18xf32, #tpu.memory_space<vmem>>, vector<4x16x16xf32>
    %46 = vector.shape_cast %45 : vector<4x16x16xf32> to vector<4x256xf32>
    %c28 = arith.constant 28 : index
    %c0_55 = arith.constant 0 : index
    %47 = vector.load %arg10[%c28, %c0_55] : memref<36x256xf32, #tpu.memory_space<vmem>>, vector<4x256xf32>
    tpu.vector_store %arg10[%c28, %c0_55], %46 {strides = array<i32>} : memref<36x256xf32, #tpu.memory_space<vmem>>, vector<4x256xf32>,
    %c0_56 = arith.constant 0 : index
    %c2_57 = arith.constant 2 : index
    %c2_58 = arith.constant 2 : index
    %48 = vector.load %arg9[%c0_56, %c2_57, %c2_58] : memref<4x18x18xf32, #tpu.memory_space<vmem>>, vector<4x16x16xf32>
    %49 = vector.shape_cast %48 : vector<4x16x16xf32> to vector<4x256xf32>
    %c32 = arith.constant 32 : index
    %c0_59 = arith.constant 0 : index
    %50 = vector.load %arg10[%c32, %c0_59] : memref<36x256xf32, #tpu.memory_space<vmem>>, vector<4x256xf32>
    tpu.vector_store %arg10[%c32, %c0_59], %49 {strides = array<i32>} : memref<36x256xf32, #tpu.memory_space<vmem>>, vector<4x256xf32>,
    %c0_60 = arith.constant 0 : index
    %c0_61 = arith.constant 0 : index
    %51 = vector.load %arg3[%c0_60, %c0_61] : memref<4x36xbf16, #tpu.memory_space<vmem>>, vector<4x36xbf16>
    %c0_62 = arith.constant 0 : index
    %c0_63 = arith.constant 0 : index
    %52 = vector.load %arg10[%c0_62, %c0_63] : memref<36x256xf32, #tpu.memory_space<vmem>>, vector<36x256xf32>
    %53 = arith.truncf %52 : vector<36x256xf32> to vector<36x256xbf16>
    %cst_64 = arith.constant dense<0.000000e+00> : vector<4x256xf32>
    %54 = tpu.matmul %51, %53, %cst_64 {dimension_numbers = #tpu.dot_dimension_numbers<[1], [0], [0], [1], [0, 0, 1, 1], [], []>} : vector<4x36xbf16>, vector<36x256xbf16>, vector<4x256xf32> -> vector<4x256xf32>
    %c0_65 = arith.constant 0 : index
    %c0_66 = arith.constant 0 : index
    %55 = vector.load %arg4[%c0_65, %c0_66] : memref<4x1xf32, #tpu.memory_space<vmem>>, vector<4x1xf32>
    %56 = vector.broadcast %55 : vector<4x1xf32> to vector<4x256xf32>
    %57 = arith.addf %54, %56 : vector<4x256xf32>
    %cst_67 = arith.constant 0.000000e+00 : f32
    %58 = vector.broadcast %cst_67 : f32 to vector<4x256xf32>
    %59 = arith.maximumf %57, %58 : vector<4x256xf32>
    %c0_68 = arith.constant 0 : index
    %c0_69 = arith.constant 0 : index
    %c0_70 = arith.constant 0 : index
    %60 = vector.load %arg6[%c0_68, %c0_69, %c0_70] : memref<1x4x256xf32, #tpu.memory_space<vmem>>, vector<1x4x256xf32>
    %61 = vector.shape_cast %60 : vector<1x4x256xf32> to vector<4x256xf32>
    %62 = vector.shape_cast %59 : vector<4x256xf32> to vector<1x4x256xf32>
    tpu.vector_store %arg6[%c0_68, %c0_69, %c0_70], %62 {strides = array<i32>} : memref<1x4x256xf32, #tpu.memory_space<vmem>>, vector<1x4x256xf32>,
    %c0_71 = arith.constant 0 : index
    %c0_72 = arith.constant 0 : index
    %63 = vector.load %arg5[%c0_71, %c0_72] : memref<4x1xf32, #tpu.memory_space<vmem>>, vector<4x1xf32>
    %64 = vector.broadcast %63 : vector<4x1xf32> to vector<4x256xf32>
    %65 = arith.mulf %59, %64 : vector<4x256xf32>
    %66 = vector.shape_cast %65 : vector<4x256xf32> to vector<1x4x256xf32>
    %cst_73 = arith.constant dense<0x7F800000> : vector<1xf32>
    %67 = vector.multi_reduction <minimumf>, %66, %cst_73 [1, 2] : vector<1x4x256xf32> to vector<1xf32>
    %68 = vector.shape_cast %67 : vector<1xf32> to vector<1x1x1xf32>
    %69 = vector.extract %68[0, 0, 0] : f32 from vector<1x1x1xf32>
    %70 = vector.broadcast %69 : f32 to vector<1x1x128xf32>
    %c0_74 = arith.constant 0 : index
    %c0_75 = arith.constant 0 : index
    %c0_76 = arith.constant 0 : index
    %71 = vector.load %arg7[%c0_74, %c0_75, %c0_76] : memref<1x1x128xf32, #tpu.memory_space<vmem>>, vector<1x1x128xf32>
    tpu.vector_store %arg7[%c0_74, %c0_75, %c0_76], %70 {strides = array<i32>} : memref<1x1x128xf32, #tpu.memory_space<vmem>>, vector<1x1x128xf32>,
    %72 = vector.shape_cast %65 : vector<4x256xf32> to vector<1x4x256xf32>
    %cst_77 = arith.constant dense<0xFF800000> : vector<1xf32>
    %73 = vector.multi_reduction <maximumf>, %72, %cst_77 [1, 2] : vector<1x4x256xf32> to vector<1xf32>
    %74 = vector.shape_cast %73 : vector<1xf32> to vector<1x1x1xf32>
    %75 = vector.extract %74[0, 0, 0] : f32 from vector<1x1x1xf32>
    %76 = vector.broadcast %75 : f32 to vector<1x1x128xf32>
    %c0_78 = arith.constant 0 : index
    %c0_79 = arith.constant 0 : index
    %c0_80 = arith.constant 0 : index
    %77 = vector.load %arg8[%c0_78, %c0_79, %c0_80] : memref<1x1x128xf32, #tpu.memory_space<vmem>>, vector<1x1x128xf32>
    tpu.vector_store %arg8[%c0_78, %c0_79, %c0_80], %76 {strides = array<i32>} : memref<1x1x128xf32, #tpu.memory_space<vmem>>, vector<1x1x128xf32>,
    return
  }
  func.func @transform_0(%arg0: i32) -> (i32, i32, i32) {
    %c0_i32 = arith.constant 0 : i32
    %c0_i32_0 = arith.constant 0 : i32
    %c0_i32_1 = arith.constant 0 : i32
    return %arg0, %c0_i32, %c0_i32_0 : i32, i32, i32
  }
  func.func @transform_1(%arg0: i32) -> (i32, i32) {
    %c0_i32 = arith.constant 0 : i32
    %c0_i32_0 = arith.constant 0 : i32
    %c0_i32_1 = arith.constant 0 : i32
    return %c0_i32, %c0_i32_0 : i32, i32
  }
  func.func @transform_2(%arg0: i32) -> (i32, i32) {
    %c0_i32 = arith.constant 0 : i32
    %c0_i32_0 = arith.constant 0 : i32
    %c0_i32_1 = arith.constant 0 : i32
    return %c0_i32, %c0_i32_0 : i32, i32
  }
  func.func @transform_3(%arg0: i32) -> (i32, i32) {
    %c0_i32 = arith.constant 0 : i32
    %c0_i32_0 = arith.constant 0 : i32
    %c0_i32_1 = arith.constant 0 : i32
    return %c0_i32, %c0_i32_0 : i32, i32
  }
  func.func @transform_4(%arg0: i32) -> (i32, i32) {
    %c0_i32 = arith.constant 0 : i32
    %c0_i32_0 = arith.constant 0 : i32
    %c0_i32_1 = arith.constant 0 : i32
    return %c0_i32, %c0_i32_0 : i32, i32
  }
  func.func @transform_5(%arg0: i32) -> (i32, i32, i32) {
    %c0_i32 = arith.constant 0 : i32
    %c0_i32_0 = arith.constant 0 : i32
    %c0_i32_1 = arith.constant 0 : i32
    return %arg0, %c0_i32, %c0_i32_0 : i32, i32, i32
  }
  func.func @transform_6(%arg0: i32) -> (i32, i32, i32) {
    %c0_i32 = arith.constant 0 : i32
    %c0_i32_0 = arith.constant 0 : i32
    %c0_i32_1 = arith.constant 0 : i32
    return %arg0, %c0_i32, %c0_i32_0 : i32, i32, i32
  }
  func.func @transform_7(%arg0: i32) -> (i32, i32, i32) {
    %c0_i32 = arith.constant 0 : i32
    %c0_i32_0 = arith.constant 0 : i32
    %c0_i32_1 = arith.constant 0 : i32
    return %arg0, %c0_i32, %c0_i32_0 : i32, i32, i32
  }
}

module attributes {stable_mosaic.version = 11 : i64} {
  func.func @_qconv_res_kernel(%arg0: i32, %arg1: memref<1x4x256xf32, #tpu.memory_space<vmem>>, %arg2: memref<1x4x256xf32, #tpu.memory_space<vmem>>, %arg3: memref<4x2xf32, #tpu.memory_space<vmem>>, %arg4: memref<4x36xbf16, #tpu.memory_space<vmem>>, %arg5: memref<4x1xf32, #tpu.memory_space<vmem>>, %arg6: memref<4x1xf32, #tpu.memory_space<vmem>>, %arg7: memref<1x4x256xf32, #tpu.memory_space<vmem>>, %arg8: memref<1x1x128xf32, #tpu.memory_space<vmem>>, %arg9: memref<1x1x128xf32, #tpu.memory_space<vmem>>, %arg10: memref<4x18x18xf32, #tpu.memory_space<vmem>>, %arg11: memref<36x256xf32, #tpu.memory_space<vmem>>) attributes {dimension_semantics = [#tpu.dimension_semantics<parallel>], iteration_bounds = array<i64: 2>, scalar_prefetch = 0 : i64, scratch_operands = 2 : i64, tpu.core_type = #tpu.core_type<tc>, window_params = [{transform_indices = @transform_0, window_bounds = array<i64: 1, 4, 256>}, {transform_indices = @transform_1, window_bounds = array<i64: 1, 4, 256>}, {pipeline_mode = #tpu.pipeline_mode<synchronous>, transform_indices = @transform_2, window_bounds = array<i64: 4, 2>}, {pipeline_mode = #tpu.pipeline_mode<synchronous>, transform_indices = @transform_3, window_bounds = array<i64: 4, 36>}, {pipeline_mode = #tpu.pipeline_mode<synchronous>, transform_indices = @transform_4, window_bounds = array<i64: 4, 1>}, {pipeline_mode = #tpu.pipeline_mode<synchronous>, transform_indices = @transform_5, window_bounds = array<i64: 4, 1>}, {transform_indices = @transform_6, window_bounds = array<i64: 1, 4, 256>}, {transform_indices = @transform_7, window_bounds = array<i64: 1, 1, 128>}, {transform_indices = @transform_8, window_bounds = array<i64: 1, 1, 128>}]} {
    %c0 = arith.constant 0 : index
    %c0_0 = arith.constant 0 : index
    %0 = vector.load %arg3[%c0, %c0_0] : memref<4x2xf32, #tpu.memory_space<vmem>>, vector<4x1xf32>
    %c0_1 = arith.constant 0 : index
    %c1 = arith.constant 1 : index
    %1 = vector.load %arg3[%c0_1, %c1] : memref<4x2xf32, #tpu.memory_space<vmem>>, vector<4x1xf32>
    %c0_2 = arith.constant 0 : index
    %c0_3 = arith.constant 0 : index
    %c0_4 = arith.constant 0 : index
    %2 = vector.load %arg1[%c0_2, %c0_3, %c0_4] : memref<1x4x256xf32, #tpu.memory_space<vmem>>, vector<1x4x256xf32>
    %3 = vector.shape_cast %2 : vector<1x4x256xf32> to vector<4x256xf32>
    %4 = vector.broadcast %0 : vector<4x1xf32> to vector<4x256xf32>
    %5 = arith.mulf %3, %4 : vector<4x256xf32>
    %6 = math.roundeven %5 : vector<4x256xf32>
    %7 = vector.broadcast %1 : vector<4x1xf32> to vector<4x256xf32>
    %8 = arith.mulf %6, %7 : vector<4x256xf32>
    %9 = math.roundeven %8 : vector<4x256xf32>
    %cst = arith.constant -1.280000e+02 : f32
    %cst_5 = arith.constant 1.270000e+02 : f32
    %10 = vector.broadcast %cst : f32 to vector<4x256xf32>
    %11 = arith.maximumf %10, %9 : vector<4x256xf32>
    %12 = vector.broadcast %cst_5 : f32 to vector<4x256xf32>
    %13 = arith.minimumf %12, %11 : vector<4x256xf32>
    %cst_6 = arith.constant 0.000000e+00 : f32
    %14 = vector.broadcast %cst_6 : f32 to vector<4x1x18xf32>
    %c0_7 = arith.constant 0 : index
    %c0_8 = arith.constant 0 : index
    %c0_9 = arith.constant 0 : index
    %15 = vector.load %arg10[%c0_7, %c0_8, %c0_9] : memref<4x18x18xf32, #tpu.memory_space<vmem>>, vector<4x1x18xf32>
    tpu.vector_store %arg10[%c0_7, %c0_8, %c0_9], %14 {strides = array<i32>} : memref<4x18x18xf32, #tpu.memory_space<vmem>>, vector<4x1x18xf32>,
    %cst_10 = arith.constant 0.000000e+00 : f32
    %16 = vector.broadcast %cst_10 : f32 to vector<4x1x18xf32>
    %c0_11 = arith.constant 0 : index
    %c17 = arith.constant 17 : index
    %c0_12 = arith.constant 0 : index
    %17 = vector.load %arg10[%c0_11, %c17, %c0_12] : memref<4x18x18xf32, #tpu.memory_space<vmem>>, vector<4x1x18xf32>
    tpu.vector_store %arg10[%c0_11, %c17, %c0_12], %16 {strides = array<i32>} : memref<4x18x18xf32, #tpu.memory_space<vmem>>, vector<4x1x18xf32>,
    %cst_13 = arith.constant 0.000000e+00 : f32
    %18 = vector.broadcast %cst_13 : f32 to vector<4x16x1xf32>
    %c0_14 = arith.constant 0 : index
    %c1_15 = arith.constant 1 : index
    %c0_16 = arith.constant 0 : index
    %19 = vector.load %arg10[%c0_14, %c1_15, %c0_16] : memref<4x18x18xf32, #tpu.memory_space<vmem>>, vector<4x16x1xf32>
    tpu.vector_store %arg10[%c0_14, %c1_15, %c0_16], %18 {strides = array<i32>} : memref<4x18x18xf32, #tpu.memory_space<vmem>>, vector<4x16x1xf32>,
    %cst_17 = arith.constant 0.000000e+00 : f32
    %20 = vector.broadcast %cst_17 : f32 to vector<4x16x1xf32>
    %c0_18 = arith.constant 0 : index
    %c1_19 = arith.constant 1 : index
    %c17_20 = arith.constant 17 : index
    %21 = vector.load %arg10[%c0_18, %c1_19, %c17_20] : memref<4x18x18xf32, #tpu.memory_space<vmem>>, vector<4x16x1xf32>
    tpu.vector_store %arg10[%c0_18, %c1_19, %c17_20], %20 {strides = array<i32>} : memref<4x18x18xf32, #tpu.memory_space<vmem>>, vector<4x16x1xf32>,
    %22 = vector.shape_cast %13 : vector<4x256xf32> to vector<4x16x16xf32>
    %c0_21 = arith.constant 0 : index
    %c1_22 = arith.constant 1 : index
    %c1_23 = arith.constant 1 : index
    %23 = vector.load %arg10[%c0_21, %c1_22, %c1_23] : memref<4x18x18xf32, #tpu.memory_space<vmem>>, vector<4x16x16xf32>
    tpu.vector_store %arg10[%c0_21, %c1_22, %c1_23], %22 {strides = array<i32>} : memref<4x18x18xf32, #tpu.memory_space<vmem>>, vector<4x16x16xf32>,
    %c0_24 = arith.constant 0 : index
    %c0_25 = arith.constant 0 : index
    %c0_26 = arith.constant 0 : index
    %24 = vector.load %arg10[%c0_24, %c0_25, %c0_26] : memref<4x18x18xf32, #tpu.memory_space<vmem>>, vector<4x16x16xf32>
    %25 = vector.shape_cast %24 : vector<4x16x16xf32> to vector<4x256xf32>
    %c0_27 = arith.constant 0 : index
    %c0_28 = arith.constant 0 : index
    %26 = vector.load %arg11[%c0_27, %c0_28] : memref<36x256xf32, #tpu.memory_space<vmem>>, vector<4x256xf32>
    tpu.vector_store %arg11[%c0_27, %c0_28], %25 {strides = array<i32>} : memref<36x256xf32, #tpu.memory_space<vmem>>, vector<4x256xf32>,
    %c0_29 = arith.constant 0 : index
    %c0_30 = arith.constant 0 : index
    %c1_31 = arith.constant 1 : index
    %27 = vector.load %arg10[%c0_29, %c0_30, %c1_31] : memref<4x18x18xf32, #tpu.memory_space<vmem>>, vector<4x16x16xf32>
    %28 = vector.shape_cast %27 : vector<4x16x16xf32> to vector<4x256xf32>
    %c4 = arith.constant 4 : index
    %c0_32 = arith.constant 0 : index
    %29 = vector.load %arg11[%c4, %c0_32] : memref<36x256xf32, #tpu.memory_space<vmem>>, vector<4x256xf32>
    tpu.vector_store %arg11[%c4, %c0_32], %28 {strides = array<i32>} : memref<36x256xf32, #tpu.memory_space<vmem>>, vector<4x256xf32>,
    %c0_33 = arith.constant 0 : index
    %c0_34 = arith.constant 0 : index
    %c2 = arith.constant 2 : index
    %30 = vector.load %arg10[%c0_33, %c0_34, %c2] : memref<4x18x18xf32, #tpu.memory_space<vmem>>, vector<4x16x16xf32>
    %31 = vector.shape_cast %30 : vector<4x16x16xf32> to vector<4x256xf32>
    %c8 = arith.constant 8 : index
    %c0_35 = arith.constant 0 : index
    %32 = vector.load %arg11[%c8, %c0_35] : memref<36x256xf32, #tpu.memory_space<vmem>>, vector<4x256xf32>
    tpu.vector_store %arg11[%c8, %c0_35], %31 {strides = array<i32>} : memref<36x256xf32, #tpu.memory_space<vmem>>, vector<4x256xf32>,
    %c0_36 = arith.constant 0 : index
    %c1_37 = arith.constant 1 : index
    %c0_38 = arith.constant 0 : index
    %33 = vector.load %arg10[%c0_36, %c1_37, %c0_38] : memref<4x18x18xf32, #tpu.memory_space<vmem>>, vector<4x16x16xf32>
    %34 = vector.shape_cast %33 : vector<4x16x16xf32> to vector<4x256xf32>
    %c12 = arith.constant 12 : index
    %c0_39 = arith.constant 0 : index
    %35 = vector.load %arg11[%c12, %c0_39] : memref<36x256xf32, #tpu.memory_space<vmem>>, vector<4x256xf32>
    tpu.vector_store %arg11[%c12, %c0_39], %34 {strides = array<i32>} : memref<36x256xf32, #tpu.memory_space<vmem>>, vector<4x256xf32>,
    %c0_40 = arith.constant 0 : index
    %c1_41 = arith.constant 1 : index
    %c1_42 = arith.constant 1 : index
    %36 = vector.load %arg10[%c0_40, %c1_41, %c1_42] : memref<4x18x18xf32, #tpu.memory_space<vmem>>, vector<4x16x16xf32>
    %37 = vector.shape_cast %36 : vector<4x16x16xf32> to vector<4x256xf32>
    %c16 = arith.constant 16 : index
    %c0_43 = arith.constant 0 : index
    %38 = vector.load %arg11[%c16, %c0_43] : memref<36x256xf32, #tpu.memory_space<vmem>>, vector<4x256xf32>
    tpu.vector_store %arg11[%c16, %c0_43], %37 {strides = array<i32>} : memref<36x256xf32, #tpu.memory_space<vmem>>, vector<4x256xf32>,
    %c0_44 = arith.constant 0 : index
    %c1_45 = arith.constant 1 : index
    %c2_46 = arith.constant 2 : index
    %39 = vector.load %arg10[%c0_44, %c1_45, %c2_46] : memref<4x18x18xf32, #tpu.memory_space<vmem>>, vector<4x16x16xf32>
    %40 = vector.shape_cast %39 : vector<4x16x16xf32> to vector<4x256xf32>
    %c20 = arith.constant 20 : index
    %c0_47 = arith.constant 0 : index
    %41 = vector.load %arg11[%c20, %c0_47] : memref<36x256xf32, #tpu.memory_space<vmem>>, vector<4x256xf32>
    tpu.vector_store %arg11[%c20, %c0_47], %40 {strides = array<i32>} : memref<36x256xf32, #tpu.memory_space<vmem>>, vector<4x256xf32>,
    %c0_48 = arith.constant 0 : index
    %c2_49 = arith.constant 2 : index
    %c0_50 = arith.constant 0 : index
    %42 = vector.load %arg10[%c0_48, %c2_49, %c0_50] : memref<4x18x18xf32, #tpu.memory_space<vmem>>, vector<4x16x16xf32>
    %43 = vector.shape_cast %42 : vector<4x16x16xf32> to vector<4x256xf32>
    %c24 = arith.constant 24 : index
    %c0_51 = arith.constant 0 : index
    %44 = vector.load %arg11[%c24, %c0_51] : memref<36x256xf32, #tpu.memory_space<vmem>>, vector<4x256xf32>
    tpu.vector_store %arg11[%c24, %c0_51], %43 {strides = array<i32>} : memref<36x256xf32, #tpu.memory_space<vmem>>, vector<4x256xf32>,
    %c0_52 = arith.constant 0 : index
    %c2_53 = arith.constant 2 : index
    %c1_54 = arith.constant 1 : index
    %45 = vector.load %arg10[%c0_52, %c2_53, %c1_54] : memref<4x18x18xf32, #tpu.memory_space<vmem>>, vector<4x16x16xf32>
    %46 = vector.shape_cast %45 : vector<4x16x16xf32> to vector<4x256xf32>
    %c28 = arith.constant 28 : index
    %c0_55 = arith.constant 0 : index
    %47 = vector.load %arg11[%c28, %c0_55] : memref<36x256xf32, #tpu.memory_space<vmem>>, vector<4x256xf32>
    tpu.vector_store %arg11[%c28, %c0_55], %46 {strides = array<i32>} : memref<36x256xf32, #tpu.memory_space<vmem>>, vector<4x256xf32>,
    %c0_56 = arith.constant 0 : index
    %c2_57 = arith.constant 2 : index
    %c2_58 = arith.constant 2 : index
    %48 = vector.load %arg10[%c0_56, %c2_57, %c2_58] : memref<4x18x18xf32, #tpu.memory_space<vmem>>, vector<4x16x16xf32>
    %49 = vector.shape_cast %48 : vector<4x16x16xf32> to vector<4x256xf32>
    %c32 = arith.constant 32 : index
    %c0_59 = arith.constant 0 : index
    %50 = vector.load %arg11[%c32, %c0_59] : memref<36x256xf32, #tpu.memory_space<vmem>>, vector<4x256xf32>
    tpu.vector_store %arg11[%c32, %c0_59], %49 {strides = array<i32>} : memref<36x256xf32, #tpu.memory_space<vmem>>, vector<4x256xf32>,
    %c0_60 = arith.constant 0 : index
    %c0_61 = arith.constant 0 : index
    %51 = vector.load %arg4[%c0_60, %c0_61] : memref<4x36xbf16, #tpu.memory_space<vmem>>, vector<4x36xbf16>
    %c0_62 = arith.constant 0 : index
    %c0_63 = arith.constant 0 : index
    %52 = vector.load %arg11[%c0_62, %c0_63] : memref<36x256xf32, #tpu.memory_space<vmem>>, vector<36x256xf32>
    %53 = arith.truncf %52 : vector<36x256xf32> to vector<36x256xbf16>
    %cst_64 = arith.constant dense<0.000000e+00> : vector<4x256xf32>
    %54 = tpu.matmul %51, %53, %cst_64 {dimension_numbers = #tpu.dot_dimension_numbers<[1], [0], [0], [1], [0, 0, 1, 1], [], []>} : vector<4x36xbf16>, vector<36x256xbf16>, vector<4x256xf32> -> vector<4x256xf32>
    %c0_65 = arith.constant 0 : index
    %c0_66 = arith.constant 0 : index
    %55 = vector.load %arg5[%c0_65, %c0_66] : memref<4x1xf32, #tpu.memory_space<vmem>>, vector<4x1xf32>
    %56 = vector.broadcast %55 : vector<4x1xf32> to vector<4x256xf32>
    %57 = arith.addf %54, %56 : vector<4x256xf32>
    %c0_67 = arith.constant 0 : index
    %c0_68 = arith.constant 0 : index
    %c0_69 = arith.constant 0 : index
    %58 = vector.load %arg7[%c0_67, %c0_68, %c0_69] : memref<1x4x256xf32, #tpu.memory_space<vmem>>, vector<1x4x256xf32>
    %59 = vector.shape_cast %58 : vector<1x4x256xf32> to vector<4x256xf32>
    %60 = vector.shape_cast %57 : vector<4x256xf32> to vector<1x4x256xf32>
    tpu.vector_store %arg7[%c0_67, %c0_68, %c0_69], %60 {strides = array<i32>} : memref<1x4x256xf32, #tpu.memory_space<vmem>>, vector<1x4x256xf32>,
    %c0_70 = arith.constant 0 : index
    %c0_71 = arith.constant 0 : index
    %61 = vector.load %arg6[%c0_70, %c0_71] : memref<4x1xf32, #tpu.memory_space<vmem>>, vector<4x1xf32>
    %62 = vector.broadcast %61 : vector<4x1xf32> to vector<4x256xf32>
    %63 = arith.mulf %57, %62 : vector<4x256xf32>
    %c0_72 = arith.constant 0 : index
    %c0_73 = arith.constant 0 : index
    %c0_74 = arith.constant 0 : index
    %64 = vector.load %arg2[%c0_72, %c0_73, %c0_74] : memref<1x4x256xf32, #tpu.memory_space<vmem>>, vector<1x4x256xf32>
    %65 = vector.shape_cast %64 : vector<1x4x256xf32> to vector<4x256xf32>
    %66 = arith.addf %63, %65 : vector<4x256xf32>
    %67 = vector.shape_cast %66 : vector<4x256xf32> to vector<1x4x256xf32>
    %cst_75 = arith.constant dense<0x7F800000> : vector<1xf32>
    %68 = vector.multi_reduction <minimumf>, %67, %cst_75 [1, 2] : vector<1x4x256xf32> to vector<1xf32>
    %69 = vector.shape_cast %68 : vector<1xf32> to vector<1x1x1xf32>
    %70 = vector.extract %69[0, 0, 0] : f32 from vector<1x1x1xf32>
    %71 = vector.broadcast %70 : f32 to vector<1x1x128xf32>
    %c0_76 = arith.constant 0 : index
    %c0_77 = arith.constant 0 : index
    %c0_78 = arith.constant 0 : index
    %72 = vector.load %arg8[%c0_76, %c0_77, %c0_78] : memref<1x1x128xf32, #tpu.memory_space<vmem>>, vector<1x1x128xf32>
    tpu.vector_store %arg8[%c0_76, %c0_77, %c0_78], %71 {strides = array<i32>} : memref<1x1x128xf32, #tpu.memory_space<vmem>>, vector<1x1x128xf32>,
    %73 = vector.shape_cast %66 : vector<4x256xf32> to vector<1x4x256xf32>
    %cst_79 = arith.constant dense<0xFF800000> : vector<1xf32>
    %74 = vector.multi_reduction <maximumf>, %73, %cst_79 [1, 2] : vector<1x4x256xf32> to vector<1xf32>
    %75 = vector.shape_cast %74 : vector<1xf32> to vector<1x1x1xf32>
    %76 = vector.extract %75[0, 0, 0] : f32 from vector<1x1x1xf32>
    %77 = vector.broadcast %76 : f32 to vector<1x1x128xf32>
    %c0_80 = arith.constant 0 : index
    %c0_81 = arith.constant 0 : index
    %c0_82 = arith.constant 0 : index
    %78 = vector.load %arg9[%c0_80, %c0_81, %c0_82] : memref<1x1x128xf32, #tpu.memory_space<vmem>>, vector<1x1x128xf32>
    tpu.vector_store %arg9[%c0_80, %c0_81, %c0_82], %77 {strides = array<i32>} : memref<1x1x128xf32, #tpu.memory_space<vmem>>, vector<1x1x128xf32>,
    return
  }
  func.func @transform_0(%arg0: i32) -> (i32, i32, i32) {
    %c0_i32 = arith.constant 0 : i32
    %c0_i32_0 = arith.constant 0 : i32
    %c0_i32_1 = arith.constant 0 : i32
    return %arg0, %c0_i32, %c0_i32_0 : i32, i32, i32
  }
  func.func @transform_1(%arg0: i32) -> (i32, i32, i32) {
    %c0_i32 = arith.constant 0 : i32
    %c0_i32_0 = arith.constant 0 : i32
    %c0_i32_1 = arith.constant 0 : i32
    return %arg0, %c0_i32, %c0_i32_0 : i32, i32, i32
  }
  func.func @transform_2(%arg0: i32) -> (i32, i32) {
    %c0_i32 = arith.constant 0 : i32
    %c0_i32_0 = arith.constant 0 : i32
    %c0_i32_1 = arith.constant 0 : i32
    return %c0_i32, %c0_i32_0 : i32, i32
  }
  func.func @transform_3(%arg0: i32) -> (i32, i32) {
    %c0_i32 = arith.constant 0 : i32
    %c0_i32_0 = arith.constant 0 : i32
    %c0_i32_1 = arith.constant 0 : i32
    return %c0_i32, %c0_i32_0 : i32, i32
  }
  func.func @transform_4(%arg0: i32) -> (i32, i32) {
    %c0_i32 = arith.constant 0 : i32
    %c0_i32_0 = arith.constant 0 : i32
    %c0_i32_1 = arith.constant 0 : i32
    return %c0_i32, %c0_i32_0 : i32, i32
  }
  func.func @transform_5(%arg0: i32) -> (i32, i32) {
    %c0_i32 = arith.constant 0 : i32
    %c0_i32_0 = arith.constant 0 : i32
    %c0_i32_1 = arith.constant 0 : i32
    return %c0_i32, %c0_i32_0 : i32, i32
  }
  func.func @transform_6(%arg0: i32) -> (i32, i32, i32) {
    %c0_i32 = arith.constant 0 : i32
    %c0_i32_0 = arith.constant 0 : i32
    %c0_i32_1 = arith.constant 0 : i32
    return %arg0, %c0_i32, %c0_i32_0 : i32, i32, i32
  }
  func.func @transform_7(%arg0: i32) -> (i32, i32, i32) {
    %c0_i32 = arith.constant 0 : i32
    %c0_i32_0 = arith.constant 0 : i32
    %c0_i32_1 = arith.constant 0 : i32
    return %arg0, %c0_i32, %c0_i32_0 : i32, i32, i32
  }
  func.func @transform_8(%arg0: i32) -> (i32, i32, i32) {
    %c0_i32 = arith.constant 0 : i32
    %c0_i32_0 = arith.constant 0 : i32
    %c0_i32_1 = arith.constant 0 : i32
    return %arg0, %c0_i32, %c0_i32_0 : i32, i32, i32
  }
}

module attributes {stable_mosaic.version = 11 : i64} {
  func.func @_res_requant_kernel(%arg0: i32, %arg1: memref<1x4x256xf32, #tpu.memory_space<vmem>>, %arg2: memref<1x4x256xf32, #tpu.memory_space<vmem>>, %arg3: memref<4x4xf32, #tpu.memory_space<vmem>>, %arg4: memref<1x4x256xf32, #tpu.memory_space<vmem>>) attributes {dimension_semantics = [#tpu.dimension_semantics<parallel>], iteration_bounds = array<i64: 2>, scalar_prefetch = 0 : i64, scratch_operands = 0 : i64, tpu.core_type = #tpu.core_type<tc>, window_params = [{transform_indices = @transform_0, window_bounds = array<i64: 1, 4, 256>}, {transform_indices = @transform_1, window_bounds = array<i64: 1, 4, 256>}, {pipeline_mode = #tpu.pipeline_mode<synchronous>, transform_indices = @transform_2, window_bounds = array<i64: 4, 4>}, {transform_indices = @transform_3, window_bounds = array<i64: 1, 4, 256>}]} {
    %c0 = arith.constant 0 : index
    %c0_0 = arith.constant 0 : index
    %c0_1 = arith.constant 0 : index
    %0 = vector.load %arg1[%c0, %c0_0, %c0_1] : memref<1x4x256xf32, #tpu.memory_space<vmem>>, vector<1x4x256xf32>
    %1 = vector.shape_cast %0 : vector<1x4x256xf32> to vector<4x256xf32>
    %c0_2 = arith.constant 0 : index
    %c0_3 = arith.constant 0 : index
    %c0_4 = arith.constant 0 : index
    %2 = vector.load %arg2[%c0_2, %c0_3, %c0_4] : memref<1x4x256xf32, #tpu.memory_space<vmem>>, vector<1x4x256xf32>
    %3 = vector.shape_cast %2 : vector<1x4x256xf32> to vector<4x256xf32>
    %c0_5 = arith.constant 0 : index
    %c0_6 = arith.constant 0 : index
    %4 = vector.load %arg3[%c0_5, %c0_6] : memref<4x4xf32, #tpu.memory_space<vmem>>, vector<4x1xf32>
    %5 = vector.broadcast %4 : vector<4x1xf32> to vector<4x256xf32>
    %6 = arith.mulf %1, %5 : vector<4x256xf32>
    %7 = math.roundeven %6 : vector<4x256xf32>
    %c0_7 = arith.constant 0 : index
    %c1 = arith.constant 1 : index
    %8 = vector.load %arg3[%c0_7, %c1] : memref<4x4xf32, #tpu.memory_space<vmem>>, vector<4x1xf32>
    %9 = vector.broadcast %8 : vector<4x1xf32> to vector<4x256xf32>
    %10 = arith.mulf %3, %9 : vector<4x256xf32>
    %11 = math.roundeven %10 : vector<4x256xf32>
    %c0_8 = arith.constant 0 : index
    %c2 = arith.constant 2 : index
    %12 = vector.load %arg3[%c0_8, %c2] : memref<4x4xf32, #tpu.memory_space<vmem>>, vector<4x1xf32>
    %13 = vector.broadcast %12 : vector<4x1xf32> to vector<4x256xf32>
    %14 = arith.mulf %11, %13 : vector<4x256xf32>
    %15 = math.roundeven %14 : vector<4x256xf32>
    %16 = arith.addf %7, %15 : vector<4x256xf32>
    %cst = arith.constant -1.280000e+02 : f32
    %cst_9 = arith.constant 1.270000e+02 : f32
    %17 = vector.broadcast %cst : f32 to vector<4x256xf32>
    %18 = arith.maximumf %17, %16 : vector<4x256xf32>
    %19 = vector.broadcast %cst_9 : f32 to vector<4x256xf32>
    %20 = arith.minimumf %19, %18 : vector<4x256xf32>
    %cst_10 = arith.constant 0.000000e+00 : f32
    %21 = vector.broadcast %cst_10 : f32 to vector<4x256xf32>
    %22 = arith.maximumf %20, %21 : vector<4x256xf32>
    %c0_11 = arith.constant 0 : index
    %c3 = arith.constant 3 : index
    %23 = vector.load %arg3[%c0_11, %c3] : memref<4x4xf32, #tpu.memory_space<vmem>>, vector<4x1xf32>
    %24 = vector.broadcast %23 : vector<4x1xf32> to vector<4x256xf32>
    %25 = arith.mulf %22, %24 : vector<4x256xf32>
    %c0_12 = arith.constant 0 : index
    %c0_13 = arith.constant 0 : index
    %c0_14 = arith.constant 0 : index
    %26 = vector.load %arg4[%c0_12, %c0_13, %c0_14] : memref<1x4x256xf32, #tpu.memory_space<vmem>>, vector<1x4x256xf32>
    %27 = vector.shape_cast %26 : vector<1x4x256xf32> to vector<4x256xf32>
    %28 = vector.shape_cast %25 : vector<4x256xf32> to vector<1x4x256xf32>
    tpu.vector_store %arg4[%c0_12, %c0_13, %c0_14], %28 {strides = array<i32>} : memref<1x4x256xf32, #tpu.memory_space<vmem>>, vector<1x4x256xf32>,
    return
  }
  func.func @transform_0(%arg0: i32) -> (i32, i32, i32) {
    %c0_i32 = arith.constant 0 : i32
    %c0_i32_0 = arith.constant 0 : i32
    %c0_i32_1 = arith.constant 0 : i32
    return %arg0, %c0_i32, %c0_i32_0 : i32, i32, i32
  }
  func.func @transform_1(%arg0: i32) -> (i32, i32, i32) {
    %c0_i32 = arith.constant 0 : i32
    %c0_i32_0 = arith.constant 0 : i32
    %c0_i32_1 = arith.constant 0 : i32
    return %arg0, %c0_i32, %c0_i32_0 : i32, i32, i32
  }
  func.func @transform_2(%arg0: i32) -> (i32, i32) {
    %c0_i32 = arith.constant 0 : i32
    %c0_i32_0 = arith.constant 0 : i32
    %c0_i32_1 = arith.constant 0 : i32
    return %c0_i32, %c0_i32_0 : i32, i32
  }
  func.func @transform_3(%arg0: i32) -> (i32, i32, i32) {
    %c0_i32 = arith.constant 0 : i32
    %c0_i32_0 = arith.constant 0 : i32
    %c0_i32_1 = arith.constant 0 : i32
    return %arg0, %c0_i32, %c0_i32_0 : i32, i32, i32
  }
}

</mosaic_0001>

<llo_original>
// kernel: q_resblockbn_forward.4
$region0: #{q_resblockbn_forward.4}
  #allocation0 [shape = 'u32[]', space=smem, size = 0x4, offset = 0x4, fixed_abs, tag = 'smem constant byte address 0x4 - core index']
  #allocation1 [shape = 'u32[144,128]{1,0:T(1,128)}', space=vmem, size = 0x12000, scoped, tag = 'internal scratch']
  %s0 = inlined_call_operand.vmem [shape: f32[2,1,1024], index: 0, kind: input, shape index: {}]
  %s1 = inlined_call_operand.vmem [shape: f32[2,1,128], index: 1, kind: output, shape index: {0}]
  %s2 = inlined_call_operand.vmem [shape: f32[2,1,128], index: 2, kind: output, shape index: {1}]
  %3 = xla_tuple %s1, %s2
  %s4 = sld [smem:[#allocation0]]
  $region45: #{q_resblockbn_forward.4} parent=0
    _
  %s6 = ssub.s32 1, %s4
  %s7 = scalar_select 0, %s6, %s4
  loop: start=0, step=1, limit=4
  $region2: #{q_resblockbn_forward.4} parent=0 // loop_pre_header
    _
  $region3: #{q_resblockbn_forward.4} parent=0 // loop_header
    %s9 = sphi 0, %s13
    %p10 = scmp.ge.s32.totalorder %s9, 4
    %s19 = sphi 0, %s21
    %s22 = sphi 0, %s19
    %s23 = sphi 0, %s22
    %s39 = sphi 0, %s23
    %s45 = sphi 0, %s47
    %s48 = sphi 0, %s45
    %s49 = sphi 0, %s48
    %s65 = sphi 0, %s49
    %s71 = sphi 0, %s73
    %s74 = sphi 0, %s71
    %s75 = sphi 0, %s74
    %s91 = sphi 0, %s75
  $region4: #{q_resblockbn_forward.4} parent=0 // loop_header_branch
    %12 = sbr.rel (%p10) target = $region8
  $region5: #{q_resblockbn_forward.4} parent=0 // loop_body
    %s14 = ssub.s32 %s9, 1
    %s15 = ssub.s32 %s9, 2
    %s16 = sadd.s32 %s9, 1
    %s17 = ssub.s32 %s9, %s16
    %p18 = scmp.eq.s32.totalorder %s17, 0
    %s20 = sadd.s32 %s19, 1
    %s21 = scalar_select %p18, %s19, %s20
    %p24 = pneg %p18
    %p25 = scmp.eq.s32.totalorder %s9, 1
    %p26 = por %p24, %p25
    %p27 = scmp.ne.s32.totalorder %s19, %s22
    %p28 = scmp.eq.s32.totalorder %s9, 0
    %p29 = por %p27, %p28
    %p30 = scmp.ne.s32.totalorder %s19, %s22
    %p31 = scmp.eq.s32.totalorder %s14, 1
    %p32 = por %p30, %p31
    %p33 = scmp.ne.s32.totalorder %s22, %s23
    %p34 = scmp.eq.s32.totalorder %s14, 0
    %p35 = por %p33, %p34
    %p36 = scmp.ne.s32.totalorder %s22, %s23
    %p37 = scmp.eq.s32.totalorder %s15, 1
    %p38 = por %p36, %p37
    %p40 = scmp.ne.s32.totalorder %s23, %s39
    %p41 = scmp.eq.s32.totalorder %s15, 0
    %p42 = por %p40, %p41
    %s43 = ssub.s32 %s9, %s16
    %p44 = scmp.eq.s32.totalorder %s43, 0
    %s46 = sadd.s32 %s45, 1
    %s47 = scalar_select %p44, %s45, %s46
    %p50 = pneg %p44
    %p51 = scmp.eq.s32.totalorder %s9, 1
    %p52 = por %p50, %p51
    %p53 = scmp.ne.s32.totalorder %s45, %s48
    %p54 = scmp.eq.s32.totalorder %s9, 0
    %p55 = por %p53, %p54
    %p56 = scmp.ne.s32.totalorder %s45, %s48
    %p57 = scmp.eq.s32.totalorder %s14, 1
    %p58 = por %p56, %p57
    %p59 = scmp.ne.s32.totalorder %s48, %s49
    %p60 = scmp.eq.s32.totalorder %s14, 0
    %p61 = por %p59, %p60
    %p62 = scmp.ne.s32.totalorder %s48, %s49
    %p63 = scmp.eq.s32.totalorder %s15, 1
    %p64 = por %p62, %p63
    %p66 = scmp.ne.s32.totalorder %s49, %s65
    %p67 = scmp.eq.s32.totalorder %s15, 0
    %p68 = por %p66, %p67
    %s69 = ssub.s32 %s9, %s16
    %p70 = scmp.eq.s32.totalorder %s69, 0
    %s72 = sadd.s32 %s71, 1
    %s73 = scalar_select %p70, %s71, %s72
    %p76 = pneg %p70
    %p77 = scmp.eq.s32.totalorder %s9, 1
    %p78 = por %p76, %p77
    %p79 = scmp.ne.s32.totalorder %s71, %s74
    %p80 = scmp.eq.s32.totalorder %s9, 0
    %p81 = por %p79, %p80
    %p82 = scmp.ne.s32.totalorder %s71, %s74
    %p83 = scmp.eq.s32.totalorder %s14, 1
    %p84 = por %p82, %p83
    %p85 = scmp.ne.s32.totalorder %s74, %s75
    %p86 = scmp.eq.s32.totalorder %s14, 0
    %p87 = por %p85, %p86
    %p88 = scmp.ne.s32.totalorder %s74, %s75
    %p89 = scmp.eq.s32.totalorder %s15, 1
    %p90 = por %p88, %p89
    %p92 = scmp.ne.s32.totalorder %s75, %s91
    %p93 = scmp.eq.s32.totalorder %s15, 0
    %p94 = por %p92, %p93
    %p95 = scmp.le.s32.totalorder 1, %s9
    %p96 = scmp.lt.s32.totalorder %s9, 3
    %p97 = pnand %p95, %p96
    %p98 = pneg %p97
    // Predicated region
    $region9: #{q_resblockbn_forward.4} parent=5 // pred_check
      _
    $region10: #{q_resblockbn_forward.4} parent=5 // pred_check_branch
      %100 = sbr.rel (%p97) target = $region12
    $region11: #{q_resblockbn_forward.4} parent=5 // pred_region
      %s101 = ssub.s32 %s9, 1
    $region12: #{q_resblockbn_forward.4} parent=5 // pred_fallthru
      _
    %p102 = scmp.lt.s32.totalorder %s9, 2
    // Predicated region
    $region13: #{q_resblockbn_forward.4} parent=5 // pred_check
      %p103 = pneg %p102
    $region14: #{q_resblockbn_forward.4} parent=5 // pred_check_branch
      %105 = sbr.rel (%p103) target = $region16
    $region15: #{q_resblockbn_forward.4} parent=5 // pred_region
      // Predicated region
      $region17: #{q_resblockbn_forward.4} parent=15 // pred_check
        %p106 = pneg %p29
      $region18: #{q_resblockbn_forward.4} parent=15 // pred_check_branch
        %108 = sbr.rel (%p106) target = $region20
      $region19: #{q_resblockbn_forward.4} parent=15 // pred_region
        %p109 = scmp.lt.s32.totalorder %s9, 1
        %s110 = scalar_select %p109, %s9, 1
        %s111 = smul.addr %s110, 8
        %s112 = scalar_lea.vmem %s0, %s111
      $region20: #{q_resblockbn_forward.4} parent=15 // pred_fallthru
        _
    $region16: #{q_resblockbn_forward.4} parent=5 // pred_fallthru
      _
    %p113 = scmp.le.s32.totalorder 1, %s9
    %p114 = scmp.lt.s32.totalorder %s9, 3
    %p115 = pnand %p113, %p114
    %p116 = pneg %p115
    // Predicated region
    $region21: #{q_resblockbn_forward.4} parent=5 // pred_check
      _
    $region22: #{q_resblockbn_forward.4} parent=5 // pred_check_branch
      %118 = sbr.rel (%p115) target = $region24
    $region23: #{q_resblockbn_forward.4} parent=5 // pred_region
      %s119 = ssub.s32 %s9, 1
      %p120 = scmp.lt.s32.totalorder %s14, 1
      %s121 = scalar_select %p120, %s14, 1
      %s122 = smul.addr %s121, 8
      %s123 = scalar_lea.vmem %s0, %s122
      %p124 = pneg %p35
      %p125 = pneg %p32
      %p126 = pneg %p61
      %p127 = pneg %p58
      %p128 = scmp.lt.s32.totalorder %s14, 1
      %s129 = scalar_select %p128, %s14, 1
      %s130 = scalar_lea.vmem %s1, %s129
      %p131 = pneg %p87
      %p132 = pneg %p84
      %p133 = scmp.lt.s32.totalorder %s14, 1
      %s134 = scalar_select %p133, %s14, 1
      %s135 = scalar_lea.vmem %s2, %s134
      %p136 = scmp.lt.s32.totalorder %s14, 1
      %s137 = scalar_select %p136, %s14, 1
      %s138 = smul.addr %s137, 8
      %s139 = scalar_lea.vmem %s0, %s138
      %p140 = scmp.lt.s32.totalorder %s14, 1
      %s141 = scalar_select %p140, %s14, 1
      %s142 = scalar_lea.vmem %s1, %s141
      %p143 = scmp.lt.s32.totalorder %s14, 1
      %s144 = scalar_select %p143, %s14, 1
      %s145 = scalar_lea.vmem %s2, %s144
      %v146 = vld [vmem:[%s139] sm:$0xff]
      %v148 = vlaneseq
      %v149 = vshrl.u32 %v148, 7
      %v150 = vsub.s32 0, %v149
      %v151 = vrot.slane %v146, %v150
      %v152 = vlaneseq
      %v153 = vshrl.u32 %v152, 7
      %v154 = vsub.s32 1, %v153
      %v155 = vrot.slane %v146, %v154
      %v156 = vlaneseq
      %v157 = vshrl.u32 %v156, 7
      %v158 = vsub.s32 2, %v157
      %v159 = vrot.slane %v146, %v158
      %v160 = vlaneseq
      %v161 = vshrl.u32 %v160, 7
      %v162 = vsub.s32 3, %v161
      %v163 = vrot.slane %v146, %v162
      %v164 = vlaneseq
      %v165 = vshrl.u32 %v164, 7
      %v166 = vsub.s32 4, %v165
      %v167 = vrot.slane %v146, %v166
      %v168 = vlaneseq
      %v169 = vshrl.u32 %v168, 7
      %v170 = vsub.s32 5, %v169
      %v171 = vrot.slane %v146, %v170
      %v172 = vlaneseq
      %v173 = vshrl.u32 %v172, 7
      %v174 = vsub.s32 6, %v173
      %v175 = vrot.slane %v146, %v174
      %v176 = vlaneseq
      %v177 = vshrl.u32 %v176, 7
      %v178 = vsub.s32 7, %v177
      %v179 = vrot.slane %v146, %v178
      %vm188 = vcmask 1040384
      %v189 = vsel %vm188, %v151, inf
      %v190 = vsel %vm188, %v155, inf
      %v191 = vsel %vm188, %v159, inf
      %v192 = vsel %vm188, %v163, inf
      %v193 = vsel %vm188, %v167, inf
      %v194 = vmin.f32 %v189, %v193
      %v195 = vsel %vm188, %v171, inf
      %v196 = vmin.f32 %v190, %v195
      %v197 = vsel %vm188, %v175, inf
      %v198 = vmin.f32 %v191, %v197
      %v199 = vsel %vm188, %v179, inf
      %v200 = vmin.f32 %v192, %v199
      %v201 = vmin.f32 %v194, %v196
      %v202 = vmin.f32 %v198, %v200
      %v203 = vmin.f32 %v201, %v202
      %204 = vmin.xlane.f32.xlu0 %v203
      %v205 = vpop.xlane.xlu0 %204
      %v206 = vrot.slane %v205, 4
      %v207 = vmin.f32 %v205, %v206
      %v208 = vrot.slane %v207, 2
      %v209 = vmin.f32 %v207, %v208
      %v210 = vrot.slane %v209, 1
      %v211 = vmin.f32 %v209, %v210
      %s212 = vtos %v211
      %v213 = vstv %s212
      %214 = vst [vmem:[%s142] sm:$0x1] %v213
      %v215 = vsel %vm188, %v151, -inf
      %v216 = vsel %vm188, %v155, -inf
      %v217 = vsel %vm188, %v159, -inf
      %v218 = vsel %vm188, %v163, -inf
      %v219 = vsel %vm188, %v167, -inf
      %v220 = vmax.f32 %v215, %v219
      %v221 = vsel %vm188, %v171, -inf
      %v222 = vmax.f32 %v216, %v221
      %v223 = vsel %vm188, %v175, -inf
      %v224 = vmax.f32 %v217, %v223
      %v225 = vsel %vm188, %v179, -inf
      %v226 = vmax.f32 %v218, %v225
      %v227 = vmax.f32 %v220, %v222
      %v228 = vmax.f32 %v224, %v226
      %v229 = vmax.f32 %v227, %v228
      %230 = vmax.xlane.f32.xlu0 %v229
      %v231 = vpop.xlane.xlu0 %230
      %v232 = vrot.slane %v231, 4
      %v233 = vmax.f32 %v231, %v232
      %v234 = vrot.slane %v233, 2
      %v235 = vmax.f32 %v233, %v234
      %v236 = vrot.slane %v235, 1
      %v237 = vmax.f32 %v235, %v236
      %s238 = vtos %v237
      %v239 = vstv %s238
      %240 = vst [vmem:[%s145] sm:$0x1] %v239
      %p241 = scmp.lt.s32.totalorder %s14, 1
      %s242 = scalar_select %p241, %s14, 1
      %s243 = scalar_lea.vmem %s1, %s242
      %p244 = scmp.lt.s32.totalorder %s14, 1
      %s245 = scalar_select %p244, %s14, 1
      %s246 = scalar_lea.vmem %s2, %s245
      // Predicated region
      $region25: #{q_resblockbn_forward.4} parent=23 // pred_check
        %p247 = pneg %p58
      $region26: #{q_resblockbn_forward.4} parent=23 // pred_check_branch
        %249 = sbr.rel (%p247) target = $region28
      $region27: #{q_resblockbn_forward.4} parent=23 // pred_region
        _
      $region28: #{q_resblockbn_forward.4} parent=23 // pred_fallthru
        _
      // Predicated region
      $region29: #{q_resblockbn_forward.4} parent=23 // pred_check
        %p250 = pneg %p84
      $region30: #{q_resblockbn_forward.4} parent=23 // pred_check_branch
        %252 = sbr.rel (%p250) target = $region32
      $region31: #{q_resblockbn_forward.4} parent=23 // pred_region
        _
      $region32: #{q_resblockbn_forward.4} parent=23 // pred_fallthru
        _
    $region24: #{q_resblockbn_forward.4} parent=5 // pred_fallthru
      _
    %p253 = scmp.le.s32.totalorder 2, %s9
    // Predicated region
    $region33: #{q_resblockbn_forward.4} parent=5 // pred_check
      %p254 = pneg %p253
    $region34: #{q_resblockbn_forward.4} parent=5 // pred_check_branch
      %256 = sbr.rel (%p254) target = $region36
    $region35: #{q_resblockbn_forward.4} parent=5 // pred_region
      %s257 = ssub.s32 %s9, 2
      // Predicated region
      $region37: #{q_resblockbn_forward.4} parent=35 // pred_check
        %p258 = pneg %p64
      $region38: #{q_resblockbn_forward.4} parent=35 // pred_check_branch
        %260 = sbr.rel (%p258) target = $region40
      $region39: #{q_resblockbn_forward.4} parent=35 // pred_region
        %p261 = scmp.lt.s32.totalorder %s15, 1
        %s262 = scalar_select %p261, %s15, 1
        %s263 = scalar_lea.vmem %s1, %s262
      $region40: #{q_resblockbn_forward.4} parent=35 // pred_fallthru
        _
      // Predicated region
      $region41: #{q_resblockbn_forward.4} parent=35 // pred_check
        %p264 = pneg %p90
      $region42: #{q_resblockbn_forward.4} parent=35 // pred_check_branch
        %266 = sbr.rel (%p264) target = $region44
      $region43: #{q_resblockbn_forward.4} parent=35 // pred_region
        %p267 = scmp.lt.s32.totalorder %s15, 1
        %s268 = scalar_select %p267, %s15, 1
        %s269 = scalar_lea.vmem %s2, %s268
      $region44: #{q_resblockbn_forward.4} parent=35 // pred_fallthru
        _
    $region36: #{q_resblockbn_forward.4} parent=5 // pred_fallthru
      _
  $region6: #{q_resblockbn_forward.4} parent=0 // loop_footer
    %s13 = sadd.s32 1, %s9
  $region7: #{q_resblockbn_forward.4} parent=0 // loop_footer_branch
    %8 = sbr.rel target = $region3
  $region8: #{q_resblockbn_forward.4} parent=0 // loop_exit
    _

// kernel: q_resblockbn_forward.7
$region0: #{q_resblockbn_forward.7}
  #allocation0 [shape = 'u32[]', space=smem, size = 0x4, offset = 0x4, fixed_abs, tag = 'smem constant byte address 0x4 - core index']
  #allocation1 [shape = 'u32[144,128]{1,0:T(1,128)}', space=vmem, size = 0x12000, scoped, tag = 'internal scratch']
  %s0 = inlined_call_operand.vmem [shape: f32[2,4,256], index: 0, kind: input, shape index: {}]
  %s1 = inlined_call_operand.vmem [shape: f32[2,4,256], index: 1, kind: input, shape index: {}]
  %s2 = inlined_call_operand.vmem [shape: f32[4,4], index: 2, kind: input, shape index: {}]
  %s3 = inlined_call_operand.vmem [shape: f32[2,4,256], index: 3, kind: output, shape index: {}]
  %s4 = sld [smem:[#allocation0]]
  $region45: #{q_resblockbn_forward.7} parent=0
    _
  %s6 = ssub.s32 1, %s4
  %s7 = scalar_select 0, %s6, %s4
  loop: start=0, step=1, limit=4
  $region2: #{q_resblockbn_forward.7} parent=0 // loop_pre_header
    _
  $region3: #{q_resblockbn_forward.7} parent=0 // loop_header
    %s9 = sphi 0, %s13
    %p10 = scmp.ge.s32.totalorder %s9, 4
    %s19 = sphi 0, %s21
    %s22 = sphi 0, %s19
    %s23 = sphi 0, %s22
    %s39 = sphi 0, %s23
    %s45 = sphi 0, %s47
    %s48 = sphi 0, %s45
    %s49 = sphi 0, %s48
    %s65 = sphi 0, %s49
    %s69 = sphi 0, %s69
    %s71 = sphi 0, %s69
    %s72 = sphi 0, %s71
    %s86 = sphi 0, %s72
    %s92 = sphi 0, %s94
    %s95 = sphi 0, %s92
    %s96 = sphi 0, %s95
    %s112 = sphi 0, %s96
  $region4: #{q_resblockbn_forward.7} parent=0 // loop_header_branch
    %12 = sbr.rel (%p10) target = $region8
  $region5: #{q_resblockbn_forward.7} parent=0 // loop_body
    %s14 = ssub.s32 %s9, 1
    %s15 = ssub.s32 %s9, 2
    %s16 = sadd.s32 %s9, 1
    %s17 = ssub.s32 %s9, %s16
    %p18 = scmp.eq.s32.totalorder %s17, 0
    %s20 = sadd.s32 %s19, 1
    %s21 = scalar_select %p18, %s19, %s20
    %p24 = pneg %p18
    %p25 = scmp.eq.s32.totalorder %s9, 1
    %p26 = por %p24, %p25
    %p27 = scmp.ne.s32.totalorder %s19, %s22
    %p28 = scmp.eq.s32.totalorder %s9, 0
    %p29 = por %p27, %p28
    %p30 = scmp.ne.s32.totalorder %s19, %s22
    %p31 = scmp.eq.s32.totalorder %s14, 1
    %p32 = por %p30, %p31
    %p33 = scmp.ne.s32.totalorder %s22, %s23
    %p34 = scmp.eq.s32.totalorder %s14, 0
    %p35 = por %p33, %p34
    %p36 = scmp.ne.s32.totalorder %s22, %s23
    %p37 = scmp.eq.s32.totalorder %s15, 1
    %p38 = por %p36, %p37
    %p40 = scmp.ne.s32.totalorder %s23, %s39
    %p41 = scmp.eq.s32.totalorder %s15, 0
    %p42 = por %p40, %p41
    %s43 = ssub.s32 %s9, %s16
    %p44 = scmp.eq.s32.totalorder %s43, 0
    %s46 = sadd.s32 %s45, 1
    %s47 = scalar_select %p44, %s45, %s46
    %p50 = pneg %p44
    %p51 = scmp.eq.s32.totalorder %s9, 1
    %p52 = por %p50, %p51
    %p53 = scmp.ne.s32.totalorder %s45, %s48
    %p54 = scmp.eq.s32.totalorder %s9, 0
    %p55 = por %p53, %p54
    %p56 = scmp.ne.s32.totalorder %s45, %s48
    %p57 = scmp.eq.s32.totalorder %s14, 1
    %p58 = por %p56, %p57
    %p59 = scmp.ne.s32.totalorder %s48, %s49
    %p60 = scmp.eq.s32.totalorder %s14, 0
    %p61 = por %p59, %p60
    %p62 = scmp.ne.s32.totalorder %s48, %s49
    %p63 = scmp.eq.s32.totalorder %s15, 1
    %p64 = por %p62, %p63
    %p66 = scmp.ne.s32.totalorder %s49, %s65
    %p67 = scmp.eq.s32.totalorder %s15, 0
    %p68 = por %p66, %p67
    %s70 = sadd.s32 %s69, 1
    %p73 = scmp.eq.s32.totalorder %s9, 1
    %p74 = scmp.ne.s32.totalorder %s69, %s71
    %p75 = scmp.eq.s32.totalorder %s9, 0
    %p76 = por %p74, %p75
    %p77 = scmp.ne.s32.totalorder %s69, %s71
    %p78 = scmp.eq.s32.totalorder %s14, 1
    %p79 = por %p77, %p78
    %p80 = scmp.ne.s32.totalorder %s71, %s72
    %p81 = scmp.eq.s32.totalorder %s14, 0
    %p82 = por %p80, %p81
    %p83 = scmp.ne.s32.totalorder %s71, %s72
    %p84 = scmp.eq.s32.totalorder %s15, 1
    %p85 = por %p83, %p84
    %p87 = scmp.ne.s32.totalorder %s72, %s86
    %p88 = scmp.eq.s32.totalorder %s15, 0
    %p89 = por %p87, %p88
    %s90 = ssub.s32 %s9, %s16
    %p91 = scmp.eq.s32.totalorder %s90, 0
    %s93 = sadd.s32 %s92, 1
    %s94 = scalar_select %p91, %s92, %s93
    %p97 = pneg %p91
    %p98 = scmp.eq.s32.totalorder %s9, 1
    %p99 = por %p97, %p98
    %p100 = scmp.ne.s32.totalorder %s92, %s95
    %p101 = scmp.eq.s32.totalorder %s9, 0
    %p102 = por %p100, %p101
    %p103 = scmp.ne.s32.totalorder %s92, %s95
    %p104 = scmp.eq.s32.totalorder %s14, 1
    %p105 = por %p103, %p104
    %p106 = scmp.ne.s32.totalorder %s95, %s96
    %p107 = scmp.eq.s32.totalorder %s14, 0
    %p108 = por %p106, %p107
    %p109 = scmp.ne.s32.totalorder %s95, %s96
    %p110 = scmp.eq.s32.totalorder %s15, 1
    %p111 = por %p109, %p110
    %p113 = scmp.ne.s32.totalorder %s96, %s112
    %p114 = scmp.eq.s32.totalorder %s15, 0
    %p115 = por %p113, %p114
    %p116 = scmp.le.s32.totalorder 1, %s9
    %p117 = scmp.lt.s32.totalorder %s9, 3
    %p118 = pnand %p116, %p117
    %p119 = pneg %p118
    // Predicated region
    $region9: #{q_resblockbn_forward.7} parent=5 // pred_check
      _
    $region10: #{q_resblockbn_forward.7} parent=5 // pred_check_branch
      %121 = sbr.rel (%p118) target = $region12
    $region11: #{q_resblockbn_forward.7} parent=5 // pred_region
      %s122 = ssub.s32 %s9, 1
      // Predicated region
      $region13: #{q_resblockbn_forward.7} parent=11 // pred_check
        %p123 = pneg %p82
      $region14: #{q_resblockbn_forward.7} parent=11 // pred_check_branch
        %125 = sbr.rel (%p123) target = $region16
      $region15: #{q_resblockbn_forward.7} parent=11 // pred_region
        _
      $region16: #{q_resblockbn_forward.7} parent=11 // pred_fallthru
        _
    $region12: #{q_resblockbn_forward.7} parent=5 // pred_fallthru
      _
    %p126 = scmp.lt.s32.totalorder %s9, 2
    // Predicated region
    $region17: #{q_resblockbn_forward.7} parent=5 // pred_check
      %p127 = pneg %p126
    $region18: #{q_resblockbn_forward.7} parent=5 // pred_check_branch
      %129 = sbr.rel (%p127) target = $region20
    $region19: #{q_resblockbn_forward.7} parent=5 // pred_region
      // Predicated region
      $region21: #{q_resblockbn_forward.7} parent=19 // pred_check
        %p130 = pneg %p29
      $region22: #{q_resblockbn_forward.7} parent=19 // pred_check_branch
        %132 = sbr.rel (%p130) target = $region24
      $region23: #{q_resblockbn_forward.7} parent=19 // pred_region
        %p133 = scmp.lt.s32.totalorder %s9, 1
        %s134 = scalar_select %p133, %s9, 1
        %s135 = smul.addr %s134, 2
        %s136 = smul.addr %s135, 4
        %s137 = scalar_lea.vmem %s0, %s136
      $region24: #{q_resblockbn_forward.7} parent=19 // pred_fallthru
        _
      // Predicated region
      $region25: #{q_resblockbn_forward.7} parent=19 // pred_check
        %p138 = pneg %p55
      $region26: #{q_resblockbn_forward.7} parent=19 // pred_check_branch
        %140 = sbr.rel (%p138) target = $region28
      $region27: #{q_resblockbn_forward.7} parent=19 // pred_region
        %p141 = scmp.lt.s32.totalorder %s9, 1
        %s142 = scalar_select %p141, %s9, 1
        %s143 = smul.addr %s142, 2
        %s144 = smul.addr %s143, 4
        %s145 = scalar_lea.vmem %s1, %s144
      $region28: #{q_resblockbn_forward.7} parent=19 // pred_fallthru
        _
    $region20: #{q_resblockbn_forward.7} parent=5 // pred_fallthru
      _
    %p146 = scmp.le.s32.totalorder 1, %s9
    %p147 = scmp.lt.s32.totalorder %s9, 3
    %p148 = pnand %p146, %p147
    %p149 = pneg %p148
    // Predicated region
    $region29: #{q_resblockbn_forward.7} parent=5 // pred_check
      _
    $region30: #{q_resblockbn_forward.7} parent=5 // pred_check_branch
      %151 = sbr.rel (%p148) target = $region32
    $region31: #{q_resblockbn_forward.7} parent=5 // pred_region
      %s152 = ssub.s32 %s9, 1
      %p153 = scmp.lt.s32.totalorder %s14, 1
      %s154 = scalar_select %p153, %s14, 1
      %s155 = smul.addr %s154, 2
      %s156 = smul.addr %s155, 4
      %s157 = scalar_lea.vmem %s0, %s156
      %p158 = pneg %p35
      %p159 = pneg %p32
      %p160 = scmp.lt.s32.totalorder %s14, 1
      %s161 = scalar_select %p160, %s14, 1
      %s162 = smul.addr %s161, 2
      %s163 = smul.addr %s162, 4
      %s164 = scalar_lea.vmem %s1, %s163
      %p165 = pneg %p61
      %p166 = pneg %p58
      %p167 = pneg %p82
      %p168 = pneg %p79
      %p169 = pneg %p108
      %p170 = pneg %p105
      %p171 = scmp.lt.s32.totalorder %s14, 1
      %s172 = scalar_select %p171, %s14, 1
      %s173 = smul.addr %s172, 2
      %s174 = smul.addr %s173, 4
      %s175 = scalar_lea.vmem %s3, %s174
      %p176 = scmp.lt.s32.totalorder %s14, 1
      %s177 = scalar_select %p176, %s14, 1
      %s178 = smul.addr %s177, 2
      %s179 = smul.addr %s178, 4
      %s180 = scalar_lea.vmem %s0, %s179
      %p181 = scmp.lt.s32.totalorder %s14, 1
      %s182 = scalar_select %p181, %s14, 1
      %s183 = smul.addr %s182, 2
      %s184 = smul.addr %s183, 4
      %s185 = scalar_lea.vmem %s1, %s184
      %p186 = scmp.lt.s32.totalorder %s14, 1
      %s187 = scalar_select %p186, %s14, 1
      %s188 = smul.addr %s187, 2
      %s189 = smul.addr %s188, 4
      %s190 = scalar_lea.vmem %s3, %s189
      %v191 = vld [vmem:[%s180] sm:$0xff]
      %v192 = vld [vmem:[%s185] sm:$0xff]
      %v193 = vld [vmem:[%s2] sm:$0xf]
      %195 = vset.pattern.permute.xlu0 0
      %196 = vperm.xlu0 %195, %v193
      %v197 = vpop.permute.xlu0 %196
      %v199 = vunpack.c.l.s4 839922192
      %v200 = vunpack.c.0.s8 %v199
      %v201 = vlaneseq
      %v202 = vshrl.u32 %v201, 7
      %v203 = vsub.s32 %v200, %v202
      %v204 = vrot.slane %v197, %v203
      %v206 = vmul.f32 %v191, %v204
      %v207 = vround.ne.pseudo %v206
      %208 = vset.pattern.permute.xlu0 1
      %209 = vperm.xlu0 %208, %v193
      %v210 = vpop.permute.xlu0 %209
      %v212 = vunpack.c.l.s4 839922192
      %v213 = vunpack.c.0.s8 %v212
      %v214 = vlaneseq
      %v215 = vshrl.u32 %v214, 7
      %v216 = vsub.s32 %v213, %v215
      %v217 = vrot.slane %v210, %v216
      %v219 = vmul.f32 %v192, %v217
      %v220 = vround.ne.pseudo %v219
      %221 = vset.pattern.permute.xlu0 2
      %222 = vperm.xlu0 %221, %v193
      %v223 = vpop.permute.xlu0 %222
      %v225 = vunpack.c.l.s4 839922192
      %v226 = vunpack.c.0.s8 %v225
      %v227 = vlaneseq
      %v228 = vshrl.u32 %v227, 7
      %v229 = vsub.s32 %v226, %v228
      %v230 = vrot.slane %v223, %v229
      %v232 = vmul.f32 %v220, %v230
      %v233 = vround.ne.pseudo %v232
      %v234 = vadd.f32 %v207, %v233
      %v235 = vmax.f32 %v234, -128.0
      %v236 = vmin.f32 %v235, 127.0
      %v237 = vmax.f32 %v236, 0.0
      %238 = vset.pattern.permute.xlu0 3
      %239 = vperm.xlu0 %238, %v193
      %v240 = vpop.permute.xlu0 %239
      %v242 = vunpack.c.l.s4 839922192
      %v243 = vunpack.c.0.s8 %v242
      %v244 = vlaneseq
      %v245 = vshrl.u32 %v244, 7
      %v246 = vsub.s32 %v243, %v245
      %v247 = vrot.slane %v240, %v246
      %v249 = vmul.f32 %v237, %v247
      %250 = vst [vmem:[%s190] sm:$0xff] %v249
      %p251 = scmp.lt.s32.totalorder %s14, 1
      %s252 = scalar_select %p251, %s14, 1
      %s253 = smul.addr %s252, 2
      %s254 = smul.addr %s253, 4
      %s255 = scalar_lea.vmem %s3, %s254
      // Predicated region
      $region33: #{q_resblockbn_forward.7} parent=31 // pred_check
        %p256 = pneg %p105
      $region34: #{q_resblockbn_forward.7} parent=31 // pred_check_branch
        %258 = sbr.rel (%p256) target = $region36
      $region35: #{q_resblockbn_forward.7} parent=31 // pred_region
        _
      $region36: #{q_resblockbn_forward.7} parent=31 // pred_fallthru
        _
    $region32: #{q_resblockbn_forward.7} parent=5 // pred_fallthru
      _
    %p259 = scmp.le.s32.totalorder 2, %s9
    // Predicated region
    $region37: #{q_resblockbn_forward.7} parent=5 // pred_check
      %p260 = pneg %p259
    $region38: #{q_resblockbn_forward.7} parent=5 // pred_check_branch
      %262 = sbr.rel (%p260) target = $region40
    $region39: #{q_resblockbn_forward.7} parent=5 // pred_region
      %s263 = ssub.s32 %s9, 2
      // Predicated region
      $region41: #{q_resblockbn_forward.7} parent=39 // pred_check
        %p264 = pneg %p111
      $region42: #{q_resblockbn_forward.7} parent=39 // pred_check_branch
        %266 = sbr.rel (%p264) target = $region44
      $region43: #{q_resblockbn_forward.7} parent=39 // pred_region
        %p267 = scmp.lt.s32.totalorder %s15, 1
        %s268 = scalar_select %p267, %s15, 1
        %s269 = smul.addr %s268, 2
        %s270 = smul.addr %s269, 4
        %s271 = scalar_lea.vmem %s3, %s270
      $region44: #{q_resblockbn_forward.7} parent=39 // pred_fallthru
        _
    $region40: #{q_resblockbn_forward.7} parent=5 // pred_fallthru
      _
  $region6: #{q_resblockbn_forward.7} parent=0 // loop_footer
    %s13 = sadd.s32 1, %s9
  $region7: #{q_resblockbn_forward.7} parent=0 // loop_footer_branch
    %8 = sbr.rel target = $region3
  $region8: #{q_resblockbn_forward.7} parent=0 // loop_exit
    _

// kernel: q_resblockbn_forward.5
$region0: #{q_resblockbn_forward.5}
  #allocation0 [shape = 'u32[]', space=smem, size = 0x4, offset = 0x4, fixed_abs, tag = 'smem constant byte address 0x4 - core index']
  #allocation1 [shape = 'u32[144,128]{1,0:T(1,128)}', space=vmem, size = 0x12000, scoped, tag = 'internal scratch']
  #allocation2 [shape = 'f32[4,18,18]{2,1,0:T(8,128)}', space=vmem, size = 0xc000, scoped, tag = 'scratch operand']
  #allocation3 [shape = 'f32[36,256]{1,0:T(8,128)}', space=vmem, size = 0xa000, scoped, tag = 'scratch operand']
  %s0 = inlined_call_operand.vmem [shape: f32[2,4,256], index: 0, kind: input, shape index: {}]
  %s1 = inlined_call_operand.vmem [shape: f32[4,2], index: 1, kind: input, shape index: {}]
  %s2 = inlined_call_operand.vmem [shape: bf16[4,36], index: 2, kind: input, shape index: {}]
  %s3 = inlined_call_operand.vmem [shape: f32[4,1], index: 3, kind: input, shape index: {}]
  %s4 = inlined_call_operand.vmem [shape: f32[4,1], index: 4, kind: input, shape index: {}]
  %s5 = inlined_call_operand.vmem [shape: f32[2,4,256], index: 5, kind: output, shape index: {0}]
  %s6 = inlined_call_operand.vmem [shape: f32[2,1,128], index: 6, kind: output, shape index: {1}]
  %s7 = inlined_call_operand.vmem [shape: f32[2,1,128], index: 7, kind: output, shape index: {2}]
  %8 = xla_tuple %s5, %s6, %s7
  %s9 = sld [smem:[#allocation0]]
  $region69: #{q_resblockbn_forward.5} parent=0
    _
  %s11 = ssub.s32 1, %s9
  %s12 = scalar_select 0, %s11, %s9
  loop: start=0, step=1, limit=4
  $region2: #{q_resblockbn_forward.5} parent=0 // loop_pre_header
    _
  $region3: #{q_resblockbn_forward.5} parent=0 // loop_header
    %s14 = sphi 0, %s18
    %p15 = scmp.ge.s32.totalorder %s14, 4
    %s24 = sphi 0, %s26
    %s27 = sphi 0, %s24
    %s28 = sphi 0, %s27
    %s44 = sphi 0, %s28
    %s48 = sphi 0, %s48
    %s50 = sphi 0, %s48
    %s51 = sphi 0, %s50
    %s65 = sphi 0, %s51
    %s69 = sphi 0, %s69
    %s71 = sphi 0, %s69
    %s72 = sphi 0, %s71
    %s86 = sphi 0, %s72
    %s90 = sphi 0, %s90
    %s92 = sphi 0, %s90
    %s93 = sphi 0, %s92
    %s107 = sphi 0, %s93
    %s111 = sphi 0, %s111
    %s113 = sphi 0, %s111
    %s114 = sphi 0, %s113
    %s128 = sphi 0, %s114
    %s134 = sphi 0, %s136
    %s137 = sphi 0, %s134
    %s138 = sphi 0, %s137
    %s154 = sphi 0, %s138
    %s160 = sphi 0, %s162
    %s163 = sphi 0, %s160
    %s164 = sphi 0, %s163
    %s180 = sphi 0, %s164
    %s186 = sphi 0, %s188
    %s189 = sphi 0, %s186
    %s190 = sphi 0, %s189
    %s206 = sphi 0, %s190
  $region4: #{q_resblockbn_forward.5} parent=0 // loop_header_branch
    %17 = sbr.rel (%p15) target = $region8
  $region5: #{q_resblockbn_forward.5} parent=0 // loop_body
    %s19 = ssub.s32 %s14, 1
    %s20 = ssub.s32 %s14, 2
    %s21 = sadd.s32 %s14, 1
    %s22 = ssub.s32 %s14, %s21
    %p23 = scmp.eq.s32.totalorder %s22, 0
    %s25 = sadd.s32 %s24, 1
    %s26 = scalar_select %p23, %s24, %s25
    %p29 = pneg %p23
    %p30 = scmp.eq.s32.totalorder %s14, 1
    %p31 = por %p29, %p30
    %p32 = scmp.ne.s32.totalorder %s24, %s27
    %p33 = scmp.eq.s32.totalorder %s14, 0
    %p34 = por %p32, %p33
    %p35 = scmp.ne.s32.totalorder %s24, %s27
    %p36 = scmp.eq.s32.totalorder %s19, 1
    %p37 = por %p35, %p36
    %p38 = scmp.ne.s32.totalorder %s27, %s28
    %p39 = scmp.eq.s32.totalorder %s19, 0
    %p40 = por %p38, %p39
    %p41 = scmp.ne.s32.totalorder %s27, %s28
    %p42 = scmp.eq.s32.totalorder %s20, 1
    %p43 = por %p41, %p42
    %p45 = scmp.ne.s32.totalorder %s28, %s44
    %p46 = scmp.eq.s32.totalorder %s20, 0
    %p47 = por %p45, %p46
    %s49 = sadd.s32 %s48, 1
    %p52 = scmp.eq.s32.totalorder %s14, 1
    %p53 = scmp.ne.s32.totalorder %s48, %s50
    %p54 = scmp.eq.s32.totalorder %s14, 0
    %p55 = por %p53, %p54
    %p56 = scmp.ne.s32.totalorder %s48, %s50
    %p57 = scmp.eq.s32.totalorder %s19, 1
    %p58 = por %p56, %p57
    %p59 = scmp.ne.s32.totalorder %s50, %s51
    %p60 = scmp.eq.s32.totalorder %s19, 0
    %p61 = por %p59, %p60
    %p62 = scmp.ne.s32.totalorder %s50, %s51
    %p63 = scmp.eq.s32.totalorder %s20, 1
    %p64 = por %p62, %p63
    %p66 = scmp.ne.s32.totalorder %s51, %s65
    %p67 = scmp.eq.s32.totalorder %s20, 0
    %p68 = por %p66, %p67
    %s70 = sadd.s32 %s69, 1
    %p73 = scmp.eq.s32.totalorder %s14, 1
    %p74 = scmp.ne.s32.totalorder %s69, %s71
    %p75 = scmp.eq.s32.totalorder %s14, 0
    %p76 = por %p74, %p75
    %p77 = scmp.ne.s32.totalorder %s69, %s71
    %p78 = scmp.eq.s32.totalorder %s19, 1
    %p79 = por %p77, %p78
    %p80 = scmp.ne.s32.totalorder %s71, %s72
    %p81 = scmp.eq.s32.totalorder %s19, 0
    %p82 = por %p80, %p81
    %p83 = scmp.ne.s32.totalorder %s71, %s72
    %p84 = scmp.eq.s32.totalorder %s20, 1
    %p85 = por %p83, %p84
    %p87 = scmp.ne.s32.totalorder %s72, %s86
    %p88 = scmp.eq.s32.totalorder %s20, 0
    %p89 = por %p87, %p88
    %s91 = sadd.s32 %s90, 1
    %p94 = scmp.eq.s32.totalorder %s14, 1
    %p95 = scmp.ne.s32.totalorder %s90, %s92
    %p96 = scmp.eq.s32.totalorder %s14, 0
    %p97 = por %p95, %p96
    %p98 = scmp.ne.s32.totalorder %s90, %s92
    %p99 = scmp.eq.s32.totalorder %s19, 1
    %p100 = por %p98, %p99
    %p101 = scmp.ne.s32.totalorder %s92, %s93
    %p102 = scmp.eq.s32.totalorder %s19, 0
    %p103 = por %p101, %p102
    %p104 = scmp.ne.s32.totalorder %s92, %s93
    %p105 = scmp.eq.s32.totalorder %s20, 1
    %p106 = por %p104, %p105
    %p108 = scmp.ne.s32.totalorder %s93, %s107
    %p109 = scmp.eq.s32.totalorder %s20, 0
    %p110 = por %p108, %p109
    %s112 = sadd.s32 %s111, 1
    %p115 = scmp.eq.s32.totalorder %s14, 1
    %p116 = scmp.ne.s32.totalorder %s111, %s113
    %p117 = scmp.eq.s32.totalorder %s14, 0
    %p118 = por %p116, %p117
    %p119 = scmp.ne.s32.totalorder %s111, %s113
    %p120 = scmp.eq.s32.totalorder %s19, 1
    %p121 = por %p119, %p120
    %p122 = scmp.ne.s32.totalorder %s113, %s114
    %p123 = scmp.eq.s32.totalorder %s19, 0
    %p124 = por %p122, %p123
    %p125 = scmp.ne.s32.totalorder %s113, %s114
    %p126 = scmp.eq.s32.totalorder %s20, 1
    %p127 = por %p125, %p126
    %p129 = scmp.ne.s32.totalorder %s114, %s128
    %p130 = scmp.eq.s32.totalorder %s20, 0
    %p131 = por %p129, %p130
    %s132 = ssub.s32 %s14, %s21
    %p133 = scmp.eq.s32.totalorder %s132, 0
    %s135 = sadd.s32 %s134, 1
    %s136 = scalar_select %p133, %s134, %s135
    %p139 = pneg %p133
    %p140 = scmp.eq.s32.totalorder %s14, 1
    %p141 = por %p139, %p140
    %p142 = scmp.ne.s32.totalorder %s134, %s137
    %p143 = scmp.eq.s32.totalorder %s14, 0
    %p144 = por %p142, %p143
    %p145 = scmp.ne.s32.totalorder %s134, %s137
    %p146 = scmp.eq.s32.totalorder %s19, 1
    %p147 = por %p145, %p146
    %p148 = scmp.ne.s32.totalorder %s137, %s138
    %p149 = scmp.eq.s32.totalorder %s19, 0
    %p150 = por %p148, %p149
    %p151 = scmp.ne.s32.totalorder %s137, %s138
    %p152 = scmp.eq.s32.totalorder %s20, 1
    %p153 = por %p151, %p152
    %p155 = scmp.ne.s32.totalorder %s138, %s154
    %p156 = scmp.eq.s32.totalorder %s20, 0
    %p157 = por %p155, %p156
    %s158 = ssub.s32 %s14, %s21
    %p159 = scmp.eq.s32.totalorder %s158, 0
    %s161 = sadd.s32 %s160, 1
    %s162 = scalar_select %p159, %s160, %s161
    %p165 = pneg %p159
    %p166 = scmp.eq.s32.totalorder %s14, 1
    %p167 = por %p165, %p166
    %p168 = scmp.ne.s32.totalorder %s160, %s163
    %p169 = scmp.eq.s32.totalorder %s14, 0
    %p170 = por %p168, %p169
    %p171 = scmp.ne.s32.totalorder %s160, %s163
    %p172 = scmp.eq.s32.totalorder %s19, 1
    %p173 = por %p171, %p172
    %p174 = scmp.ne.s32.totalorder %s163, %s164
    %p175 = scmp.eq.s32.totalorder %s19, 0
    %p176 = por %p174, %p175
    %p177 = scmp.ne.s32.totalorder %s163, %s164
    %p178 = scmp.eq.s32.totalorder %s20, 1
    %p179 = por %p177, %p178
    %p181 = scmp.ne.s32.totalorder %s164, %s180
    %p182 = scmp.eq.s32.totalorder %s20, 0
    %p183 = por %p181, %p182
    %s184 = ssub.s32 %s14, %s21
    %p185 = scmp.eq.s32.totalorder %s184, 0
    %s187 = sadd.s32 %s186, 1
    %s188 = scalar_select %p185, %s186, %s187
    %p191 = pneg %p185
    %p192 = scmp.eq.s32.totalorder %s14, 1
    %p193 = por %p191, %p192
    %p194 = scmp.ne.s32.totalorder %s186, %s189
    %p195 = scmp.eq.s32.totalorder %s14, 0
    %p196 = por %p194, %p195
    %p197 = scmp.ne.s32.totalorder %s186, %s189
    %p198 = scmp.eq.s32.totalorder %s19, 1
    %p199 = por %p197, %p198
    %p200 = scmp.ne.s32.totalorder %s189, %s190
    %p201 = scmp.eq.s32.totalorder %s19, 0
    %p202 = por %p200, %p201
    %p203 = scmp.ne.s32.totalorder %s189, %s190
    %p204 = scmp.eq.s32.totalorder %s20, 1
    %p205 = por %p203, %p204
    %p207 = scmp.ne.s32.totalorder %s190, %s206
    %p208 = scmp.eq.s32.totalorder %s20, 0
    %p209 = por %p207, %p208
    %p210 = scmp.le.s32.totalorder 1, %s14
    %p211 = scmp.lt.s32.totalorder %s14, 3
    %p212 = pnand %p210, %p211
    %p213 = pneg %p212
    // Predicated region
    $region9: #{q_resblockbn_forward.5} parent=5 // pred_check
      _
    $region10: #{q_resblockbn_forward.5} parent=5 // pred_check_branch
      %215 = sbr.rel (%p212) target = $region12
    $region11: #{q_resblockbn_forward.5} parent=5 // pred_region
      %s216 = ssub.s32 %s14, 1
      // Predicated region
      $region13: #{q_resblockbn_forward.5} parent=11 // pred_check
        %p217 = pneg %p61
      $region14: #{q_resblockbn_forward.5} parent=11 // pred_check_branch
        %219 = sbr.rel (%p217) target = $region16
      $region15: #{q_resblockbn_forward.5} parent=11 // pred_region
        _
      $region16: #{q_resblockbn_forward.5} parent=11 // pred_fallthru
        _
      // Predicated region
      $region17: #{q_resblockbn_forward.5} parent=11 // pred_check
        %p220 = pneg %p82
      $region18: #{q_resblockbn_forward.5} parent=11 // pred_check_branch
        %222 = sbr.rel (%p220) target = $region20
      $region19: #{q_resblockbn_forward.5} parent=11 // pred_region
        _
      $region20: #{q_resblockbn_forward.5} parent=11 // pred_fallthru
        _
      // Predicated region
      $region21: #{q_resblockbn_forward.5} parent=11 // pred_check
        %p223 = pneg %p103
      $region22: #{q_resblockbn_forward.5} parent=11 // pred_check_branch
        %225 = sbr.rel (%p223) target = $region24
      $region23: #{q_resblockbn_forward.5} parent=11 // pred_region
        _
      $region24: #{q_resblockbn_forward.5} parent=11 // pred_fallthru
        _
      // Predicated region
      $region25: #{q_resblockbn_forward.5} parent=11 // pred_check
        %p226 = pneg %p124
      $region26: #{q_resblockbn_forward.5} parent=11 // pred_check_branch
        %228 = sbr.rel (%p226) target = $region28
      $region27: #{q_resblockbn_forward.5} parent=11 // pred_region
        _
      $region28: #{q_resblockbn_forward.5} parent=11 // pred_fallthru
        _
    $region12: #{q_resblockbn_forward.5} parent=5 // pred_fallthru
      _
    %p229 = scmp.lt.s32.totalorder %s14, 2
    // Predicated region
    $region29: #{q_resblockbn_forward.5} parent=5 // pred_check
      %p230 = pneg %p229
    $region30: #{q_resblockbn_forward.5} parent=5 // pred_check_branch
      %232 = sbr.rel (%p230) target = $region32
    $region31: #{q_resblockbn_forward.5} parent=5 // pred_region
      // Predicated region
      $region33: #{q_resblockbn_forward.5} parent=31 // pred_check
        %p233 = pneg %p34
      $region34: #{q_resblockbn_forward.5} parent=31 // pred_check_branch
        %235 = sbr.rel (%p233) target = $region36
      $region35: #{q_resblockbn_forward.5} parent=31 // pred_region
        %p236 = scmp.lt.s32.totalorder %s14, 1
        %s237 = scalar_select %p236, %s14, 1
        %s238 = smul.addr %s237, 2
        %s239 = smul.addr %s238, 4
        %s240 = scalar_lea.vmem %s0, %s239
      $region36: #{q_resblockbn_forward.5} parent=31 // pred_fallthru
        _
    $region32: #{q_resblockbn_forward.5} parent=5 // pred_fallthru
      _
    %p241 = scmp.le.s32.totalorder 1, %s14
    %p242 = scmp.lt.s32.totalorder %s14, 3
    %p243 = pnand %p241, %p242
    %p244 = pneg %p243
    // Predicated region
    $region37: #{q_resblockbn_forward.5} parent=5 // pred_check
      _
    $region38: #{q_resblockbn_forward.5} parent=5 // pred_check_branch
      %246 = sbr.rel (%p243) target = $region40
    $region39: #{q_resblockbn_forward.5} parent=5 // pred_region
      %s247 = ssub.s32 %s14, 1
      %p248 = scmp.lt.s32.totalorder %s19, 1
      %s249 = scalar_select %p248, %s19, 1
      %s250 = smul.addr %s249, 2
      %s251 = smul.addr %s250, 4
      %s252 = scalar_lea.vmem %s0, %s251
      %p253 = pneg %p40
      %p254 = pneg %p37
      %p255 = pneg %p61
      %p256 = pneg %p58
      %p257 = pneg %p82
      %p258 = pneg %p79
      %p259 = pneg %p103
      %p260 = pneg %p100
      %p261 = pneg %p124
      %p262 = pneg %p121
      %p263 = pneg %p150
      %p264 = pneg %p147
      %p265 = scmp.lt.s32.totalorder %s19, 1
      %s266 = scalar_select %p265, %s19, 1
      %s267 = smul.addr %s266, 2
      %s268 = smul.addr %s267, 4
      %s269 = scalar_lea.vmem %s5, %s268
      %p270 = pneg %p176
      %p271 = pneg %p173
      %p272 = scmp.lt.s32.totalorder %s19, 1
      %s273 = scalar_select %p272, %s19, 1
      %s274 = scalar_lea.vmem %s6, %s273
      %p275 = pneg %p202
      %p276 = pneg %p199
      %p277 = scmp.lt.s32.totalorder %s19, 1
      %s278 = scalar_select %p277, %s19, 1
      %s279 = scalar_lea.vmem %s7, %s278
      %p280 = scmp.lt.s32.totalorder %s19, 1
      %s281 = scalar_select %p280, %s19, 1
      %s282 = smul.addr %s281, 2
      %s283 = smul.addr %s282, 4
      %s284 = scalar_lea.vmem %s0, %s283
      %p285 = scmp.lt.s32.totalorder %s19, 1
      %s286 = scalar_select %p285, %s19, 1
      %s287 = smul.addr %s286, 2
      %s288 = smul.addr %s287, 4
      %s289 = scalar_lea.vmem %s5, %s288
      %p290 = scmp.lt.s32.totalorder %s19, 1
      %s291 = scalar_select %p290, %s19, 1
      %s292 = scalar_lea.vmem %s6, %s291
      %p293 = scmp.lt.s32.totalorder %s19, 1
      %s294 = scalar_select %p293, %s19, 1
      %s295 = scalar_lea.vmem %s7, %s294
      %v297 = vld [vmem:[%s1] sm:$0xf]
      %v298 = vld [vmem:[%s284] sm:$0xff]
      %300 = vset.pattern.permute.xlu0 0
      %301 = vperm.xlu0 %300, %v297
      %v302 = vpop.permute.xlu0 %301
      %v304 = vunpack.c.l.s4 839922192
      %v305 = vunpack.c.0.s8 %v304
      %v306 = vlaneseq
      %v307 = vshrl.u32 %v306, 7
      %v308 = vsub.s32 %v305, %v307
      %v309 = vrot.slane %v302, %v308
      %v311 = vmul.f32 %v298, %v309
      %v312 = vround.ne.pseudo %v311
      %313 = vset.pattern.permute.xlu0 1
      %314 = vperm.xlu0 %313, %v297
      %v315 = vpop.permute.xlu0 %314
      %v317 = vunpack.c.l.s4 839922192
      %v318 = vunpack.c.0.s8 %v317
      %v319 = vlaneseq
      %v320 = vshrl.u32 %v319, 7
      %v321 = vsub.s32 %v318, %v320
      %v322 = vrot.slane %v315, %v321
      %v324 = vmul.f32 %v312, %v322
      %v325 = vround.ne.pseudo %v324
      %v326 = vmax.f32 %v325, -128.0
      %v327 = vmin.f32 %v326, 127.0
      %vm328 = vcmask 139264
      %329 = vst.msk [vmem:[#allocation2] sm:$0x1] %vm328, 0.0
      %330 = vst.msk [vmem:[#allocation2 + $0x18] sm:$0x1] %vm328, 0.0
      %331 = vst.msk [vmem:[#allocation2 + $0x30] sm:$0x1] %vm328, 0.0
      %332 = vst.msk [vmem:[#allocation2 + $0x48] sm:$0x1] %vm328, 0.0
      %333 = vst.msk [vmem:[#allocation2 + $0x11] sm:$0x1] %vm328, 0.0
      %334 = vst.msk [vmem:[#allocation2 + $0x29] sm:$0x1] %vm328, 0.0
      %335 = vst.msk [vmem:[#allocation2 + $0x41] sm:$0x1] %vm328, 0.0
      %336 = vst.msk [vmem:[#allocation2 + $0x59] sm:$0x1] %vm328, 0.0
      %vm337 = vcmask 7168
      %338 = vst.msk [vmem:[#allocation2 + $0x1] sm:$0xff] %vm337, 0.0
      %339 = vst.msk [vmem:[#allocation2 + $0x9] sm:$0xff] %vm337, 0.0
      %340 = vst.msk [vmem:[#allocation2 + $0x19] sm:$0xff] %vm337, 0.0
      %341 = vst.msk [vmem:[#allocation2 + $0x21] sm:$0xff] %vm337, 0.0
      %342 = vst.msk [vmem:[#allocation2 + $0x31] sm:$0xff] %vm337, 0.0
      %343 = vst.msk [vmem:[#allocation2 + $0x39] sm:$0xff] %vm337, 0.0
      %344 = vst.msk [vmem:[#allocation2 + $0x49] sm:$0xff] %vm337, 0.0
      %345 = vst.msk [vmem:[#allocation2 + $0x51] sm:$0xff] %vm337, 0.0
      %vm346 = vcmask 146568
      %347 = vst.msk [vmem:[#allocation2 + $0x1] sm:$0xff] %vm346, 0.0
      %348 = vst.msk [vmem:[#allocation2 + $0x9] sm:$0xff] %vm346, 0.0
      %349 = vst.msk [vmem:[#allocation2 + $0x19] sm:$0xff] %vm346, 0.0
      %350 = vst.msk [vmem:[#allocation2 + $0x21] sm:$0xff] %vm346, 0.0
      %351 = vst.msk [vmem:[#allocation2 + $0x31] sm:$0xff] %vm346, 0.0
      %352 = vst.msk [vmem:[#allocation2 + $0x39] sm:$0xff] %vm346, 0.0
      %353 = vst.msk [vmem:[#allocation2 + $0x49] sm:$0xff] %vm346, 0.0
      %354 = vst.msk [vmem:[#allocation2 + $0x51] sm:$0xff] %vm346, 0.0
      %v356 = vrot.slane %v327, 4
      %358 = vrot.lane.b32.xlu0 %v327, 112
      %v359 = vpop.permute.xlu0 %358
      %v360 = vrot.slane %v359, 4
      %362 = vrot.lane.b32.xlu0 %v327, 96
      %v363 = vpop.permute.xlu0 %362
      %v364 = vrot.slane %v363, 4
      %366 = vrot.lane.b32.xlu0 %v327, 80
      %v367 = vpop.permute.xlu0 %366
      %v368 = vrot.slane %v367, 4
      %370 = vrot.lane.b32.xlu0 %v327, 64
      %v371 = vpop.permute.xlu0 %370
      %v372 = vrot.slane %v371, 4
      %374 = vrot.lane.b32.xlu0 %v327, 48
      %v375 = vpop.permute.xlu0 %374
      %v376 = vrot.slane %v375, 4
      %378 = vrot.lane.b32.xlu0 %v327, 32
      %v379 = vpop.permute.xlu0 %378
      %v380 = vrot.slane %v379, 4
      %382 = vrot.lane.b32.xlu0 %v327, 16
      %v383 = vpop.permute.xlu0 %382
      %v384 = vrot.slane %v383, 4
      %v393 = vcombine.low %v327, %v363
      %v395 = vunpack.c.l.s4 1983009808
      %v396 = vunpack.c.0.s8 %v395
      %v397 = vlaneseq
      %v398 = vshrl.u32 %v397, 7
      %v399 = vsub.s32 %v396, %v398
      %v400 = vrot.slane %v393, %v399
      %v401 = vcombine.low %v359, %v367
      %v403 = vunpack.c.l.s4 1983009808
      %v404 = vunpack.c.0.s8 %v403
      %v405 = vlaneseq
      %v406 = vshrl.u32 %v405, 7
      %v407 = vsub.s32 %v404, %v406
      %v408 = vrot.slane %v401, %v407
      %v409 = vcombine.low %v400, %v408
      %v410 = vcombine.high %v400, %v408
      %v412 = vunpack.c.l.s4 1934713408
      %v413 = vunpack.c.0.s8 %v412
      %v414 = vlaneseq
      %v415 = vshrl.u32 %v414, 7
      %v416 = vsub.s32 %v413, %v415
      %v417 = vrot.slane %v409, %v416
      %v419 = vunpack.c.l.s4 1934713408
      %v420 = vunpack.c.0.s8 %v419
      %v421 = vlaneseq
      %v422 = vshrl.u32 %v421, 7
      %v423 = vsub.s32 %v420, %v422
      %v424 = vrot.slane %v410, %v423
      %v425 = vcombine.high %v417, 0.0
      %v426 = vcombine.high %v424, 0.0
      %v427 = vcombine.low %v371, %v379
      %v429 = vunpack.c.l.s4 1983009808
      %v430 = vunpack.c.0.s8 %v429
      %v431 = vlaneseq
      %v432 = vshrl.u32 %v431, 7
      %v433 = vsub.s32 %v430, %v432
      %v434 = vrot.slane %v427, %v433
      %v435 = vcombine.low %v375, %v383
      %v437 = vunpack.c.l.s4 1983009808
      %v438 = vunpack.c.0.s8 %v437
      %v439 = vlaneseq
      %v440 = vshrl.u32 %v439, 7
      %v441 = vsub.s32 %v438, %v440
      %v442 = vrot.slane %v435, %v441
      %v443 = vcombine.low %v434, %v442
      %v444 = vcombine.high %v434, %v442
      %v446 = vunpack.c.l.s4 1934713408
      %v447 = vunpack.c.0.s8 %v446
      %v448 = vlaneseq
      %v449 = vshrl.u32 %v448, 7
      %v450 = vsub.s32 %v447, %v449
      %v451 = vrot.slane %v443, %v450
      %v453 = vunpack.c.l.s4 1934713408
      %v454 = vunpack.c.0.s8 %v453
      %v455 = vlaneseq
      %v456 = vshrl.u32 %v455, 7
      %v457 = vsub.s32 %v454, %v456
      %v458 = vrot.slane %v444, %v457
      %v459 = vcombine.high %v451, 0.0
      %v460 = vcombine.high %v458, 0.0
      %v461 = vcombine.low %v356, %v364
      %v463 = vunpack.c.l.s4 1983009808
      %v464 = vunpack.c.0.s8 %v463
      %v465 = vlaneseq
      %v466 = vshrl.u32 %v465, 7
      %v467 = vsub.s32 %v464, %v466
      %v468 = vrot.slane %v461, %v467
      %v469 = vcombine.low %v360, %v368
      %v471 = vunpack.c.l.s4 1983009808
      %v472 = vunpack.c.0.s8 %v471
      %v473 = vlaneseq
      %v474 = vshrl.u32 %v473, 7
      %v475 = vsub.s32 %v472, %v474
      %v476 = vrot.slane %v469, %v475
      %v477 = vcombine.low %v468, %v476
      %v478 = vcombine.high %v468, %v476
      %v480 = vunpack.c.l.s4 1934713408
      %v481 = vunpack.c.0.s8 %v480
      %v482 = vlaneseq
      %v483 = vshrl.u32 %v482, 7
      %v484 = vsub.s32 %v481, %v483
      %v485 = vrot.slane %v477, %v484
      %v487 = vunpack.c.l.s4 1934713408
      %v488 = vunpack.c.0.s8 %v487
      %v489 = vlaneseq
      %v490 = vshrl.u32 %v489, 7
      %v491 = vsub.s32 %v488, %v490
      %v492 = vrot.slane %v478, %v491
      %v493 = vcombine.high %v485, 0.0
      %v494 = vcombine.high %v492, 0.0
      %v495 = vcombine.low %v372, %v380
      %v497 = vunpack.c.l.s4 1983009808
      %v498 = vunpack.c.0.s8 %v497
      %v499 = vlaneseq
      %v500 = vshrl.u32 %v499, 7
      %v501 = vsub.s32 %v498, %v500
      %v502 = vrot.slane %v495, %v501
      %v503 = vcombine.low %v376, %v384
      %v505 = vunpack.c.l.s4 1983009808
      %v506 = vunpack.c.0.s8 %v505
      %v507 = vlaneseq
      %v508 = vshrl.u32 %v507, 7
      %v509 = vsub.s32 %v506, %v508
      %v510 = vrot.slane %v503, %v509
      %v511 = vcombine.low %v502, %v510
      %v512 = vcombine.high %v502, %v510
      %v514 = vunpack.c.l.s4 1934713408
      %v515 = vunpack.c.0.s8 %v514
      %v516 = vlaneseq
      %v517 = vshrl.u32 %v516, 7
      %v518 = vsub.s32 %v515, %v517
      %v519 = vrot.slane %v511, %v518
      %v521 = vunpack.c.l.s4 1934713408
      %v522 = vunpack.c.0.s8 %v521
      %v523 = vlaneseq
      %v524 = vshrl.u32 %v523, 7
      %v525 = vsub.s32 %v522, %v524
      %v526 = vrot.slane %v512, %v525
      %v527 = vcombine.high %v519, 0.0
      %v528 = vcombine.high %v526, 0.0
      %v545 = vcombine.low %v417, %v451
      %v546 = vcombine.low %v485, %v519
      %v547 = vcombine.low %v425, %v459
      %v548 = vcombine.low %v493, %v527
      %v549 = vcombine.low %v424, %v458
      %v550 = vcombine.low %v492, %v526
      %v551 = vcombine.low %v426, %v460
      %v552 = vcombine.low %v494, %v528
      %553 = vrot.lane.b32.xlu0 %v545, 1
      %v554 = vpop.permute.xlu0 %553
      %555 = vrot.lane.b32.xlu0 %v546, 1
      %v556 = vpop.permute.xlu0 %555
      %557 = vrot.lane.b32.xlu0 %v547, 1
      %v558 = vpop.permute.xlu0 %557
      %559 = vrot.lane.b32.xlu0 %v548, 1
      %v560 = vpop.permute.xlu0 %559
      %561 = vrot.lane.b32.xlu0 %v549, 1
      %v562 = vpop.permute.xlu0 %561
      %563 = vrot.lane.b32.xlu0 %v550, 1
      %v564 = vpop.permute.xlu0 %563
      %565 = vrot.lane.b32.xlu0 %v551, 1
      %v566 = vpop.permute.xlu0 %565
      %567 = vrot.lane.b32.xlu0 %v552, 1
      %v568 = vpop.permute.xlu0 %567
      %vm577 = vcmask 138248
      %578 = vst.msk [vmem:[#allocation2 + $0x1] sm:$0xff] %vm577, %v554
      %579 = vst.msk [vmem:[#allocation2 + $0x9] sm:$0xff] %vm577, %v556
      %580 = vst.msk [vmem:[#allocation2 + $0x19] sm:$0xff] %vm577, %v558
      %581 = vst.msk [vmem:[#allocation2 + $0x21] sm:$0xff] %vm577, %v560
      %582 = vst.msk [vmem:[#allocation2 + $0x31] sm:$0xff] %vm577, %v562
      %583 = vst.msk [vmem:[#allocation2 + $0x39] sm:$0xff] %vm577, %v564
      %584 = vst.msk [vmem:[#allocation2 + $0x49] sm:$0xff] %vm577, %v566
      %585 = vst.msk [vmem:[#allocation2 + $0x51] sm:$0xff] %vm577, %v568
      %v586 = vld [vmem:[#allocation2] sm:$0xff]
      %v587 = vld [vmem:[#allocation2 + $0x8] sm:$0xff]
      %v588 = vld [vmem:[#allocation2 + $0x18] sm:$0xff]
      %v589 = vld [vmem:[#allocation2 + $0x20] sm:$0xff]
      %v590 = vld [vmem:[#allocation2 + $0x30] sm:$0xff]
      %v591 = vld [vmem:[#allocation2 + $0x38] sm:$0xff]
      %v592 = vld [vmem:[#allocation2 + $0x48] sm:$0xff]
      %v593 = vld [vmem:[#allocation2 + $0x50] sm:$0xff]
      %v594 = vcombine.low %v586, %v590
      %v595 = vcombine.high %v586, %v590
      %v597 = vunpack.c.l.s4 1983009808
      %v598 = vunpack.c.0.s8 %v597
      %v599 = vlaneseq
      %v600 = vshrl.u32 %v599, 7
      %v601 = vsub.s32 %v598, %v600
      %v602 = vrot.slane %v594, %v601
      %v604 = vunpack.c.l.s4 1983009808
      %v605 = vunpack.c.0.s8 %v604
      %v606 = vlaneseq
      %v607 = vshrl.u32 %v606, 7
      %v608 = vsub.s32 %v605, %v607
      %v609 = vrot.slane %v595, %v608
      %v610 = vcombine.low %v588, %v592
      %v611 = vcombine.high %v588, %v592
      %v613 = vunpack.c.l.s4 1983009808
      %v614 = vunpack.c.0.s8 %v613
      %v615 = vlaneseq
      %v616 = vshrl.u32 %v615, 7
      %v617 = vsub.s32 %v614, %v616
      %v618 = vrot.slane %v610, %v617
      %v620 = vunpack.c.l.s4 1983009808
      %v621 = vunpack.c.0.s8 %v620
      %v622 = vlaneseq
      %v623 = vshrl.u32 %v622, 7
      %v624 = vsub.s32 %v621, %v623
      %v625 = vrot.slane %v611, %v624
      %v626 = vcombine.low %v602, %v618
      %v627 = vcombine.high %v602, %v618
      %v629 = vunpack.c.l.s4 1934713408
      %v630 = vunpack.c.0.s8 %v629
      %v631 = vlaneseq
      %v632 = vshrl.u32 %v631, 7
      %v633 = vsub.s32 %v630, %v632
      %v634 = vrot.slane %v626, %v633
      %v636 = vunpack.c.l.s4 1934713408
      %v637 = vunpack.c.0.s8 %v636
      %v638 = vlaneseq
      %v639 = vshrl.u32 %v638, 7
      %v640 = vsub.s32 %v637, %v639
      %v641 = vrot.slane %v627, %v640
      %v642 = vcombine.low %v609, %v625
      %v643 = vcombine.high %v609, %v625
      %v645 = vunpack.c.l.s4 1934713408
      %v646 = vunpack.c.0.s8 %v645
      %v647 = vlaneseq
      %v648 = vshrl.u32 %v647, 7
      %v649 = vsub.s32 %v646, %v648
      %v650 = vrot.slane %v642, %v649
      %v652 = vunpack.c.l.s4 1934713408
      %v653 = vunpack.c.0.s8 %v652
      %v654 = vlaneseq
      %v655 = vshrl.u32 %v654, 7
      %v656 = vsub.s32 %v653, %v655
      %v657 = vrot.slane %v643, %v656
      %v658 = vcombine.high %v634, 0.0
      %v659 = vcombine.high %v641, 0.0
      %v660 = vcombine.high %v650, 0.0
      %v661 = vcombine.high %v657, 0.0
      %v662 = vcombine.low %v587, %v591
      %v663 = vcombine.high %v587, %v591
      %v665 = vunpack.c.l.s4 1983009808
      %v666 = vunpack.c.0.s8 %v665
      %v667 = vlaneseq
      %v668 = vshrl.u32 %v667, 7
      %v669 = vsub.s32 %v666, %v668
      %v670 = vrot.slane %v662, %v669
      %v672 = vunpack.c.l.s4 1983009808
      %v673 = vunpack.c.0.s8 %v672
      %v674 = vlaneseq
      %v675 = vshrl.u32 %v674, 7
      %v676 = vsub.s32 %v673, %v675
      %v677 = vrot.slane %v663, %v676
      %v678 = vcombine.low %v589, %v593
      %v679 = vcombine.high %v589, %v593
      %v681 = vunpack.c.l.s4 1983009808
      %v682 = vunpack.c.0.s8 %v681
      %v683 = vlaneseq
      %v684 = vshrl.u32 %v683, 7
      %v685 = vsub.s32 %v682, %v684
      %v686 = vrot.slane %v678, %v685
      %v688 = vunpack.c.l.s4 1983009808
      %v689 = vunpack.c.0.s8 %v688
      %v690 = vlaneseq
      %v691 = vshrl.u32 %v690, 7
      %v692 = vsub.s32 %v689, %v691
      %v693 = vrot.slane %v679, %v692
      %v694 = vcombine.low %v670, %v686
      %v695 = vcombine.high %v670, %v686
      %v697 = vunpack.c.l.s4 1934713408
      %v698 = vunpack.c.0.s8 %v697
      %v699 = vlaneseq
      %v700 = vshrl.u32 %v699, 7
      %v701 = vsub.s32 %v698, %v700
      %v702 = vrot.slane %v694, %v701
      %v704 = vunpack.c.l.s4 1934713408
      %v705 = vunpack.c.0.s8 %v704
      %v706 = vlaneseq
      %v707 = vshrl.u32 %v706, 7
      %v708 = vsub.s32 %v705, %v707
      %v709 = vrot.slane %v695, %v708
      %v710 = vcombine.low %v677, %v693
      %v711 = vcombine.high %v677, %v693
      %v713 = vunpack.c.l.s4 1934713408
      %v714 = vunpack.c.0.s8 %v713
      %v715 = vlaneseq
      %v716 = vshrl.u32 %v715, 7
      %v717 = vsub.s32 %v714, %v716
      %v718 = vrot.slane %v710, %v717
      %v720 = vunpack.c.l.s4 1934713408
      %v721 = vunpack.c.0.s8 %v720
      %v722 = vlaneseq
      %v723 = vshrl.u32 %v722, 7
      %v724 = vsub.s32 %v721, %v723
      %v725 = vrot.slane %v711, %v724
      %v726 = vcombine.high %v702, 0.0
      %v727 = vcombine.high %v709, 0.0
      %v728 = vcombine.high %v718, 0.0
      %v729 = vcombine.high %v725, 0.0
      %731 = vrot.lane.b32.xlu0 %v658, 16
      %v732 = vpop.permute.xlu0 %731
      %735 = vrot.lane.b32.xlu0 %v641, 32
      %v736 = vpop.permute.xlu0 %735
      %739 = vrot.lane.b32.xlu0 %v659, 48
      %v740 = vpop.permute.xlu0 %739
      %743 = vrot.lane.b32.xlu0 %v650, 64
      %v744 = vpop.permute.xlu0 %743
      %747 = vrot.lane.b32.xlu0 %v660, 80
      %v748 = vpop.permute.xlu0 %747
      %751 = vrot.lane.b32.xlu0 %v657, 96
      %v752 = vpop.permute.xlu0 %751
      %755 = vrot.lane.b32.xlu0 %v661, 112
      %v756 = vpop.permute.xlu0 %755
      %759 = vrot.lane.b32.xlu0 %v726, 16
      %v760 = vpop.permute.xlu0 %759
      %763 = vrot.lane.b32.xlu0 %v709, 32
      %v764 = vpop.permute.xlu0 %763
      %767 = vrot.lane.b32.xlu0 %v727, 48
      %v768 = vpop.permute.xlu0 %767
      %771 = vrot.lane.b32.xlu0 %v718, 64
      %v772 = vpop.permute.xlu0 %771
      %775 = vrot.lane.b32.xlu0 %v728, 80
      %v776 = vpop.permute.xlu0 %775
      %779 = vrot.lane.b32.xlu0 %v725, 96
      %v780 = vpop.permute.xlu0 %779
      %783 = vrot.lane.b32.xlu0 %v729, 112
      %v784 = vpop.permute.xlu0 %783
      %vm786 = vcmask 130048
      %v787 = vsel %vm786, %v634, %v732
      %vm788 = vcmask 261120
      %v789 = vsel %vm788, %v787, %v736
      %vm790 = vcmask 392192
      %v791 = vsel %vm790, %v789, %v740
      %vm792 = vcmask 523264
      %v793 = vsel %vm792, %v791, %v744
      %vm794 = vcmask 654336
      %v795 = vsel %vm794, %v793, %v748
      %vm796 = vcmask 785408
      %v797 = vsel %vm796, %v795, %v752
      %vm798 = vcmask 916480
      %v799 = vsel %vm798, %v797, %v756
      %v800 = vsel %vm786, %v702, %v760
      %v801 = vsel %vm788, %v800, %v764
      %v802 = vsel %vm790, %v801, %v768
      %v803 = vsel %vm792, %v802, %v772
      %v804 = vsel %vm794, %v803, %v776
      %v805 = vsel %vm796, %v804, %v780
      %v806 = vsel %vm798, %v805, %v784
      %807 = vst [vmem:[#allocation3] sm:$0xf] %v799
      %808 = vst [vmem:[#allocation3 + $0x8] sm:$0xf] %v806
      %v809 = vld [vmem:[#allocation2] sm:$0xff]
      %v810 = vld [vmem:[#allocation2 + $0x8] sm:$0xff]
      %v811 = vld [vmem:[#allocation2 + $0x18] sm:$0xff]
      %v812 = vld [vmem:[#allocation2 + $0x20] sm:$0xff]
      %v813 = vld [vmem:[#allocation2 + $0x30] sm:$0xff]
      %v814 = vld [vmem:[#allocation2 + $0x38] sm:$0xff]
      %v815 = vld [vmem:[#allocation2 + $0x48] sm:$0xff]
      %v816 = vld [vmem:[#allocation2 + $0x50] sm:$0xff]
      %825 = vrot.lane.b32.xlu0 %v809, 127
      %v826 = vpop.permute.xlu0 %825
      %827 = vrot.lane.b32.xlu0 %v810, 127
      %v828 = vpop.permute.xlu0 %827
      %829 = vrot.lane.b32.xlu0 %v811, 127
      %v830 = vpop.permute.xlu0 %829
      %831 = vrot.lane.b32.xlu0 %v812, 127
      %v832 = vpop.permute.xlu0 %831
      %833 = vrot.lane.b32.xlu0 %v813, 127
      %v834 = vpop.permute.xlu0 %833
      %835 = vrot.lane.b32.xlu0 %v814, 127
      %v836 = vpop.permute.xlu0 %835
      %837 = vrot.lane.b32.xlu0 %v815, 127
      %v838 = vpop.permute.xlu0 %837
      %839 = vrot.lane.b32.xlu0 %v816, 127
      %v840 = vpop.permute.xlu0 %839
      %v849 = vcombine.low %v826, %v834
      %v850 = vcombine.high %v826, %v834
      %v852 = vunpack.c.l.s4 1983009808
      %v853 = vunpack.c.0.s8 %v852
      %v854 = vlaneseq
      %v855 = vshrl.u32 %v854, 7
      %v856 = vsub.s32 %v853, %v855
      %v857 = vrot.slane %v849, %v856
      %v859 = vunpack.c.l.s4 1983009808
      %v860 = vunpack.c.0.s8 %v859
      %v861 = vlaneseq
      %v862 = vshrl.u32 %v861, 7
      %v863 = vsub.s32 %v860, %v862
      %v864 = vrot.slane %v850, %v863
      %v865 = vcombine.low %v830, %v838
      %v866 = vcombine.high %v830, %v838
      %v868 = vunpack.c.l.s4 1983009808
      %v869 = vunpack.c.0.s8 %v868
      %v870 = vlaneseq
      %v871 = vshrl.u32 %v870, 7
      %v872 = vsub.s32 %v869, %v871
      %v873 = vrot.slane %v865, %v872
      %v875 = vunpack.c.l.s4 1983009808
      %v876 = vunpack.c.0.s8 %v875
      %v877 = vlaneseq
      %v878 = vshrl.u32 %v877, 7
      %v879 = vsub.s32 %v876, %v878
      %v880 = vrot.slane %v866, %v879
      %v881 = vcombine.low %v857, %v873
      %v882 = vcombine.high %v857, %v873
      %v884 = vunpack.c.l.s4 1934713408
      %v885 = vunpack.c.0.s8 %v884
      %v886 = vlaneseq
      %v887 = vshrl.u32 %v886, 7
      %v888 = vsub.s32 %v885, %v887
      %v889 = vrot.slane %v881, %v888
      %v891 = vunpack.c.l.s4 1934713408
      %v892 = vunpack.c.0.s8 %v891
      %v893 = vlaneseq
      %v894 = vshrl.u32 %v893, 7
      %v895 = vsub.s32 %v892, %v894
      %v896 = vrot.slane %v882, %v895
      %v897 = vcombine.low %v864, %v880
      %v898 = vcombine.high %v864, %v880
      %v900 = vunpack.c.l.s4 1934713408
      %v901 = vunpack.c.0.s8 %v900
      %v902 = vlaneseq
      %v903 = vshrl.u32 %v902, 7
      %v904 = vsub.s32 %v901, %v903
      %v905 = vrot.slane %v897, %v904
      %v907 = vunpack.c.l.s4 1934713408
      %v908 = vunpack.c.0.s8 %v907
      %v909 = vlaneseq
      %v910 = vshrl.u32 %v909, 7
      %v911 = vsub.s32 %v908, %v910
      %v912 = vrot.slane %v898, %v911
      %v913 = vcombine.high %v889, 0.0
      %v914 = vcombine.high %v896, 0.0
      %v915 = vcombine.high %v905, 0.0
      %v916 = vcombine.high %v912, 0.0
      %v917 = vcombine.low %v828, %v836
      %v918 = vcombine.high %v828, %v836
      %v920 = vunpack.c.l.s4 1983009808
      %v921 = vunpack.c.0.s8 %v920
      %v922 = vlaneseq
      %v923 = vshrl.u32 %v922, 7
      %v924 = vsub.s32 %v921, %v923
      %v925 = vrot.slane %v917, %v924
      %v927 = vunpack.c.l.s4 1983009808
      %v928 = vunpack.c.0.s8 %v927
      %v929 = vlaneseq
      %v930 = vshrl.u32 %v929, 7
      %v931 = vsub.s32 %v928, %v930
      %v932 = vrot.slane %v918, %v931
      %v933 = vcombine.low %v832, %v840
      %v934 = vcombine.high %v832, %v840
      %v936 = vunpack.c.l.s4 1983009808
      %v937 = vunpack.c.0.s8 %v936
      %v938 = vlaneseq
      %v939 = vshrl.u32 %v938, 7
      %v940 = vsub.s32 %v937, %v939
      %v941 = vrot.slane %v933, %v940
      %v943 = vunpack.c.l.s4 1983009808
      %v944 = vunpack.c.0.s8 %v943
      %v945 = vlaneseq
      %v946 = vshrl.u32 %v945, 7
      %v947 = vsub.s32 %v944, %v946
      %v948 = vrot.slane %v934, %v947
      %v949 = vcombine.low %v925, %v941
      %v950 = vcombine.high %v925, %v941
      %v952 = vunpack.c.l.s4 1934713408
      %v953 = vunpack.c.0.s8 %v952
      %v954 = vlaneseq
      %v955 = vshrl.u32 %v954, 7
      %v956 = vsub.s32 %v953, %v955
      %v957 = vrot.slane %v949, %v956
      %v959 = vunpack.c.l.s4 1934713408
      %v960 = vunpack.c.0.s8 %v959
      %v961 = vlaneseq
      %v962 = vshrl.u32 %v961, 7
      %v963 = vsub.s32 %v960, %v962
      %v964 = vrot.slane %v950, %v963
      %v965 = vcombine.low %v932, %v948
      %v966 = vcombine.high %v932, %v948
      %v968 = vunpack.c.l.s4 1934713408
      %v969 = vunpack.c.0.s8 %v968
      %v970 = vlaneseq
      %v971 = vshrl.u32 %v970, 7
      %v972 = vsub.s32 %v969, %v971
      %v973 = vrot.slane %v965, %v972
      %v975 = vunpack.c.l.s4 1934713408
      %v976 = vunpack.c.0.s8 %v975
      %v977 = vlaneseq
      %v978 = vshrl.u32 %v977, 7
      %v979 = vsub.s32 %v976, %v978
      %v980 = vrot.slane %v966, %v979
      %v981 = vcombine.high %v957, 0.0
      %v982 = vcombine.high %v964, 0.0
      %v983 = vcombine.high %v973, 0.0
      %v984 = vcombine.high %v980, 0.0
      %986 = vrot.lane.b32.xlu0 %v913, 16
      %v987 = vpop.permute.xlu0 %986
      %990 = vrot.lane.b32.xlu0 %v896, 32
      %v991 = vpop.permute.xlu0 %990
      %994 = vrot.lane.b32.xlu0 %v914, 48
      %v995 = vpop.permute.xlu0 %994
      %998 = vrot.lane.b32.xlu0 %v905, 64
      %v999 = vpop.permute.xlu0 %998
      %1002 = vrot.lane.b32.xlu0 %v915, 80
      %v1003 = vpop.permute.xlu0 %1002
      %1006 = vrot.lane.b32.xlu0 %v912, 96
      %v1007 = vpop.permute.xlu0 %1006
      %1010 = vrot.lane.b32.xlu0 %v916, 112
      %v1011 = vpop.permute.xlu0 %1010
      %1014 = vrot.lane.b32.xlu0 %v981, 16
      %v1015 = vpop.permute.xlu0 %1014
      %1018 = vrot.lane.b32.xlu0 %v964, 32
      %v1019 = vpop.permute.xlu0 %1018
      %1022 = vrot.lane.b32.xlu0 %v982, 48
      %v1023 = vpop.permute.xlu0 %1022
      %1026 = vrot.lane.b32.xlu0 %v973, 64
      %v1027 = vpop.permute.xlu0 %1026
      %1030 = vrot.lane.b32.xlu0 %v983, 80
      %v1031 = vpop.permute.xlu0 %1030
      %1034 = vrot.lane.b32.xlu0 %v980, 96
      %v1035 = vpop.permute.xlu0 %1034
      %1038 = vrot.lane.b32.xlu0 %v984, 112
      %v1039 = vpop.permute.xlu0 %1038
      %v1041 = vsel %vm786, %v889, %v987
      %v1042 = vsel %vm788, %v1041, %v991
      %v1043 = vsel %vm790, %v1042, %v995
      %v1044 = vsel %vm792, %v1043, %v999
      %v1045 = vsel %vm794, %v1044, %v1003
      %v1046 = vsel %vm796, %v1045, %v1007
      %v1047 = vsel %vm798, %v1046, %v1011
      %v1048 = vsel %vm786, %v957, %v1015
      %v1049 = vsel %vm788, %v1048, %v1019
      %v1050 = vsel %vm790, %v1049, %v1023
      %v1051 = vsel %vm792, %v1050, %v1027
      %v1052 = vsel %vm794, %v1051, %v1031
      %v1053 = vsel %vm796, %v1052, %v1035
      %v1054 = vsel %vm798, %v1053, %v1039
      %v1057 = vrot.slane %v1047, 4
      %v1058 = vrot.slane %v1054, 4
      %1061 = vst [vmem:[#allocation3] sm:$0xf0] %v1057
      %1062 = vst [vmem:[#allocation3 + $0x8] sm:$0xf0] %v1058
      %v1063 = vld [vmem:[#allocation2] sm:$0xff]
      %v1064 = vld [vmem:[#allocation2 + $0x8] sm:$0xff]
      %v1065 = vld [vmem:[#allocation2 + $0x18] sm:$0xff]
      %v1066 = vld [vmem:[#allocation2 + $0x20] sm:$0xff]
      %v1067 = vld [vmem:[#allocation2 + $0x30] sm:$0xff]
      %v1068 = vld [vmem:[#allocation2 + $0x38] sm:$0xff]
      %v1069 = vld [vmem:[#allocation2 + $0x48] sm:$0xff]
      %v1070 = vld [vmem:[#allocation2 + $0x50] sm:$0xff]
      %1079 = vrot.lane.b32.xlu0 %v1063, 126
      %v1080 = vpop.permute.xlu0 %1079
      %1081 = vrot.lane.b32.xlu0 %v1064, 126
      %v1082 = vpop.permute.xlu0 %1081
      %1083 = vrot.lane.b32.xlu0 %v1065, 126
      %v1084 = vpop.permute.xlu0 %1083
      %1085 = vrot.lane.b32.xlu0 %v1066, 126
      %v1086 = vpop.permute.xlu0 %1085
      %1087 = vrot.lane.b32.xlu0 %v1067, 126
      %v1088 = vpop.permute.xlu0 %1087
      %1089 = vrot.lane.b32.xlu0 %v1068, 126
      %v1090 = vpop.permute.xlu0 %1089
      %1091 = vrot.lane.b32.xlu0 %v1069, 126
      %v1092 = vpop.permute.xlu0 %1091
      %1093 = vrot.lane.b32.xlu0 %v1070, 126
      %v1094 = vpop.permute.xlu0 %1093
      %v1103 = vcombine.low %v1080, %v1088
      %v1104 = vcombine.high %v1080, %v1088
      %v1106 = vunpack.c.l.s4 1983009808
      %v1107 = vunpack.c.0.s8 %v1106
      %v1108 = vlaneseq
      %v1109 = vshrl.u32 %v1108, 7
      %v1110 = vsub.s32 %v1107, %v1109
      %v1111 = vrot.slane %v1103, %v1110
      %v1113 = vunpack.c.l.s4 1983009808
      %v1114 = vunpack.c.0.s8 %v1113
      %v1115 = vlaneseq
      %v1116 = vshrl.u32 %v1115, 7
      %v1117 = vsub.s32 %v1114, %v1116
      %v1118 = vrot.slane %v1104, %v1117
      %v1119 = vcombine.low %v1084, %v1092
      %v1120 = vcombine.high %v1084, %v1092
      %v1122 = vunpack.c.l.s4 1983009808
      %v1123 = vunpack.c.0.s8 %v1122
      %v1124 = vlaneseq
      %v1125 = vshrl.u32 %v1124, 7
      %v1126 = vsub.s32 %v1123, %v1125
      %v1127 = vrot.slane %v1119, %v1126
      %v1129 = vunpack.c.l.s4 1983009808
      %v1130 = vunpack.c.0.s8 %v1129
      %v1131 = vlaneseq
      %v1132 = vshrl.u32 %v1131, 7
      %v1133 = vsub.s32 %v1130, %v1132
      %v1134 = vrot.slane %v1120, %v1133
      %v1135 = vcombine.low %v1111, %v1127
      %v1136 = vcombine.high %v1111, %v1127
      %v1138 = vunpack.c.l.s4 1934713408
      %v1139 = vunpack.c.0.s8 %v1138
      %v1140 = vlaneseq
      %v1141 = vshrl.u32 %v1140, 7
      %v1142 = vsub.s32 %v1139, %v1141
      %v1143 = vrot.slane %v1135, %v1142
      %v1145 = vunpack.c.l.s4 1934713408
      %v1146 = vunpack.c.0.s8 %v1145
      %v1147 = vlaneseq
      %v1148 = vshrl.u32 %v1147, 7
      %v1149 = vsub.s32 %v1146, %v1148
      %v1150 = vrot.slane %v1136, %v1149
      %v1151 = vcombine.low %v1118, %v1134
      %v1152 = vcombine.high %v1118, %v1134
      %v1154 = vunpack.c.l.s4 1934713408
      %v1155 = vunpack.c.0.s8 %v1154
      %v1156 = vlaneseq
      %v1157 = vshrl.u32 %v1156, 7
      %v1158 = vsub.s32 %v1155, %v1157
      %v1159 = vrot.slane %v1151, %v1158
      %v1161 = vunpack.c.l.s4 1934713408
      %v1162 = vunpack.c.0.s8 %v1161
      %v1163 = vlaneseq
      %v1164 = vshrl.u32 %v1163, 7
      %v1165 = vsub.s32 %v1162, %v1164
      %v1166 = vrot.slane %v1152, %v1165
      %v1167 = vcombine.high %v1143, 0.0
      %v1168 = vcombine.high %v1150, 0.0
      %v1169 = vcombine.high %v1159, 0.0
      %v1170 = vcombine.high %v1166, 0.0
      %v1171 = vcombine.low %v1082, %v1090
      %v1172 = vcombine.high %v1082, %v1090
      %v1174 = vunpack.c.l.s4 1983009808
      %v1175 = vunpack.c.0.s8 %v1174
      %v1176 = vlaneseq
      %v1177 = vshrl.u32 %v1176, 7
      %v1178 = vsub.s32 %v1175, %v1177
      %v1179 = vrot.slane %v1171, %v1178
      %v1181 = vunpack.c.l.s4 1983009808
      %v1182 = vunpack.c.0.s8 %v1181
      %v1183 = vlaneseq
      %v1184 = vshrl.u32 %v1183, 7
      %v1185 = vsub.s32 %v1182, %v1184
      %v1186 = vrot.slane %v1172, %v1185
      %v1187 = vcombine.low %v1086, %v1094
      %v1188 = vcombine.high %v1086, %v1094
      %v1190 = vunpack.c.l.s4 1983009808
      %v1191 = vunpack.c.0.s8 %v1190
      %v1192 = vlaneseq
      %v1193 = vshrl.u32 %v1192, 7
      %v1194 = vsub.s32 %v1191, %v1193
      %v1195 = vrot.slane %v1187, %v1194
      %v1197 = vunpack.c.l.s4 1983009808
      %v1198 = vunpack.c.0.s8 %v1197
      %v1199 = vlaneseq
      %v1200 = vshrl.u32 %v1199, 7
      %v1201 = vsub.s32 %v1198, %v1200
      %v1202 = vrot.slane %v1188, %v1201
      %v1203 = vcombine.low %v1179, %v1195
      %v1204 = vcombine.high %v1179, %v1195
      %v1206 = vunpack.c.l.s4 1934713408
      %v1207 = vunpack.c.0.s8 %v1206
      %v1208 = vlaneseq
      %v1209 = vshrl.u32 %v1208, 7
      %v1210 = vsub.s32 %v1207, %v1209
      %v1211 = vrot.slane %v1203, %v1210
      %v1213 = vunpack.c.l.s4 1934713408
      %v1214 = vunpack.c.0.s8 %v1213
      %v1215 = vlaneseq
      %v1216 = vshrl.u32 %v1215, 7
      %v1217 = vsub.s32 %v1214, %v1216
      %v1218 = vrot.slane %v1204, %v1217
      %v1219 = vcombine.low %v1186, %v1202
      %v1220 = vcombine.high %v1186, %v1202
      %v1222 = vunpack.c.l.s4 1934713408
      %v1223 = vunpack.c.0.s8 %v1222
      %v1224 = vlaneseq
      %v1225 = vshrl.u32 %v1224, 7
      %v1226 = vsub.s32 %v1223, %v1225
      %v1227 = vrot.slane %v1219, %v1226
      %v1229 = vunpack.c.l.s4 1934713408
      %v1230 = vunpack.c.0.s8 %v1229
      %v1231 = vlaneseq
      %v1232 = vshrl.u32 %v1231, 7
      %v1233 = vsub.s32 %v1230, %v1232
      %v1234 = vrot.slane %v1220, %v1233
      %v1235 = vcombine.high %v1211, 0.0
      %v1236 = vcombine.high %v1218, 0.0
      %v1237 = vcombine.high %v1227, 0.0
      %v1238 = vcombine.high %v1234, 0.0
      %1240 = vrot.lane.b32.xlu0 %v1167, 16
      %v1241 = vpop.permute.xlu0 %1240
      %1244 = vrot.lane.b32.xlu0 %v1150, 32
      %v1245 = vpop.permute.xlu0 %1244
      %1248 = vrot.lane.b32.xlu0 %v1168, 48
      %v1249 = vpop.permute.xlu0 %1248
      %1252 = vrot.lane.b32.xlu0 %v1159, 64
      %v1253 = vpop.permute.xlu0 %1252
      %1256 = vrot.lane.b32.xlu0 %v1169, 80
      %v1257 = vpop.permute.xlu0 %1256
      %1260 = vrot.lane.b32.xlu0 %v1166, 96
      %v1261 = vpop.permute.xlu0 %1260
      %1264 = vrot.lane.b32.xlu0 %v1170, 112
      %v1265 = vpop.permute.xlu0 %1264
      %1268 = vrot.lane.b32.xlu0 %v1235, 16
      %v1269 = vpop.permute.xlu0 %1268
      %1272 = vrot.lane.b32.xlu0 %v1218, 32
      %v1273 = vpop.permute.xlu0 %1272
      %1276 = vrot.lane.b32.xlu0 %v1236, 48
      %v1277 = vpop.permute.xlu0 %1276
      %1280 = vrot.lane.b32.xlu0 %v1227, 64
      %v1281 = vpop.permute.xlu0 %1280
      %1284 = vrot.lane.b32.xlu0 %v1237, 80
      %v1285 = vpop.permute.xlu0 %1284
      %1288 = vrot.lane.b32.xlu0 %v1234, 96
      %v1289 = vpop.permute.xlu0 %1288
      %1292 = vrot.lane.b32.xlu0 %v1238, 112
      %v1293 = vpop.permute.xlu0 %1292
      %v1295 = vsel %vm786, %v1143, %v1241
      %v1296 = vsel %vm788, %v1295, %v1245
      %v1297 = vsel %vm790, %v1296, %v1249
      %v1298 = vsel %vm792, %v1297, %v1253
      %v1299 = vsel %vm794, %v1298, %v1257
      %v1300 = vsel %vm796, %v1299, %v1261
      %v1301 = vsel %vm798, %v1300, %v1265
      %v1302 = vsel %vm786, %v1211, %v1269
      %v1303 = vsel %vm788, %v1302, %v1273
      %v1304 = vsel %vm790, %v1303, %v1277
      %v1305 = vsel %vm792, %v1304, %v1281
      %v1306 = vsel %vm794, %v1305, %v1285
      %v1307 = vsel %vm796, %v1306, %v1289
      %v1308 = vsel %vm798, %v1307, %v1293
      %1309 = vst [vmem:[#allocation3 + $0x10] sm:$0xf] %v1301
      %1310 = vst [vmem:[#allocation3 + $0x18] sm:$0xf] %v1308
      %v1311 = vld [vmem:[#allocation2 + $0x1] sm:$0xff]
      %v1312 = vld [vmem:[#allocation2 + $0x9] sm:$0xff]
      %v1313 = vld [vmem:[#allocation2 + $0x19] sm:$0xff]
      %v1314 = vld [vmem:[#allocation2 + $0x21] sm:$0xff]
      %v1315 = vld [vmem:[#allocation2 + $0x31] sm:$0xff]
      %v1316 = vld [vmem:[#allocation2 + $0x39] sm:$0xff]
      %v1317 = vld [vmem:[#allocation2 + $0x49] sm:$0xff]
      %v1318 = vld [vmem:[#allocation2 + $0x51] sm:$0xff]
      %v1319 = vcombine.low %v1311, %v1315
      %v1320 = vcombine.high %v1311, %v1315
      %v1322 = vunpack.c.l.s4 1983009808
      %v1323 = vunpack.c.0.s8 %v1322
      %v1324 = vlaneseq
      %v1325 = vshrl.u32 %v1324, 7
      %v1326 = vsub.s32 %v1323, %v1325
      %v1327 = vrot.slane %v1319, %v1326
      %v1329 = vunpack.c.l.s4 1983009808
      %v1330 = vunpack.c.0.s8 %v1329
      %v1331 = vlaneseq
      %v1332 = vshrl.u32 %v1331, 7
      %v1333 = vsub.s32 %v1330, %v1332
      %v1334 = vrot.slane %v1320, %v1333
      %v1335 = vcombine.low %v1313, %v1317
      %v1336 = vcombine.high %v1313, %v1317
      %v1338 = vunpack.c.l.s4 1983009808
      %v1339 = vunpack.c.0.s8 %v1338
      %v1340 = vlaneseq
      %v1341 = vshrl.u32 %v1340, 7
      %v1342 = vsub.s32 %v1339, %v1341
      %v1343 = vrot.slane %v1335, %v1342
      %v1345 = vunpack.c.l.s4 1983009808
      %v1346 = vunpack.c.0.s8 %v1345
      %v1347 = vlaneseq
      %v1348 = vshrl.u32 %v1347, 7
      %v1349 = vsub.s32 %v1346, %v1348
      %v1350 = vrot.slane %v1336, %v1349
      %v1351 = vcombine.low %v1327, %v1343
      %v1352 = vcombine.high %v1327, %v1343
      %v1354 = vunpack.c.l.s4 1934713408
      %v1355 = vunpack.c.0.s8 %v1354
      %v1356 = vlaneseq
      %v1357 = vshrl.u32 %v1356, 7
      %v1358 = vsub.s32 %v1355, %v1357
      %v1359 = vrot.slane %v1351, %v1358
      %v1361 = vunpack.c.l.s4 1934713408
      %v1362 = vunpack.c.0.s8 %v1361
      %v1363 = vlaneseq
      %v1364 = vshrl.u32 %v1363, 7
      %v1365 = vsub.s32 %v1362, %v1364
      %v1366 = vrot.slane %v1352, %v1365
      %v1367 = vcombine.low %v1334, %v1350
      %v1368 = vcombine.high %v1334, %v1350
      %v1370 = vunpack.c.l.s4 1934713408
      %v1371 = vunpack.c.0.s8 %v1370
      %v1372 = vlaneseq
      %v1373 = vshrl.u32 %v1372, 7
      %v1374 = vsub.s32 %v1371, %v1373
      %v1375 = vrot.slane %v1367, %v1374
      %v1377 = vunpack.c.l.s4 1934713408
      %v1378 = vunpack.c.0.s8 %v1377
      %v1379 = vlaneseq
      %v1380 = vshrl.u32 %v1379, 7
      %v1381 = vsub.s32 %v1378, %v1380
      %v1382 = vrot.slane %v1368, %v1381
      %v1383 = vcombine.high %v1359, 0.0
      %v1384 = vcombine.high %v1366, 0.0
      %v1385 = vcombine.high %v1375, 0.0
      %v1386 = vcombine.high %v1382, 0.0
      %v1387 = vcombine.low %v1312, %v1316
      %v1388 = vcombine.high %v1312, %v1316
      %v1390 = vunpack.c.l.s4 1983009808
      %v1391 = vunpack.c.0.s8 %v1390
      %v1392 = vlaneseq
      %v1393 = vshrl.u32 %v1392, 7
      %v1394 = vsub.s32 %v1391, %v1393
      %v1395 = vrot.slane %v1387, %v1394
      %v1397 = vunpack.c.l.s4 1983009808
      %v1398 = vunpack.c.0.s8 %v1397
      %v1399 = vlaneseq
      %v1400 = vshrl.u32 %v1399, 7
      %v1401 = vsub.s32 %v1398, %v1400
      %v1402 = vrot.slane %v1388, %v1401
      %v1403 = vcombine.low %v1314, %v1318
      %v1404 = vcombine.high %v1314, %v1318
      %v1406 = vunpack.c.l.s4 1983009808
      %v1407 = vunpack.c.0.s8 %v1406
      %v1408 = vlaneseq
      %v1409 = vshrl.u32 %v1408, 7
      %v1410 = vsub.s32 %v1407, %v1409
      %v1411 = vrot.slane %v1403, %v1410
      %v1413 = vunpack.c.l.s4 1983009808
      %v1414 = vunpack.c.0.s8 %v1413
      %v1415 = vlaneseq
      %v1416 = vshrl.u32 %v1415, 7
      %v1417 = vsub.s32 %v1414, %v1416
      %v1418 = vrot.slane %v1404, %v1417
      %v1419 = vcombine.low %v1395, %v1411
      %v1420 = vcombine.high %v1395, %v1411
      %v1422 = vunpack.c.l.s4 1934713408
      %v1423 = vunpack.c.0.s8 %v1422
      %v1424 = vlaneseq
      %v1425 = vshrl.u32 %v1424, 7
      %v1426 = vsub.s32 %v1423, %v1425
      %v1427 = vrot.slane %v1419, %v1426
      %v1429 = vunpack.c.l.s4 1934713408
      %v1430 = vunpack.c.0.s8 %v1429
      %v1431 = vlaneseq
      %v1432 = vshrl.u32 %v1431, 7
      %v1433 = vsub.s32 %v1430, %v1432
      %v1434 = vrot.slane %v1420, %v1433
      %v1435 = vcombine.low %v1402, %v1418
      %v1436 = vcombine.high %v1402, %v1418
      %v1438 = vunpack.c.l.s4 1934713408
      %v1439 = vunpack.c.0.s8 %v1438
      %v1440 = vlaneseq
      %v1441 = vshrl.u32 %v1440, 7
      %v1442 = vsub.s32 %v1439, %v1441
      %v1443 = vrot.slane %v1435, %v1442
      %v1445 = vunpack.c.l.s4 1934713408
      %v1446 = vunpack.c.0.s8 %v1445
      %v1447 = vlaneseq
      %v1448 = vshrl.u32 %v1447, 7
      %v1449 = vsub.s32 %v1446, %v1448
      %v1450 = vrot.slane %v1436, %v1449
      %v1451 = vcombine.high %v1427, 0.0
      %v1452 = vcombine.high %v1434, 0.0
      %v1453 = vcombine.high %v1443, 0.0
      %v1454 = vcombine.high %v1450, 0.0
      %1456 = vrot.lane.b32.xlu0 %v1383, 16
      %v1457 = vpop.permute.xlu0 %1456
      %1460 = vrot.lane.b32.xlu0 %v1366, 32
      %v1461 = vpop.permute.xlu0 %1460
      %1464 = vrot.lane.b32.xlu0 %v1384, 48
      %v1465 = vpop.permute.xlu0 %1464
      %1468 = vrot.lane.b32.xlu0 %v1375, 64
      %v1469 = vpop.permute.xlu0 %1468
      %1472 = vrot.lane.b32.xlu0 %v1385, 80
      %v1473 = vpop.permute.xlu0 %1472
      %1476 = vrot.lane.b32.xlu0 %v1382, 96
      %v1477 = vpop.permute.xlu0 %1476
      %1480 = vrot.lane.b32.xlu0 %v1386, 112
      %v1481 = vpop.permute.xlu0 %1480
      %1484 = vrot.lane.b32.xlu0 %v1451, 16
      %v1485 = vpop.permute.xlu0 %1484
      %1488 = vrot.lane.b32.xlu0 %v1434, 32
      %v1489 = vpop.permute.xlu0 %1488
      %1492 = vrot.lane.b32.xlu0 %v1452, 48
      %v1493 = vpop.permute.xlu0 %1492
      %1496 = vrot.lane.b32.xlu0 %v1443, 64
      %v1497 = vpop.permute.xlu0 %1496
      %1500 = vrot.lane.b32.xlu0 %v1453, 80
      %v1501 = vpop.permute.xlu0 %1500
      %1504 = vrot.lane.b32.xlu0 %v1450, 96
      %v1505 = vpop.permute.xlu0 %1504
      %1508 = vrot.lane.b32.xlu0 %v1454, 112
      %v1509 = vpop.permute.xlu0 %1508
      %v1511 = vsel %vm786, %v1359, %v1457
      %v1512 = vsel %vm788, %v1511, %v1461
      %v1513 = vsel %vm790, %v1512, %v1465
      %v1514 = vsel %vm792, %v1513, %v1469
      %v1515 = vsel %vm794, %v1514, %v1473
      %v1516 = vsel %vm796, %v1515, %v1477
      %v1517 = vsel %vm798, %v1516, %v1481
      %v1518 = vsel %vm786, %v1427, %v1485
      %v1519 = vsel %vm788, %v1518, %v1489
      %v1520 = vsel %vm790, %v1519, %v1493
      %v1521 = vsel %vm792, %v1520, %v1497
      %v1522 = vsel %vm794, %v1521, %v1501
      %v1523 = vsel %vm796, %v1522, %v1505
      %v1524 = vsel %vm798, %v1523, %v1509
      %v1527 = vrot.slane %v1517, 4
      %v1528 = vrot.slane %v1524, 4
      %1531 = vst [vmem:[#allocation3 + $0x10] sm:$0xf0] %v1527
      %1532 = vst [vmem:[#allocation3 + $0x18] sm:$0xf0] %v1528
      %v1533 = vld [vmem:[#allocation2 + $0x1] sm:$0xff]
      %v1534 = vld [vmem:[#allocation2 + $0x9] sm:$0xff]
      %v1535 = vld [vmem:[#allocation2 + $0x19] sm:$0xff]
      %v1536 = vld [vmem:[#allocation2 + $0x21] sm:$0xff]
      %v1537 = vld [vmem:[#allocation2 + $0x31] sm:$0xff]
      %v1538 = vld [vmem:[#allocation2 + $0x39] sm:$0xff]
      %v1539 = vld [vmem:[#allocation2 + $0x49] sm:$0xff]
      %v1540 = vld [vmem:[#allocation2 + $0x51] sm:$0xff]
      %1549 = vrot.lane.b32.xlu0 %v1533, 127
      %v1550 = vpop.permute.xlu0 %1549
      %1551 = vrot.lane.b32.xlu0 %v1534, 127
      %v1552 = vpop.permute.xlu0 %1551
      %1553 = vrot.lane.b32.xlu0 %v1535, 127
      %v1554 = vpop.permute.xlu0 %1553
      %1555 = vrot.lane.b32.xlu0 %v1536, 127
      %v1556 = vpop.permute.xlu0 %1555
      %1557 = vrot.lane.b32.xlu0 %v1537, 127
      %v1558 = vpop.permute.xlu0 %1557
      %1559 = vrot.lane.b32.xlu0 %v1538, 127
      %v1560 = vpop.permute.xlu0 %1559
      %1561 = vrot.lane.b32.xlu0 %v1539, 127
      %v1562 = vpop.permute.xlu0 %1561
      %1563 = vrot.lane.b32.xlu0 %v1540, 127
      %v1564 = vpop.permute.xlu0 %1563
      %v1573 = vcombine.low %v1550, %v1558
      %v1574 = vcombine.high %v1550, %v1558
      %v1576 = vunpack.c.l.s4 1983009808
      %v1577 = vunpack.c.0.s8 %v1576
      %v1578 = vlaneseq
      %v1579 = vshrl.u32 %v1578, 7
      %v1580 = vsub.s32 %v1577, %v1579
      %v1581 = vrot.slane %v1573, %v1580
      %v1583 = vunpack.c.l.s4 1983009808
      %v1584 = vunpack.c.0.s8 %v1583
      %v1585 = vlaneseq
      %v1586 = vshrl.u32 %v1585, 7
      %v1587 = vsub.s32 %v1584, %v1586
      %v1588 = vrot.slane %v1574, %v1587
      %v1589 = vcombine.low %v1554, %v1562
      %v1590 = vcombine.high %v1554, %v1562
      %v1592 = vunpack.c.l.s4 1983009808
      %v1593 = vunpack.c.0.s8 %v1592
      %v1594 = vlaneseq
      %v1595 = vshrl.u32 %v1594, 7
      %v1596 = vsub.s32 %v1593, %v1595
      %v1597 = vrot.slane %v1589, %v1596
      %v1599 = vunpack.c.l.s4 1983009808
      %v1600 = vunpack.c.0.s8 %v1599
      %v1601 = vlaneseq
      %v1602 = vshrl.u32 %v1601, 7
      %v1603 = vsub.s32 %v1600, %v1602
      %v1604 = vrot.slane %v1590, %v1603
      %v1605 = vcombine.low %v1581, %v1597
      %v1606 = vcombine.high %v1581, %v1597
      %v1608 = vunpack.c.l.s4 1934713408
      %v1609 = vunpack.c.0.s8 %v1608
      %v1610 = vlaneseq
      %v1611 = vshrl.u32 %v1610, 7
      %v1612 = vsub.s32 %v1609, %v1611
      %v1613 = vrot.slane %v1605, %v1612
      %v1615 = vunpack.c.l.s4 1934713408
      %v1616 = vunpack.c.0.s8 %v1615
      %v1617 = vlaneseq
      %v1618 = vshrl.u32 %v1617, 7
      %v1619 = vsub.s32 %v1616, %v1618
      %v1620 = vrot.slane %v1606, %v1619
      %v1621 = vcombine.low %v1588, %v1604
      %v1622 = vcombine.high %v1588, %v1604
      %v1624 = vunpack.c.l.s4 1934713408
      %v1625 = vunpack.c.0.s8 %v1624
      %v1626 = vlaneseq
      %v1627 = vshrl.u32 %v1626, 7
      %v1628 = vsub.s32 %v1625, %v1627
      %v1629 = vrot.slane %v1621, %v1628
      %v1631 = vunpack.c.l.s4 1934713408
      %v1632 = vunpack.c.0.s8 %v1631
      %v1633 = vlaneseq
      %v1634 = vshrl.u32 %v1633, 7
      %v1635 = vsub.s32 %v1632, %v1634
      %v1636 = vrot.slane %v1622, %v1635
      %v1637 = vcombine.high %v1613, 0.0
      %v1638 = vcombine.high %v1620, 0.0
      %v1639 = vcombine.high %v1629, 0.0
      %v1640 = vcombine.high %v1636, 0.0
      %v1641 = vcombine.low %v1552, %v1560
      %v1642 = vcombine.high %v1552, %v1560
      %v1644 = vunpack.c.l.s4 1983009808
      %v1645 = vunpack.c.0.s8 %v1644
      %v1646 = vlaneseq
      %v1647 = vshrl.u32 %v1646, 7
      %v1648 = vsub.s32 %v1645, %v1647
      %v1649 = vrot.slane %v1641, %v1648
      %v1651 = vunpack.c.l.s4 1983009808
      %v1652 = vunpack.c.0.s8 %v1651
      %v1653 = vlaneseq
      %v1654 = vshrl.u32 %v1653, 7
      %v1655 = vsub.s32 %v1652, %v1654
      %v1656 = vrot.slane %v1642, %v1655
      %v1657 = vcombine.low %v1556, %v1564
      %v1658 = vcombine.high %v1556, %v1564
      %v1660 = vunpack.c.l.s4 1983009808
      %v1661 = vunpack.c.0.s8 %v1660
      %v1662 = vlaneseq
      %v1663 = vshrl.u32 %v1662, 7
      %v1664 = vsub.s32 %v1661, %v1663
      %v1665 = vrot.slane %v1657, %v1664
      %v1667 = vunpack.c.l.s4 1983009808
      %v1668 = vunpack.c.0.s8 %v1667
      %v1669 = vlaneseq
      %v1670 = vshrl.u32 %v1669, 7
      %v1671 = vsub.s32 %v1668, %v1670
      %v1672 = vrot.slane %v1658, %v1671
      %v1673 = vcombine.low %v1649, %v1665
      %v1674 = vcombine.high %v1649, %v1665
      %v1676 = vunpack.c.l.s4 1934713408
      %v1677 = vunpack.c.0.s8 %v1676
      %v1678 = vlaneseq
      %v1679 = vshrl.u32 %v1678, 7
      %v1680 = vsub.s32 %v1677, %v1679
      %v1681 = vrot.slane %v1673, %v1680
      %v1683 = vunpack.c.l.s4 1934713408
      %v1684 = vunpack.c.0.s8 %v1683
      %v1685 = vlaneseq
      %v1686 = vshrl.u32 %v1685, 7
      %v1687 = vsub.s32 %v1684, %v1686
      %v1688 = vrot.slane %v1674, %v1687
      %v1689 = vcombine.low %v1656, %v1672
      %v1690 = vcombine.high %v1656, %v1672
      %v1692 = vunpack.c.l.s4 1934713408
      %v1693 = vunpack.c.0.s8 %v1692
      %v1694 = vlaneseq
      %v1695 = vshrl.u32 %v1694, 7
      %v1696 = vsub.s32 %v1693, %v1695
      %v1697 = vrot.slane %v1689, %v1696
      %v1699 = vunpack.c.l.s4 1934713408
      %v1700 = vunpack.c.0.s8 %v1699
      %v1701 = vlaneseq
      %v1702 = vshrl.u32 %v1701, 7
      %v1703 = vsub.s32 %v1700, %v1702
      %v1704 = vrot.slane %v1690, %v1703
      %v1705 = vcombine.high %v1681, 0.0
      %v1706 = vcombine.high %v1688, 0.0
      %v1707 = vcombine.high %v1697, 0.0
      %v1708 = vcombine.high %v1704, 0.0
      %1710 = vrot.lane.b32.xlu0 %v1637, 16
      %v1711 = vpop.permute.xlu0 %1710
      %1714 = vrot.lane.b32.xlu0 %v1620, 32
      %v1715 = vpop.permute.xlu0 %1714
      %1718 = vrot.lane.b32.xlu0 %v1638, 48
      %v1719 = vpop.permute.xlu0 %1718
      %1722 = vrot.lane.b32.xlu0 %v1629, 64
      %v1723 = vpop.permute.xlu0 %1722
      %1726 = vrot.lane.b32.xlu0 %v1639, 80
      %v1727 = vpop.permute.xlu0 %1726
      %1730 = vrot.lane.b32.xlu0 %v1636, 96
      %v1731 = vpop.permute.xlu0 %1730
      %1734 = vrot.lane.b32.xlu0 %v1640, 112
      %v1735 = vpop.permute.xlu0 %1734
      %1738 = vrot.lane.b32.xlu0 %v1705, 16
      %v1739 = vpop.permute.xlu0 %1738
      %1742 = vrot.lane.b32.xlu0 %v1688, 32
      %v1743 = vpop.permute.xlu0 %1742
      %1746 = vrot.lane.b32.xlu0 %v1706, 48
      %v1747 = vpop.permute.xlu0 %1746
      %1750 = vrot.lane.b32.xlu0 %v1697, 64
      %v1751 = vpop.permute.xlu0 %1750
      %1754 = vrot.lane.b32.xlu0 %v1707, 80
      %v1755 = vpop.permute.xlu0 %1754
      %1758 = vrot.lane.b32.xlu0 %v1704, 96
      %v1759 = vpop.permute.xlu0 %1758
      %1762 = vrot.lane.b32.xlu0 %v1708, 112
      %v1763 = vpop.permute.xlu0 %1762
      %v1765 = vsel %vm786, %v1613, %v1711
      %v1766 = vsel %vm788, %v1765, %v1715
      %v1767 = vsel %vm790, %v1766, %v1719
      %v1768 = vsel %vm792, %v1767, %v1723
      %v1769 = vsel %vm794, %v1768, %v1727
      %v1770 = vsel %vm796, %v1769, %v1731
      %v1771 = vsel %vm798, %v1770, %v1735
      %v1772 = vsel %vm786, %v1681, %v1739
      %v1773 = vsel %vm788, %v1772, %v1743
      %v1774 = vsel %vm790, %v1773, %v1747
      %v1775 = vsel %vm792, %v1774, %v1751
      %v1776 = vsel %vm794, %v1775, %v1755
      %v1777 = vsel %vm796, %v1776, %v1759
      %v1778 = vsel %vm798, %v1777, %v1763
      %1779 = vst [vmem:[#allocation3 + $0x20] sm:$0xf] %v1771
      %1780 = vst [vmem:[#allocation3 + $0x28] sm:$0xf] %v1778
      %v1781 = vld [vmem:[#allocation2 + $0x1] sm:$0xff]
      %v1782 = vld [vmem:[#allocation2 + $0x9] sm:$0xff]
      %v1783 = vld [vmem:[#allocation2 + $0x19] sm:$0xff]
      %v1784 = vld [vmem:[#allocation2 + $0x21] sm:$0xff]
      %v1785 = vld [vmem:[#allocation2 + $0x31] sm:$0xff]
      %v1786 = vld [vmem:[#allocation2 + $0x39] sm:$0xff]
      %v1787 = vld [vmem:[#allocation2 + $0x49] sm:$0xff]
      %v1788 = vld [vmem:[#allocation2 + $0x51] sm:$0xff]
      %1797 = vrot.lane.b32.xlu0 %v1781, 126
      %v1798 = vpop.permute.xlu0 %1797
      %1799 = vrot.lane.b32.xlu0 %v1782, 126
      %v1800 = vpop.permute.xlu0 %1799
      %1801 = vrot.lane.b32.xlu0 %v1783, 126
      %v1802 = vpop.permute.xlu0 %1801
      %1803 = vrot.lane.b32.xlu0 %v1784, 126
      %v1804 = vpop.permute.xlu0 %1803
      %1805 = vrot.lane.b32.xlu0 %v1785, 126
      %v1806 = vpop.permute.xlu0 %1805
      %1807 = vrot.lane.b32.xlu0 %v1786, 126
      %v1808 = vpop.permute.xlu0 %1807
      %1809 = vrot.lane.b32.xlu0 %v1787, 126
      %v1810 = vpop.permute.xlu0 %1809
      %1811 = vrot.lane.b32.xlu0 %v1788, 126
      %v1812 = vpop.permute.xlu0 %1811
      %v1821 = vcombine.low %v1798, %v1806
      %v1822 = vcombine.high %v1798, %v1806
      %v1824 = vunpack.c.l.s4 1983009808
      %v1825 = vunpack.c.0.s8 %v1824
      %v1826 = vlaneseq
      %v1827 = vshrl.u32 %v1826, 7
      %v1828 = vsub.s32 %v1825, %v1827
      %v1829 = vrot.slane %v1821, %v1828
      %v1831 = vunpack.c.l.s4 1983009808
      %v1832 = vunpack.c.0.s8 %v1831
      %v1833 = vlaneseq
      %v1834 = vshrl.u32 %v1833, 7
      %v1835 = vsub.s32 %v1832, %v1834
      %v1836 = vrot.slane %v1822, %v1835
      %v1837 = vcombine.low %v1802, %v1810
      %v1838 = vcombine.high %v1802, %v1810
      %v1840 = vunpack.c.l.s4 1983009808
      %v1841 = vunpack.c.0.s8 %v1840
      %v1842 = vlaneseq
      %v1843 = vshrl.u32 %v1842, 7
      %v1844 = vsub.s32 %v1841, %v1843
      %v1845 = vrot.slane %v1837, %v1844
      %v1847 = vunpack.c.l.s4 1983009808
      %v1848 = vunpack.c.0.s8 %v1847
      %v1849 = vlaneseq
      %v1850 = vshrl.u32 %v1849, 7
      %v1851 = vsub.s32 %v1848, %v1850
      %v1852 = vrot.slane %v1838, %v1851
      %v1853 = vcombine.low %v1829, %v1845
      %v1854 = vcombine.high %v1829, %v1845
      %v1856 = vunpack.c.l.s4 1934713408
      %v1857 = vunpack.c.0.s8 %v1856
      %v1858 = vlaneseq
      %v1859 = vshrl.u32 %v1858, 7
      %v1860 = vsub.s32 %v1857, %v1859
      %v1861 = vrot.slane %v1853, %v1860
      %v1863 = vunpack.c.l.s4 1934713408
      %v1864 = vunpack.c.0.s8 %v1863
      %v1865 = vlaneseq
      %v1866 = vshrl.u32 %v1865, 7
      %v1867 = vsub.s32 %v1864, %v1866
      %v1868 = vrot.slane %v1854, %v1867
      %v1869 = vcombine.low %v1836, %v1852
      %v1870 = vcombine.high %v1836, %v1852
      %v1872 = vunpack.c.l.s4 1934713408
      %v1873 = vunpack.c.0.s8 %v1872
      %v1874 = vlaneseq
      %v1875 = vshrl.u32 %v1874, 7
      %v1876 = vsub.s32 %v1873, %v1875
      %v1877 = vrot.slane %v1869, %v1876
      %v1879 = vunpack.c.l.s4 1934713408
      %v1880 = vunpack.c.0.s8 %v1879
      %v1881 = vlaneseq
      %v1882 = vshrl.u32 %v1881, 7
      %v1883 = vsub.s32 %v1880, %v1882
      %v1884 = vrot.slane %v1870, %v1883
      %v1885 = vcombine.high %v1861, 0.0
      %v1886 = vcombine.high %v1868, 0.0
      %v1887 = vcombine.high %v1877, 0.0
      %v1888 = vcombine.high %v1884, 0.0
      %v1889 = vcombine.low %v1800, %v1808
      %v1890 = vcombine.high %v1800, %v1808
      %v1892 = vunpack.c.l.s4 1983009808
      %v1893 = vunpack.c.0.s8 %v1892
      %v1894 = vlaneseq
      %v1895 = vshrl.u32 %v1894, 7
      %v1896 = vsub.s32 %v1893, %v1895
      %v1897 = vrot.slane %v1889, %v1896
      %v1899 = vunpack.c.l.s4 1983009808
      %v1900 = vunpack.c.0.s8 %v1899
      %v1901 = vlaneseq
      %v1902 = vshrl.u32 %v1901, 7
      %v1903 = vsub.s32 %v1900, %v1902
      %v1904 = vrot.slane %v1890, %v1903
      %v1905 = vcombine.low %v1804, %v1812
      %v1906 = vcombine.high %v1804, %v1812
      %v1908 = vunpack.c.l.s4 1983009808
      %v1909 = vunpack.c.0.s8 %v1908
      %v1910 = vlaneseq
      %v1911 = vshrl.u32 %v1910, 7
      %v1912 = vsub.s32 %v1909, %v1911
      %v1913 = vrot.slane %v1905, %v1912
      %v1915 = vunpack.c.l.s4 1983009808
      %v1916 = vunpack.c.0.s8 %v1915
      %v1917 = vlaneseq
      %v1918 = vshrl.u32 %v1917, 7
      %v1919 = vsub.s32 %v1916, %v1918
      %v1920 = vrot.slane %v1906, %v1919
      %v1921 = vcombine.low %v1897, %v1913
      %v1922 = vcombine.high %v1897, %v1913
      %v1924 = vunpack.c.l.s4 1934713408
      %v1925 = vunpack.c.0.s8 %v1924
      %v1926 = vlaneseq
      %v1927 = vshrl.u32 %v1926, 7
      %v1928 = vsub.s32 %v1925, %v1927
      %v1929 = vrot.slane %v1921, %v1928
      %v1931 = vunpack.c.l.s4 1934713408
      %v1932 = vunpack.c.0.s8 %v1931
      %v1933 = vlaneseq
      %v1934 = vshrl.u32 %v1933, 7
      %v1935 = vsub.s32 %v1932, %v1934
      %v1936 = vrot.slane %v1922, %v1935
      %v1937 = vcombine.low %v1904, %v1920
      %v1938 = vcombine.high %v1904, %v1920
      %v1940 = vunpack.c.l.s4 1934713408
      %v1941 = vunpack.c.0.s8 %v1940
      %v1942 = vlaneseq
      %v1943 = vshrl.u32 %v1942, 7
      %v1944 = vsub.s32 %v1941, %v1943
      %v1945 = vrot.slane %v1937, %v1944
      %v1947 = vunpack.c.l.s4 1934713408
      %v1948 = vunpack.c.0.s8 %v1947
      %v1949 = vlaneseq
      %v1950 = vshrl.u32 %v1949, 7
      %v1951 = vsub.s32 %v1948, %v1950
      %v1952 = vrot.slane %v1938, %v1951
      %v1953 = vcombine.high %v1929, 0.0
      %v1954 = vcombine.high %v1936, 0.0
      %v1955 = vcombine.high %v1945, 0.0
      %v1956 = vcombine.high %v1952, 0.0
      %1958 = vrot.lane.b32.xlu0 %v1885, 16
      %v1959 = vpop.permute.xlu0 %1958
      %1962 = vrot.lane.b32.xlu0 %v1868, 32
      %v1963 = vpop.permute.xlu0 %1962
      %1966 = vrot.lane.b32.xlu0 %v1886, 48
      %v1967 = vpop.permute.xlu0 %1966
      %1970 = vrot.lane.b32.xlu0 %v1877, 64
      %v1971 = vpop.permute.xlu0 %1970
      %1974 = vrot.lane.b32.xlu0 %v1887, 80
      %v1975 = vpop.permute.xlu0 %1974
      %1978 = vrot.lane.b32.xlu0 %v1884, 96
      %v1979 = vpop.permute.xlu0 %1978
      %1982 = vrot.lane.b32.xlu0 %v1888, 112
      %v1983 = vpop.permute.xlu0 %1982
      %1986 = vrot.lane.b32.xlu0 %v1953, 16
      %v1987 = vpop.permute.xlu0 %1986
      %1990 = vrot.lane.b32.xlu0 %v1936, 32
      %v1991 = vpop.permute.xlu0 %1990
      %1994 = vrot.lane.b32.xlu0 %v1954, 48
      %v1995 = vpop.permute.xlu0 %1994
      %1998 = vrot.lane.b32.xlu0 %v1945, 64
      %v1999 = vpop.permute.xlu0 %1998
      %2002 = vrot.lane.b32.xlu0 %v1955, 80
      %v2003 = vpop.permute.xlu0 %2002
      %2006 = vrot.lane.b32.xlu0 %v1952, 96
      %v2007 = vpop.permute.xlu0 %2006
      %2010 = vrot.lane.b32.xlu0 %v1956, 112
      %v2011 = vpop.permute.xlu0 %2010
      %v2013 = vsel %vm786, %v1861, %v1959
      %v2014 = vsel %vm788, %v2013, %v1963
      %v2015 = vsel %vm790, %v2014, %v1967
      %v2016 = vsel %vm792, %v2015, %v1971
      %v2017 = vsel %vm794, %v2016, %v1975
      %v2018 = vsel %vm796, %v2017, %v1979
      %v2019 = vsel %vm798, %v2018, %v1983
      %v2020 = vsel %vm786, %v1929, %v1987
      %v2021 = vsel %vm788, %v2020, %v1991
      %v2022 = vsel %vm790, %v2021, %v1995
      %v2023 = vsel %vm792, %v2022, %v1999
      %v2024 = vsel %vm794, %v2023, %v2003
      %v2025 = vsel %vm796, %v2024, %v2007
      %v2026 = vsel %vm798, %v2025, %v2011
      %v2029 = vrot.slane %v2019, 4
      %v2030 = vrot.slane %v2026, 4
      %2033 = vst [vmem:[#allocation3 + $0x20] sm:$0xf0] %v2029
      %2034 = vst [vmem:[#allocation3 + $0x28] sm:$0xf0] %v2030
      %v2035 = vld [vmem:[#allocation2 + $0x2] sm:$0xff]
      %v2036 = vld [vmem:[#allocation2 + $0xa] sm:$0xff]
      %v2037 = vld [vmem:[#allocation2 + $0x1a] sm:$0xff]
      %v2038 = vld [vmem:[#allocation2 + $0x22] sm:$0xff]
      %v2039 = vld [vmem:[#allocation2 + $0x32] sm:$0xff]
      %v2040 = vld [vmem:[#allocation2 + $0x3a] sm:$0xff]
      %v2041 = vld [vmem:[#allocation2 + $0x4a] sm:$0xff]
      %v2042 = vld [vmem:[#allocation2 + $0x52] sm:$0xff]
      %v2043 = vcombine.low %v2035, %v2039
      %v2044 = vcombine.high %v2035, %v2039
      %v2046 = vunpack.c.l.s4 1983009808
      %v2047 = vunpack.c.0.s8 %v2046
      %v2048 = vlaneseq
      %v2049 = vshrl.u32 %v2048, 7
      %v2050 = vsub.s32 %v2047, %v2049
      %v2051 = vrot.slane %v2043, %v2050
      %v2053 = vunpack.c.l.s4 1983009808
      %v2054 = vunpack.c.0.s8 %v2053
      %v2055 = vlaneseq
      %v2056 = vshrl.u32 %v2055, 7
      %v2057 = vsub.s32 %v2054, %v2056
      %v2058 = vrot.slane %v2044, %v2057
      %v2059 = vcombine.low %v2037, %v2041
      %v2060 = vcombine.high %v2037, %v2041
      %v2062 = vunpack.c.l.s4 1983009808
      %v2063 = vunpack.c.0.s8 %v2062
      %v2064 = vlaneseq
      %v2065 = vshrl.u32 %v2064, 7
      %v2066 = vsub.s32 %v2063, %v2065
      %v2067 = vrot.slane %v2059, %v2066
      %v2069 = vunpack.c.l.s4 1983009808
      %v2070 = vunpack.c.0.s8 %v2069
      %v2071 = vlaneseq
      %v2072 = vshrl.u32 %v2071, 7
      %v2073 = vsub.s32 %v2070, %v2072
      %v2074 = vrot.slane %v2060, %v2073
      %v2075 = vcombine.low %v2051, %v2067
      %v2076 = vcombine.high %v2051, %v2067
      %v2078 = vunpack.c.l.s4 1934713408
      %v2079 = vunpack.c.0.s8 %v2078
      %v2080 = vlaneseq
      %v2081 = vshrl.u32 %v2080, 7
      %v2082 = vsub.s32 %v2079, %v2081
      %v2083 = vrot.slane %v2075, %v2082
      %v2085 = vunpack.c.l.s4 1934713408
      %v2086 = vunpack.c.0.s8 %v2085
      %v2087 = vlaneseq
      %v2088 = vshrl.u32 %v2087, 7
      %v2089 = vsub.s32 %v2086, %v2088
      %v2090 = vrot.slane %v2076, %v2089
      %v2091 = vcombine.low %v2058, %v2074
      %v2092 = vcombine.high %v2058, %v2074
      %v2094 = vunpack.c.l.s4 1934713408
      %v2095 = vunpack.c.0.s8 %v2094
      %v2096 = vlaneseq
      %v2097 = vshrl.u32 %v2096, 7
      %v2098 = vsub.s32 %v2095, %v2097
      %v2099 = vrot.slane %v2091, %v2098
      %v2101 = vunpack.c.l.s4 1934713408
      %v2102 = vunpack.c.0.s8 %v2101
      %v2103 = vlaneseq
      %v2104 = vshrl.u32 %v2103, 7
      %v2105 = vsub.s32 %v2102, %v2104
      %v2106 = vrot.slane %v2092, %v2105
      %v2107 = vcombine.high %v2083, 0.0
      %v2108 = vcombine.high %v2090, 0.0
      %v2109 = vcombine.high %v2099, 0.0
      %v2110 = vcombine.high %v2106, 0.0
      %v2111 = vcombine.low %v2036, %v2040
      %v2112 = vcombine.high %v2036, %v2040
      %v2114 = vunpack.c.l.s4 1983009808
      %v2115 = vunpack.c.0.s8 %v2114
      %v2116 = vlaneseq
      %v2117 = vshrl.u32 %v2116, 7
      %v2118 = vsub.s32 %v2115, %v2117
      %v2119 = vrot.slane %v2111, %v2118
      %v2121 = vunpack.c.l.s4 1983009808
      %v2122 = vunpack.c.0.s8 %v2121
      %v2123 = vlaneseq
      %v2124 = vshrl.u32 %v2123, 7
      %v2125 = vsub.s32 %v2122, %v2124
      %v2126 = vrot.slane %v2112, %v2125
      %v2127 = vcombine.low %v2038, %v2042
      %v2128 = vcombine.high %v2038, %v2042
      %v2130 = vunpack.c.l.s4 1983009808
      %v2131 = vunpack.c.0.s8 %v2130
      %v2132 = vlaneseq
      %v2133 = vshrl.u32 %v2132, 7
      %v2134 = vsub.s32 %v2131, %v2133
      %v2135 = vrot.slane %v2127, %v2134
      %v2137 = vunpack.c.l.s4 1983009808
      %v2138 = vunpack.c.0.s8 %v2137
      %v2139 = vlaneseq
      %v2140 = vshrl.u32 %v2139, 7
      %v2141 = vsub.s32 %v2138, %v2140
      %v2142 = vrot.slane %v2128, %v2141
      %v2143 = vcombine.low %v2119, %v2135
      %v2144 = vcombine.high %v2119, %v2135
      %v2146 = vunpack.c.l.s4 1934713408
      %v2147 = vunpack.c.0.s8 %v2146
      %v2148 = vlaneseq
      %v2149 = vshrl.u32 %v2148, 7
      %v2150 = vsub.s32 %v2147, %v2149
      %v2151 = vrot.slane %v2143, %v2150
      %v2153 = vunpack.c.l.s4 1934713408
      %v2154 = vunpack.c.0.s8 %v2153
      %v2155 = vlaneseq
      %v2156 = vshrl.u32 %v2155, 7
      %v2157 = vsub.s32 %v2154, %v2156
      %v2158 = vrot.slane %v2144, %v2157
      %v2159 = vcombine.low %v2126, %v2142
      %v2160 = vcombine.high %v2126, %v2142
      %v2162 = vunpack.c.l.s4 1934713408
      %v2163 = vunpack.c.0.s8 %v2162
      %v2164 = vlaneseq
      %v2165 = vshrl.u32 %v2164, 7
      %v2166 = vsub.s32 %v2163, %v2165
      %v2167 = vrot.slane %v2159, %v2166
      %v2169 = vunpack.c.l.s4 1934713408
      %v2170 = vunpack.c.0.s8 %v2169
      %v2171 = vlaneseq
      %v2172 = vshrl.u32 %v2171, 7
      %v2173 = vsub.s32 %v2170, %v2172
      %v2174 = vrot.slane %v2160, %v2173
      %v2175 = vcombine.high %v2151, 0.0
      %v2176 = vcombine.high %v2158, 0.0
      %v2177 = vcombine.high %v2167, 0.0
      %v2178 = vcombine.high %v2174, 0.0
      %2180 = vrot.lane.b32.xlu0 %v2107, 16
      %v2181 = vpop.permute.xlu0 %2180
      %2184 = vrot.lane.b32.xlu0 %v2090, 32
      %v2185 = vpop.permute.xlu0 %2184
      %2188 = vrot.lane.b32.xlu0 %v2108, 48
      %v2189 = vpop.permute.xlu0 %2188
      %2192 = vrot.lane.b32.xlu0 %v2099, 64
      %v2193 = vpop.permute.xlu0 %2192
      %2196 = vrot.lane.b32.xlu0 %v2109, 80
      %v2197 = vpop.permute.xlu0 %2196
      %2200 = vrot.lane.b32.xlu0 %v2106, 96
      %v2201 = vpop.permute.xlu0 %2200
      %2204 = vrot.lane.b32.xlu0 %v2110, 112
      %v2205 = vpop.permute.xlu0 %2204
      %2208 = vrot.lane.b32.xlu0 %v2175, 16
      %v2209 = vpop.permute.xlu0 %2208
      %2212 = vrot.lane.b32.xlu0 %v2158, 32
      %v2213 = vpop.permute.xlu0 %2212
      %2216 = vrot.lane.b32.xlu0 %v2176, 48
      %v2217 = vpop.permute.xlu0 %2216
      %2220 = vrot.lane.b32.xlu0 %v2167, 64
      %v2221 = vpop.permute.xlu0 %2220
      %2224 = vrot.lane.b32.xlu0 %v2177, 80
      %v2225 = vpop.permute.xlu0 %2224
      %2228 = vrot.lane.b32.xlu0 %v2174, 96
      %v2229 = vpop.permute.xlu0 %2228
      %2232 = vrot.lane.b32.xlu0 %v2178, 112
      %v2233 = vpop.permute.xlu0 %2232
      %v2235 = vsel %vm786, %v2083, %v2181
      %v2236 = vsel %vm788, %v2235, %v2185
      %v2237 = vsel %vm790, %v2236, %v2189
      %v2238 = vsel %vm792, %v2237, %v2193
      %v2239 = vsel %vm794, %v2238, %v2197
      %v2240 = vsel %vm796, %v2239, %v2201
      %v2241 = vsel %vm798, %v2240, %v2205
      %v2242 = vsel %vm786, %v2151, %v2209
      %v2243 = vsel %vm788, %v2242, %v2213
      %v2244 = vsel %vm790, %v2243, %v2217
      %v2245 = vsel %vm792, %v2244, %v2221
      %v2246 = vsel %vm794, %v2245, %v2225
      %v2247 = vsel %vm796, %v2246, %v2229
      %v2248 = vsel %vm798, %v2247, %v2233
      %2249 = vst [vmem:[#allocation3 + $0x30] sm:$0xf] %v2241
      %2250 = vst [vmem:[#allocation3 + $0x38] sm:$0xf] %v2248
      %v2251 = vld [vmem:[#allocation2 + $0x2] sm:$0xff]
      %v2252 = vld [vmem:[#allocation2 + $0xa] sm:$0xff]
      %v2253 = vld [vmem:[#allocation2 + $0x1a] sm:$0xff]
      %v2254 = vld [vmem:[#allocation2 + $0x22] sm:$0xff]
      %v2255 = vld [vmem:[#allocation2 + $0x32] sm:$0xff]
      %v2256 = vld [vmem:[#allocation2 + $0x3a] sm:$0xff]
      %v2257 = vld [vmem:[#allocation2 + $0x4a] sm:$0xff]
      %v2258 = vld [vmem:[#allocation2 + $0x52] sm:$0xff]
      %2267 = vrot.lane.b32.xlu0 %v2251, 127
      %v2268 = vpop.permute.xlu0 %2267
      %2269 = vrot.lane.b32.xlu0 %v2252, 127
      %v2270 = vpop.permute.xlu0 %2269
      %2271 = vrot.lane.b32.xlu0 %v2253, 127
      %v2272 = vpop.permute.xlu0 %2271
      %2273 = vrot.lane.b32.xlu0 %v2254, 127
      %v2274 = vpop.permute.xlu0 %2273
      %2275 = vrot.lane.b32.xlu0 %v2255, 127
      %v2276 = vpop.permute.xlu0 %2275
      %2277 = vrot.lane.b32.xlu0 %v2256, 127
      %v2278 = vpop.permute.xlu0 %2277
      %2279 = vrot.lane.b32.xlu0 %v2257, 127
      %v2280 = vpop.permute.xlu0 %2279
      %2281 = vrot.lane.b32.xlu0 %v2258, 127
      %v2282 = vpop.permute.xlu0 %2281
      %v2291 = vcombine.low %v2268, %v2276
      %v2292 = vcombine.high %v2268, %v2276
      %v2294 = vunpack.c.l.s4 1983009808
      %v2295 = vunpack.c.0.s8 %v2294
      %v2296 = vlaneseq
      %v2297 = vshrl.u32 %v2296, 7
      %v2298 = vsub.s32 %v2295, %v2297
      %v2299 = vrot.slane %v2291, %v2298
      %v2301 = vunpack.c.l.s4 1983009808
      %v2302 = vunpack.c.0.s8 %v2301
      %v2303 = vlaneseq
      %v2304 = vshrl.u32 %v2303, 7
      %v2305 = vsub.s32 %v2302, %v2304
      %v2306 = vrot.slane %v2292, %v2305
      %v2307 = vcombine.low %v2272, %v2280
      %v2308 = vcombine.high %v2272, %v2280
      %v2310 = vunpack.c.l.s4 1983009808
      %v2311 = vunpack.c.0.s8 %v2310
      %v2312 = vlaneseq
      %v2313 = vshrl.u32 %v2312, 7
      %v2314 = vsub.s32 %v2311, %v2313
      %v2315 = vrot.slane %v2307, %v2314
      %v2317 = vunpack.c.l.s4 1983009808
      %v2318 = vunpack.c.0.s8 %v2317
      %v2319 = vlaneseq
      %v2320 = vshrl.u32 %v2319, 7
      %v2321 = vsub.s32 %v2318, %v2320
      %v2322 = vrot.slane %v2308, %v2321
      %v2323 = vcombine.low %v2299, %v2315
      %v2324 = vcombine.high %v2299, %v2315
      %v2326 = vunpack.c.l.s4 1934713408
      %v2327 = vunpack.c.0.s8 %v2326
      %v2328 = vlaneseq
      %v2329 = vshrl.u32 %v2328, 7
      %v2330 = vsub.s32 %v2327, %v2329
      %v2331 = vrot.slane %v2323, %v2330
      %v2333 = vunpack.c.l.s4 1934713408
      %v2334 = vunpack.c.0.s8 %v2333
      %v2335 = vlaneseq
      %v2336 = vshrl.u32 %v2335, 7
      %v2337 = vsub.s32 %v2334, %v2336
      %v2338 = vrot.slane %v2324, %v2337
      %v2339 = vcombine.low %v2306, %v2322
      %v2340 = vcombine.high %v2306, %v2322
      %v2342 = vunpack.c.l.s4 1934713408
      %v2343 = vunpack.c.0.s8 %v2342
      %v2344 = vlaneseq
      %v2345 = vshrl.u32 %v2344, 7
      %v2346 = vsub.s32 %v2343, %v2345
      %v2347 = vrot.slane %v2339, %v2346
      %v2349 = vunpack.c.l.s4 1934713408
      %v2350 = vunpack.c.0.s8 %v2349
      %v2351 = vlaneseq
      %v2352 = vshrl.u32 %v2351, 7
      %v2353 = vsub.s32 %v2350, %v2352
      %v2354 = vrot.slane %v2340, %v2353
      %v2355 = vcombine.high %v2331, 0.0
      %v2356 = vcombine.high %v2338, 0.0
      %v2357 = vcombine.high %v2347, 0.0
      %v2358 = vcombine.high %v2354, 0.0
      %v2359 = vcombine.low %v2270, %v2278
      %v2360 = vcombine.high %v2270, %v2278
      %v2362 = vunpack.c.l.s4 1983009808
      %v2363 = vunpack.c.0.s8 %v2362
      %v2364 = vlaneseq
      %v2365 = vshrl.u32 %v2364, 7
      %v2366 = vsub.s32 %v2363, %v2365
      %v2367 = vrot.slane %v2359, %v2366
      %v2369 = vunpack.c.l.s4 1983009808
      %v2370 = vunpack.c.0.s8 %v2369
      %v2371 = vlaneseq
      %v2372 = vshrl.u32 %v2371, 7
      %v2373 = vsub.s32 %v2370, %v2372
      %v2374 = vrot.slane %v2360, %v2373
      %v2375 = vcombine.low %v2274, %v2282
      %v2376 = vcombine.high %v2274, %v2282
      %v2378 = vunpack.c.l.s4 1983009808
      %v2379 = vunpack.c.0.s8 %v2378
      %v2380 = vlaneseq
      %v2381 = vshrl.u32 %v2380, 7
      %v2382 = vsub.s32 %v2379, %v2381
      %v2383 = vrot.slane %v2375, %v2382
      %v2385 = vunpack.c.l.s4 1983009808
      %v2386 = vunpack.c.0.s8 %v2385
      %v2387 = vlaneseq
      %v2388 = vshrl.u32 %v2387, 7
      %v2389 = vsub.s32 %v2386, %v2388
      %v2390 = vrot.slane %v2376, %v2389
      %v2391 = vcombine.low %v2367, %v2383
      %v2392 = vcombine.high %v2367, %v2383
      %v2394 = vunpack.c.l.s4 1934713408
      %v2395 = vunpack.c.0.s8 %v2394
      %v2396 = vlaneseq
      %v2397 = vshrl.u32 %v2396, 7
      %v2398 = vsub.s32 %v2395, %v2397
      %v2399 = vrot.slane %v2391, %v2398
      %v2401 = vunpack.c.l.s4 1934713408
      %v2402 = vunpack.c.0.s8 %v2401
      %v2403 = vlaneseq
      %v2404 = vshrl.u32 %v2403, 7
      %v2405 = vsub.s32 %v2402, %v2404
      %v2406 = vrot.slane %v2392, %v2405
      %v2407 = vcombine.low %v2374, %v2390
      %v2408 = vcombine.high %v2374, %v2390
      %v2410 = vunpack.c.l.s4 1934713408
      %v2411 = vunpack.c.0.s8 %v2410
      %v2412 = vlaneseq
      %v2413 = vshrl.u32 %v2412, 7
      %v2414 = vsub.s32 %v2411, %v2413
      %v2415 = vrot.slane %v2407, %v2414
      %v2417 = vunpack.c.l.s4 1934713408
      %v2418 = vunpack.c.0.s8 %v2417
      %v2419 = vlaneseq
      %v2420 = vshrl.u32 %v2419, 7
      %v2421 = vsub.s32 %v2418, %v2420
      %v2422 = vrot.slane %v2408, %v2421
      %v2423 = vcombine.high %v2399, 0.0
      %v2424 = vcombine.high %v2406, 0.0
      %v2425 = vcombine.high %v2415, 0.0
      %v2426 = vcombine.high %v2422, 0.0
      %2428 = vrot.lane.b32.xlu0 %v2355, 16
      %v2429 = vpop.permute.xlu0 %2428
      %2432 = vrot.lane.b32.xlu0 %v2338, 32
      %v2433 = vpop.permute.xlu0 %2432
      %2436 = vrot.lane.b32.xlu0 %v2356, 48
      %v2437 = vpop.permute.xlu0 %2436
      %2440 = vrot.lane.b32.xlu0 %v2347, 64
      %v2441 = vpop.permute.xlu0 %2440
      %2444 = vrot.lane.b32.xlu0 %v2357, 80
      %v2445 = vpop.permute.xlu0 %2444
      %2448 = vrot.lane.b32.xlu0 %v2354, 96
      %v2449 = vpop.permute.xlu0 %2448
      %2452 = vrot.lane.b32.xlu0 %v2358, 112
      %v2453 = vpop.permute.xlu0 %2452
      %2456 = vrot.lane.b32.xlu0 %v2423, 16
      %v2457 = vpop.permute.xlu0 %2456
      %2460 = vrot.lane.b32.xlu0 %v2406, 32
      %v2461 = vpop.permute.xlu0 %2460
      %2464 = vrot.lane.b32.xlu0 %v2424, 48
      %v2465 = vpop.permute.xlu0 %2464
      %2468 = vrot.lane.b32.xlu0 %v2415, 64
      %v2469 = vpop.permute.xlu0 %2468
      %2472 = vrot.lane.b32.xlu0 %v2425, 80
      %v2473 = vpop.permute.xlu0 %2472
      %2476 = vrot.lane.b32.xlu0 %v2422, 96
      %v2477 = vpop.permute.xlu0 %2476
      %2480 = vrot.lane.b32.xlu0 %v2426, 112
      %v2481 = vpop.permute.xlu0 %2480
      %v2483 = vsel %vm786, %v2331, %v2429
      %v2484 = vsel %vm788, %v2483, %v2433
      %v2485 = vsel %vm790, %v2484, %v2437
      %v2486 = vsel %vm792, %v2485, %v2441
      %v2487 = vsel %vm794, %v2486, %v2445
      %v2488 = vsel %vm796, %v2487, %v2449
      %v2489 = vsel %vm798, %v2488, %v2453
      %v2490 = vsel %vm786, %v2399, %v2457
      %v2491 = vsel %vm788, %v2490, %v2461
      %v2492 = vsel %vm790, %v2491, %v2465
      %v2493 = vsel %vm792, %v2492, %v2469
      %v2494 = vsel %vm794, %v2493, %v2473
      %v2495 = vsel %vm796, %v2494, %v2477
      %v2496 = vsel %vm798, %v2495, %v2481
      %v2499 = vrot.slane %v2489, 4
      %v2500 = vrot.slane %v2496, 4
      %2503 = vst [vmem:[#allocation3 + $0x30] sm:$0xf0] %v2499
      %2504 = vst [vmem:[#allocation3 + $0x38] sm:$0xf0] %v2500
      %v2505 = vld [vmem:[#allocation2 + $0x2] sm:$0xff]
      %v2506 = vld [vmem:[#allocation2 + $0xa] sm:$0xff]
      %v2507 = vld [vmem:[#allocation2 + $0x1a] sm:$0xff]
      %v2508 = vld [vmem:[#allocation2 + $0x22] sm:$0xff]
      %v2509 = vld [vmem:[#allocation2 + $0x32] sm:$0xff]
      %v2510 = vld [vmem:[#allocation2 + $0x3a] sm:$0xff]
      %v2511 = vld [vmem:[#allocation2 + $0x4a] sm:$0xff]
      %v2512 = vld [vmem:[#allocation2 + $0x52] sm:$0xff]
      %2521 = vrot.lane.b32.xlu0 %v2505, 126
      %v2522 = vpop.permute.xlu0 %2521
      %2523 = vrot.lane.b32.xlu0 %v2506, 126
      %v2524 = vpop.permute.xlu0 %2523
      %2525 = vrot.lane.b32.xlu0 %v2507, 126
      %v2526 = vpop.permute.xlu0 %2525
      %2527 = vrot.lane.b32.xlu0 %v2508, 126
      %v2528 = vpop.permute.xlu0 %2527
      %2529 = vrot.lane.b32.xlu0 %v2509, 126
      %v2530 = vpop.permute.xlu0 %2529
      %2531 = vrot.lane.b32.xlu0 %v2510, 126
      %v2532 = vpop.permute.xlu0 %2531
      %2533 = vrot.lane.b32.xlu0 %v2511, 126
      %v2534 = vpop.permute.xlu0 %2533
      %2535 = vrot.lane.b32.xlu0 %v2512, 126
      %v2536 = vpop.permute.xlu0 %2535
      %v2545 = vcombine.low %v2522, %v2530
      %v2546 = vcombine.high %v2522, %v2530
      %v2548 = vunpack.c.l.s4 1983009808
      %v2549 = vunpack.c.0.s8 %v2548
      %v2550 = vlaneseq
      %v2551 = vshrl.u32 %v2550, 7
      %v2552 = vsub.s32 %v2549, %v2551
      %v2553 = vrot.slane %v2545, %v2552
      %v2555 = vunpack.c.l.s4 1983009808
      %v2556 = vunpack.c.0.s8 %v2555
      %v2557 = vlaneseq
      %v2558 = vshrl.u32 %v2557, 7
      %v2559 = vsub.s32 %v2556, %v2558
      %v2560 = vrot.slane %v2546, %v2559
      %v2561 = vcombine.low %v2526, %v2534
      %v2562 = vcombine.high %v2526, %v2534
      %v2564 = vunpack.c.l.s4 1983009808
      %v2565 = vunpack.c.0.s8 %v2564
      %v2566 = vlaneseq
      %v2567 = vshrl.u32 %v2566, 7
      %v2568 = vsub.s32 %v2565, %v2567
      %v2569 = vrot.slane %v2561, %v2568
      %v2571 = vunpack.c.l.s4 1983009808
      %v2572 = vunpack.c.0.s8 %v2571
      %v2573 = vlaneseq
      %v2574 = vshrl.u32 %v2573, 7
      %v2575 = vsub.s32 %v2572, %v2574
      %v2576 = vrot.slane %v2562, %v2575
      %v2577 = vcombine.low %v2553, %v2569
      %v2578 = vcombine.high %v2553, %v2569
      %v2580 = vunpack.c.l.s4 1934713408
      %v2581 = vunpack.c.0.s8 %v2580
      %v2582 = vlaneseq
      %v2583 = vshrl.u32 %v2582, 7
      %v2584 = vsub.s32 %v2581, %v2583
      %v2585 = vrot.slane %v2577, %v2584
      %v2587 = vunpack.c.l.s4 1934713408
      %v2588 = vunpack.c.0.s8 %v2587
      %v2589 = vlaneseq
      %v2590 = vshrl.u32 %v2589, 7
      %v2591 = vsub.s32 %v2588, %v2590
      %v2592 = vrot.slane %v2578, %v2591
      %v2593 = vcombine.low %v2560, %v2576
      %v2594 = vcombine.high %v2560, %v2576
      %v2596 = vunpack.c.l.s4 1934713408
      %v2597 = vunpack.c.0.s8 %v2596
      %v2598 = vlaneseq
      %v2599 = vshrl.u32 %v2598, 7
      %v2600 = vsub.s32 %v2597, %v2599
      %v2601 = vrot.slane %v2593, %v2600
      %v2603 = vunpack.c.l.s4 1934713408
      %v2604 = vunpack.c.0.s8 %v2603
      %v2605 = vlaneseq
      %v2606 = vshrl.u32 %v2605, 7
      %v2607 = vsub.s32 %v2604, %v2606
      %v2608 = vrot.slane %v2594, %v2607
      %v2609 = vcombine.high %v2585, 0.0
      %v2610 = vcombine.high %v2592, 0.0
      %v2611 = vcombine.high %v2601, 0.0
      %v2612 = vcombine.high %v2608, 0.0
      %v2613 = vcombine.low %v2524, %v2532
      %v2614 = vcombine.high %v2524, %v2532
      %v2616 = vunpack.c.l.s4 1983009808
      %v2617 = vunpack.c.0.s8 %v2616
      %v2618 = vlaneseq
      %v2619 = vshrl.u32 %v2618, 7
      %v2620 = vsub.s32 %v2617, %v2619
      %v2621 = vrot.slane %v2613, %v2620
      %v2623 = vunpack.c.l.s4 1983009808
      %v2624 = vunpack.c.0.s8 %v2623
      %v2625 = vlaneseq
      %v2626 = vshrl.u32 %v2625, 7
      %v2627 = vsub.s32 %v2624, %v2626
      %v2628 = vrot.slane %v2614, %v2627
      %v2629 = vcombine.low %v2528, %v2536
      %v2630 = vcombine.high %v2528, %v2536
      %v2632 = vunpack.c.l.s4 1983009808
      %v2633 = vunpack.c.0.s8 %v2632
      %v2634 = vlaneseq
      %v2635 = vshrl.u32 %v2634, 7
      %v2636 = vsub.s32 %v2633, %v2635
      %v2637 = vrot.slane %v2629, %v2636
      %v2639 = vunpack.c.l.s4 1983009808
      %v2640 = vunpack.c.0.s8 %v2639
      %v2641 = vlaneseq
      %v2642 = vshrl.u32 %v2641, 7
      %v2643 = vsub.s32 %v2640, %v2642
      %v2644 = vrot.slane %v2630, %v2643
      %v2645 = vcombine.low %v2621, %v2637
      %v2646 = vcombine.high %v2621, %v2637
      %v2648 = vunpack.c.l.s4 1934713408
      %v2649 = vunpack.c.0.s8 %v2648
      %v2650 = vlaneseq
      %v2651 = vshrl.u32 %v2650, 7
      %v2652 = vsub.s32 %v2649, %v2651
      %v2653 = vrot.slane %v2645, %v2652
      %v2655 = vunpack.c.l.s4 1934713408
      %v2656 = vunpack.c.0.s8 %v2655
      %v2657 = vlaneseq
      %v2658 = vshrl.u32 %v2657, 7
      %v2659 = vsub.s32 %v2656, %v2658
      %v2660 = vrot.slane %v2646, %v2659
      %v2661 = vcombine.low %v2628, %v2644
      %v2662 = vcombine.high %v2628, %v2644
      %v2664 = vunpack.c.l.s4 1934713408
      %v2665 = vunpack.c.0.s8 %v2664
      %v2666 = vlaneseq
      %v2667 = vshrl.u32 %v2666, 7
      %v2668 = vsub.s32 %v2665, %v2667
      %v2669 = vrot.slane %v2661, %v2668
      %v2671 = vunpack.c.l.s4 1934713408
      %v2672 = vunpack.c.0.s8 %v2671
      %v2673 = vlaneseq
      %v2674 = vshrl.u32 %v2673, 7
      %v2675 = vsub.s32 %v2672, %v2674
      %v2676 = vrot.slane %v2662, %v2675
      %v2677 = vcombine.high %v2653, 0.0
      %v2678 = vcombine.high %v2660, 0.0
      %v2679 = vcombine.high %v2669, 0.0
      %v2680 = vcombine.high %v2676, 0.0
      %2682 = vrot.lane.b32.xlu0 %v2609, 16
      %v2683 = vpop.permute.xlu0 %2682
      %2686 = vrot.lane.b32.xlu0 %v2592, 32
      %v2687 = vpop.permute.xlu0 %2686
      %2690 = vrot.lane.b32.xlu0 %v2610, 48
      %v2691 = vpop.permute.xlu0 %2690
      %2694 = vrot.lane.b32.xlu0 %v2601, 64
      %v2695 = vpop.permute.xlu0 %2694
      %2698 = vrot.lane.b32.xlu0 %v2611, 80
      %v2699 = vpop.permute.xlu0 %2698
      %2702 = vrot.lane.b32.xlu0 %v2608, 96
      %v2703 = vpop.permute.xlu0 %2702
      %2706 = vrot.lane.b32.xlu0 %v2612, 112
      %v2707 = vpop.permute.xlu0 %2706
      %2710 = vrot.lane.b32.xlu0 %v2677, 16
      %v2711 = vpop.permute.xlu0 %2710
      %2714 = vrot.lane.b32.xlu0 %v2660, 32
      %v2715 = vpop.permute.xlu0 %2714
      %2718 = vrot.lane.b32.xlu0 %v2678, 48
      %v2719 = vpop.permute.xlu0 %2718
      %2722 = vrot.lane.b32.xlu0 %v2669, 64
      %v2723 = vpop.permute.xlu0 %2722
      %2726 = vrot.lane.b32.xlu0 %v2679, 80
      %v2727 = vpop.permute.xlu0 %2726
      %2730 = vrot.lane.b32.xlu0 %v2676, 96
      %v2731 = vpop.permute.xlu0 %2730
      %2734 = vrot.lane.b32.xlu0 %v2680, 112
      %v2735 = vpop.permute.xlu0 %2734
      %v2737 = vsel %vm786, %v2585, %v2683
      %v2738 = vsel %vm788, %v2737, %v2687
      %v2739 = vsel %vm790, %v2738, %v2691
      %v2740 = vsel %vm792, %v2739, %v2695
      %v2741 = vsel %vm794, %v2740, %v2699
      %v2742 = vsel %vm796, %v2741, %v2703
      %v2743 = vsel %vm798, %v2742, %v2707
      %v2744 = vsel %vm786, %v2653, %v2711
      %v2745 = vsel %vm788, %v2744, %v2715
      %v2746 = vsel %vm790, %v2745, %v2719
      %v2747 = vsel %vm792, %v2746, %v2723
      %v2748 = vsel %vm794, %v2747, %v2727
      %v2749 = vsel %vm796, %v2748, %v2731
      %v2750 = vsel %vm798, %v2749, %v2735
      %2751 = vst [vmem:[#allocation3 + $0x40] sm:$0xf] %v2743
      %2752 = vst [vmem:[#allocation3 + $0x48] sm:$0xf] %v2750
      %v2753 = vld [vmem:[%s2] sm:$0x3]
      %v2754 = vld [vmem:[#allocation3] sm:$0xff]
      %v2755 = vld [vmem:[#allocation3 + $0x8] sm:$0xff]
      %v2756 = vld [vmem:[#allocation3 + $0x10] sm:$0xff]
      %v2757 = vld [vmem:[#allocation3 + $0x18] sm:$0xff]
      %v2758 = vld [vmem:[#allocation3 + $0x20] sm:$0xff]
      %v2759 = vld [vmem:[#allocation3 + $0x28] sm:$0xff]
      %v2760 = vld [vmem:[#allocation3 + $0x30] sm:$0xff]
      %v2761 = vld [vmem:[#allocation3 + $0x38] sm:$0xff]
      %v2762 = vld [vmem:[#allocation3 + $0x40] sm:$0xf]
      %v2763 = vld [vmem:[#allocation3 + $0x48] sm:$0xf]
      %v2764 = vpack.c.bf16 %v2756, %v2754
      %v2765 = vpack.c.bf16 %v2757, %v2755
      %v2766 = vpack.c.bf16 %v2760, %v2758
      %v2767 = vpack.c.bf16 %v2761, %v2759
      %v2768 = vpack.c.bf16 %v2762, %v2762
      %v2769 = vpack.c.bf16 %v2763, %v2763
      %v2770 = vld [vmem:[%s3] sm:$0xf]
      %2772 = vset.pattern.permute.xlu0 0
      %2773 = vperm.xlu0 %2772, %v2770
      %v2774 = vpop.permute.xlu0 %2773
      %vm2776 = vcmask 293888
      %v2778 = vsel %vm2776, %v2753, 0
      %vm2780 = vcmask 1041408
      %v2782 = vsel %vm2780, %v2768, 0
      %v2785 = vsel %vm2780, %v2769, 0
      %2787 = vmatprep.subr.bf16.mxu0 %v2765
      %2788 = vmatpush1.bf16.msra.mxu0 %v2764
      %2789 = vmatprep.subr.bf16.mxu0 %v2767
      %2790 = vmatpush1.bf16.msra.mxu0 %v2766
      %2791 = vmatprep.subr.bf16.mxu0 %v2785
      %2792 = vmatpush1.bf16.msra.mxu0 %v2782
      %2793 = vmatprep.subr.bf16.mxu0 0
      %2794 = vmatpush1.bf16.msra.mxu0 0
      %2795 = vmatprep.subr.bf16.mxu0 0
      %2796 = vmatpush1.bf16.msra.mxu0 0
      %2797 = vmatprep.subr.bf16.mxu0 0
      %2798 = vmatpush1.bf16.msra.mxu0 0
      %2799 = vmatprep.subr.bf16.mxu0 0
      %2800 = vmatpush1.bf16.msra.mxu0 0
      %2801 = vmatprep.subr.bf16.mxu0 0
      %2802 = vmatpush1.bf16.msra.mxu0 0
      %2803 = vmatprep.subr.bf16.mxu0 0
      %2804 = vmatpush1.bf16.msra.mxu0 0
      %2805 = vmatprep.subr.bf16.mxu0 0
      %2806 = vmatpush1.bf16.msra.mxu0 0
      %2807 = vmatprep.subr.bf16.mxu0 0
      %2808 = vmatpush1.bf16.msra.mxu0 0
      %2809 = vmatprep.subr.bf16.mxu0 0
      %2810 = vmatpush1.bf16.msra.mxu0 0
      %2811 = vmatprep.subr.bf16.mxu0 0
      %2812 = vmatpush1.bf16.msra.mxu0 0
      %2813 = vmatprep.subr.bf16.mxu0 0
      %2814 = vmatpush1.bf16.msra.mxu0 0
      %2815 = vmatprep.subr.bf16.mxu0 0
      %2816 = vmatpush1.bf16.msra.mxu0 0
      %2817 = vmatprep.subr.bf16.mxu0 0
      %2818 = vmatpush1.bf16.msra.mxu0 0
      %2819 = vmatprep.mubr.bf16.mxu0 0
      %2820 = vmatmul.mubr.bf16.gmra.mrb[0].mxu0 %v2778
      %v2821 = vpop.f32.mrb[0].mxu0
      %v2822 = vadd.f32 %v2774, %v2821
      %v2823 = vpop.f32.mrb[0].mxu0
      %v2824 = vadd.f32 %v2774, %v2823
      %v2825 = vpop.f32.mrb[0].mxu0
      %v2826 = vpop.f32.mrb[0].mxu0
      %2827 = vdwg.mxu0
      %v2828 = vmax.f32 %v2822, 0.0
      %v2829 = vmax.f32 %v2824, 0.0
      %v2832 = vcombine.low %v2828, %v2829
      %2834 = vst [vmem:[%s289] sm:$0xff] %v2832
      %v2835 = vld [vmem:[%s4] sm:$0xf]
      %2837 = vset.pattern.permute.xlu0 0
      %2838 = vperm.xlu0 %2837, %v2835
      %v2839 = vpop.permute.xlu0 %2838
      %v2841 = vmul.f32 %v2828, %v2839
      %v2842 = vmul.f32 %v2829, %v2839
      %vm2843 = vcmask 1043456
      %v2844 = vsel %vm2843, %v2841, inf
      %v2845 = vsel %vm2843, %v2842, inf
      %v2846 = vmin.f32 %v2844, %v2845
      %2847 = vmin.xlane.f32.xlu0 %v2846
      %v2848 = vpop.xlane.xlu0 %2847
      %v2849 = vrot.slane %v2848, 4
      %v2850 = vmin.f32 %v2848, %v2849
      %v2851 = vrot.slane %v2850, 2
      %v2852 = vmin.f32 %v2850, %v2851
      %v2853 = vrot.slane %v2852, 1
      %v2854 = vmin.f32 %v2852, %v2853
      %s2855 = vtos %v2854
      %v2856 = vstv %s2855
      %2857 = vst [vmem:[%s292] sm:$0x1] %v2856
      %v2858 = vsel %vm2843, %v2841, -inf
      %v2859 = vsel %vm2843, %v2842, -inf
      %v2860 = vmax.f32 %v2858, %v2859
      %2861 = vmax.xlane.f32.xlu0 %v2860
      %v2862 = vpop.xlane.xlu0 %2861
      %v2863 = vrot.slane %v2862, 4
      %v2864 = vmax.f32 %v2862, %v2863
      %v2865 = vrot.slane %v2864, 2
      %v2866 = vmax.f32 %v2864, %v2865
      %v2867 = vrot.slane %v2866, 1
      %v2868 = vmax.f32 %v2866, %v2867
      %s2869 = vtos %v2868
      %v2870 = vstv %s2869
      %2871 = vst [vmem:[%s295] sm:$0x1] %v2870
      %p2872 = scmp.lt.s32.totalorder %s19, 1
      %s2873 = scalar_select %p2872, %s19, 1
      %s2874 = smul.addr %s2873, 2
      %s2875 = smul.addr %s2874, 4
      %s2876 = scalar_lea.vmem %s5, %s2875
      %p2877 = scmp.lt.s32.totalorder %s19, 1
      %s2878 = scalar_select %p2877, %s19, 1
      %s2879 = scalar_lea.vmem %s6, %s2878
      %p2880 = scmp.lt.s32.totalorder %s19, 1
      %s2881 = scalar_select %p2880, %s19, 1
      %s2882 = scalar_lea.vmem %s7, %s2881
      // Predicated region
      $region41: #{q_resblockbn_forward.5} parent=39 // pred_check
        %p2883 = pneg %p147
      $region42: #{q_resblockbn_forward.5} parent=39 // pred_check_branch
        %2885 = sbr.rel (%p2883) target = $region44
      $region43: #{q_resblockbn_forward.5} parent=39 // pred_region
        _
      $region44: #{q_resblockbn_forward.5} parent=39 // pred_fallthru
        _
      // Predicated region
      $region45: #{q_resblockbn_forward.5} parent=39 // pred_check
        %p2886 = pneg %p173
      $region46: #{q_resblockbn_forward.5} parent=39 // pred_check_branch
        %2888 = sbr.rel (%p2886) target = $region48
      $region47: #{q_resblockbn_forward.5} parent=39 // pred_region
        _
      $region48: #{q_resblockbn_forward.5} parent=39 // pred_fallthru
        _
      // Predicated region
      $region49: #{q_resblockbn_forward.5} parent=39 // pred_check
        %p2889 = pneg %p199
      $region50: #{q_resblockbn_forward.5} parent=39 // pred_check_branch
        %2891 = sbr.rel (%p2889) target = $region52
      $region51: #{q_resblockbn_forward.5} parent=39 // pred_region
        _
      $region52: #{q_resblockbn_forward.5} parent=39 // pred_fallthru
        _
    $region40: #{q_resblockbn_forward.5} parent=5 // pred_fallthru
      _
    %p2892 = scmp.le.s32.totalorder 2, %s14
    // Predicated region
    $region53: #{q_resblockbn_forward.5} parent=5 // pred_check
      %p2893 = pneg %p2892
    $region54: #{q_resblockbn_forward.5} parent=5 // pred_check_branch
      %2895 = sbr.rel (%p2893) target = $region56
    $region55: #{q_resblockbn_forward.5} parent=5 // pred_region
      %s2896 = ssub.s32 %s14, 2
      // Predicated region
      $region57: #{q_resblockbn_forward.5} parent=55 // pred_check
        %p2897 = pneg %p153
      $region58: #{q_resblockbn_forward.5} parent=55 // pred_check_branch
        %2899 = sbr.rel (%p2897) target = $region60
      $region59: #{q_resblockbn_forward.5} parent=55 // pred_region
        %p2900 = scmp.lt.s32.totalorder %s20, 1
        %s2901 = scalar_select %p2900, %s20, 1
        %s2902 = smul.addr %s2901, 2
        %s2903 = smul.addr %s2902, 4
        %s2904 = scalar_lea.vmem %s5, %s2903
      $region60: #{q_resblockbn_forward.5} parent=55 // pred_fallthru
        _
      // Predicated region
      $region61: #{q_resblockbn_forward.5} parent=55 // pred_check
        %p2905 = pneg %p179
      $region62: #{q_resblockbn_forward.5} parent=55 // pred_check_branch
        %2907 = sbr.rel (%p2905) target = $region64
      $region63: #{q_resblockbn_forward.5} parent=55 // pred_region
        %p2908 = scmp.lt.s32.totalorder %s20, 1
        %s2909 = scalar_select %p2908, %s20, 1
        %s2910 = scalar_lea.vmem %s6, %s2909
      $region64: #{q_resblockbn_forward.5} parent=55 // pred_fallthru
        _
      // Predicated region
      $region65: #{q_resblockbn_forward.5} parent=55 // pred_check
        %p2911 = pneg %p205
      $region66: #{q_resblockbn_forward.5} parent=55 // pred_check_branch
        %2913 = sbr.rel (%p2911) target = $region68
      $region67: #{q_resblockbn_forward.5} parent=55 // pred_region
        %p2914 = scmp.lt.s32.totalorder %s20, 1
        %s2915 = scalar_select %p2914, %s20, 1
        %s2916 = scalar_lea.vmem %s7, %s2915
      $region68: #{q_resblockbn_forward.5} parent=55 // pred_fallthru
        _
    $region56: #{q_resblockbn_forward.5} parent=5 // pred_fallthru
      _
  $region6: #{q_resblockbn_forward.5} parent=0 // loop_footer
    %s18 = sadd.s32 1, %s14
  $region7: #{q_resblockbn_forward.5} parent=0 // loop_footer_branch
    %13 = sbr.rel target = $region3
  $region8: #{q_resblockbn_forward.5} parent=0 // loop_exit
    _

// kernel: q_resblockbn_forward.6
$region0: #{q_resblockbn_forward.6}
  #allocation0 [shape = 'u32[]', space=smem, size = 0x4, offset = 0x4, fixed_abs, tag = 'smem constant byte address 0x4 - core index']
  #allocation1 [shape = 'u32[144,128]{1,0:T(1,128)}', space=vmem, size = 0x12000, scoped, tag = 'internal scratch']
  #allocation2 [shape = 'f32[4,18,18]{2,1,0:T(8,128)}', space=vmem, size = 0xc000, scoped, tag = 'scratch operand']
  #allocation3 [shape = 'f32[36,256]{1,0:T(8,128)}', space=vmem, size = 0xa000, scoped, tag = 'scratch operand']
  %s0 = inlined_call_operand.vmem [shape: f32[2,4,256], index: 0, kind: input, shape index: {}]
  %s1 = inlined_call_operand.vmem [shape: f32[2,4,256], index: 1, kind: input, shape index: {}]
  %s2 = inlined_call_operand.vmem [shape: f32[4,2], index: 2, kind: input, shape index: {}]
  %s3 = inlined_call_operand.vmem [shape: bf16[4,36], index: 3, kind: input, shape index: {}]
  %s4 = inlined_call_operand.vmem [shape: f32[4,1], index: 4, kind: input, shape index: {}]
  %s5 = inlined_call_operand.vmem [shape: f32[4,1], index: 5, kind: input, shape index: {}]
  %s6 = inlined_call_operand.vmem [shape: f32[2,4,256], index: 6, kind: output, shape index: {0}]
  %s7 = inlined_call_operand.vmem [shape: f32[2,1,128], index: 7, kind: output, shape index: {1}]
  %s8 = inlined_call_operand.vmem [shape: f32[2,1,128], index: 8, kind: output, shape index: {2}]
  %9 = xla_tuple %s6, %s7, %s8
  %s10 = sld [smem:[#allocation0]]
  $region73: #{q_resblockbn_forward.6} parent=0
    _
  %s12 = ssub.s32 1, %s10
  %s13 = scalar_select 0, %s12, %s10
  loop: start=0, step=1, limit=4
  $region2: #{q_resblockbn_forward.6} parent=0 // loop_pre_header
    _
  $region3: #{q_resblockbn_forward.6} parent=0 // loop_header
    %s15 = sphi 0, %s19
    %p16 = scmp.ge.s32.totalorder %s15, 4
    %s25 = sphi 0, %s27
    %s28 = sphi 0, %s25
    %s29 = sphi 0, %s28
    %s45 = sphi 0, %s29
    %s51 = sphi 0, %s53
    %s54 = sphi 0, %s51
    %s55 = sphi 0, %s54
    %s71 = sphi 0, %s55
    %s75 = sphi 0, %s75
    %s77 = sphi 0, %s75
    %s78 = sphi 0, %s77
    %s92 = sphi 0, %s78
    %s96 = sphi 0, %s96
    %s98 = sphi 0, %s96
    %s99 = sphi 0, %s98
    %s113 = sphi 0, %s99
    %s117 = sphi 0, %s117
    %s119 = sphi 0, %s117
    %s120 = sphi 0, %s119
    %s134 = sphi 0, %s120
    %s138 = sphi 0, %s138
    %s140 = sphi 0, %s138
    %s141 = sphi 0, %s140
    %s155 = sphi 0, %s141
    %s161 = sphi 0, %s163
    %s164 = sphi 0, %s161
    %s165 = sphi 0, %s164
    %s181 = sphi 0, %s165
    %s187 = sphi 0, %s189
    %s190 = sphi 0, %s187
    %s191 = sphi 0, %s190
    %s207 = sphi 0, %s191
    %s213 = sphi 0, %s215
    %s216 = sphi 0, %s213
    %s217 = sphi 0, %s216
    %s233 = sphi 0, %s217
  $region4: #{q_resblockbn_forward.6} parent=0 // loop_header_branch
    %18 = sbr.rel (%p16) target = $region8
  $region5: #{q_resblockbn_forward.6} parent=0 // loop_body
    %s20 = ssub.s32 %s15, 1
    %s21 = ssub.s32 %s15, 2
    %s22 = sadd.s32 %s15, 1
    %s23 = ssub.s32 %s15, %s22
    %p24 = scmp.eq.s32.totalorder %s23, 0
    %s26 = sadd.s32 %s25, 1
    %s27 = scalar_select %p24, %s25, %s26
    %p30 = pneg %p24
    %p31 = scmp.eq.s32.totalorder %s15, 1
    %p32 = por %p30, %p31
    %p33 = scmp.ne.s32.totalorder %s25, %s28
    %p34 = scmp.eq.s32.totalorder %s15, 0
    %p35 = por %p33, %p34
    %p36 = scmp.ne.s32.totalorder %s25, %s28
    %p37 = scmp.eq.s32.totalorder %s20, 1
    %p38 = por %p36, %p37
    %p39 = scmp.ne.s32.totalorder %s28, %s29
    %p40 = scmp.eq.s32.totalorder %s20, 0
    %p41 = por %p39, %p40
    %p42 = scmp.ne.s32.totalorder %s28, %s29
    %p43 = scmp.eq.s32.totalorder %s21, 1
    %p44 = por %p42, %p43
    %p46 = scmp.ne.s32.totalorder %s29, %s45
    %p47 = scmp.eq.s32.totalorder %s21, 0
    %p48 = por %p46, %p47
    %s49 = ssub.s32 %s15, %s22
    %p50 = scmp.eq.s32.totalorder %s49, 0
    %s52 = sadd.s32 %s51, 1
    %s53 = scalar_select %p50, %s51, %s52
    %p56 = pneg %p50
    %p57 = scmp.eq.s32.totalorder %s15, 1
    %p58 = por %p56, %p57
    %p59 = scmp.ne.s32.totalorder %s51, %s54
    %p60 = scmp.eq.s32.totalorder %s15, 0
    %p61 = por %p59, %p60
    %p62 = scmp.ne.s32.totalorder %s51, %s54
    %p63 = scmp.eq.s32.totalorder %s20, 1
    %p64 = por %p62, %p63
    %p65 = scmp.ne.s32.totalorder %s54, %s55
    %p66 = scmp.eq.s32.totalorder %s20, 0
    %p67 = por %p65, %p66
    %p68 = scmp.ne.s32.totalorder %s54, %s55
    %p69 = scmp.eq.s32.totalorder %s21, 1
    %p70 = por %p68, %p69
    %p72 = scmp.ne.s32.totalorder %s55, %s71
    %p73 = scmp.eq.s32.totalorder %s21, 0
    %p74 = por %p72, %p73
    %s76 = sadd.s32 %s75, 1
    %p79 = scmp.eq.s32.totalorder %s15, 1
    %p80 = scmp.ne.s32.totalorder %s75, %s77
    %p81 = scmp.eq.s32.totalorder %s15, 0
    %p82 = por %p80, %p81
    %p83 = scmp.ne.s32.totalorder %s75, %s77
    %p84 = scmp.eq.s32.totalorder %s20, 1
    %p85 = por %p83, %p84
    %p86 = scmp.ne.s32.totalorder %s77, %s78
    %p87 = scmp.eq.s32.totalorder %s20, 0
    %p88 = por %p86, %p87
    %p89 = scmp.ne.s32.totalorder %s77, %s78
    %p90 = scmp.eq.s32.totalorder %s21, 1
    %p91 = por %p89, %p90
    %p93 = scmp.ne.s32.totalorder %s78, %s92
    %p94 = scmp.eq.s32.totalorder %s21, 0
    %p95 = por %p93, %p94
    %s97 = sadd.s32 %s96, 1
    %p100 = scmp.eq.s32.totalorder %s15, 1
    %p101 = scmp.ne.s32.totalorder %s96, %s98
    %p102 = scmp.eq.s32.totalorder %s15, 0
    %p103 = por %p101, %p102
    %p104 = scmp.ne.s32.totalorder %s96, %s98
    %p105 = scmp.eq.s32.totalorder %s20, 1
    %p106 = por %p104, %p105
    %p107 = scmp.ne.s32.totalorder %s98, %s99
    %p108 = scmp.eq.s32.totalorder %s20, 0
    %p109 = por %p107, %p108
    %p110 = scmp.ne.s32.totalorder %s98, %s99
    %p111 = scmp.eq.s32.totalorder %s21, 1
    %p112 = por %p110, %p111
    %p114 = scmp.ne.s32.totalorder %s99, %s113
    %p115 = scmp.eq.s32.totalorder %s21, 0
    %p116 = por %p114, %p115
    %s118 = sadd.s32 %s117, 1
    %p121 = scmp.eq.s32.totalorder %s15, 1
    %p122 = scmp.ne.s32.totalorder %s117, %s119
    %p123 = scmp.eq.s32.totalorder %s15, 0
    %p124 = por %p122, %p123
    %p125 = scmp.ne.s32.totalorder %s117, %s119
    %p126 = scmp.eq.s32.totalorder %s20, 1
    %p127 = por %p125, %p126
    %p128 = scmp.ne.s32.totalorder %s119, %s120
    %p129 = scmp.eq.s32.totalorder %s20, 0
    %p130 = por %p128, %p129
    %p131 = scmp.ne.s32.totalorder %s119, %s120
    %p132 = scmp.eq.s32.totalorder %s21, 1
    %p133 = por %p131, %p132
    %p135 = scmp.ne.s32.totalorder %s120, %s134
    %p136 = scmp.eq.s32.totalorder %s21, 0
    %p137 = por %p135, %p136
    %s139 = sadd.s32 %s138, 1
    %p142 = scmp.eq.s32.totalorder %s15, 1
    %p143 = scmp.ne.s32.totalorder %s138, %s140
    %p144 = scmp.eq.s32.totalorder %s15, 0
    %p145 = por %p143, %p144
    %p146 = scmp.ne.s32.totalorder %s138, %s140
    %p147 = scmp.eq.s32.totalorder %s20, 1
    %p148 = por %p146, %p147
    %p149 = scmp.ne.s32.totalorder %s140, %s141
    %p150 = scmp.eq.s32.totalorder %s20, 0
    %p151 = por %p149, %p150
    %p152 = scmp.ne.s32.totalorder %s140, %s141
    %p153 = scmp.eq.s32.totalorder %s21, 1
    %p154 = por %p152, %p153
    %p156 = scmp.ne.s32.totalorder %s141, %s155
    %p157 = scmp.eq.s32.totalorder %s21, 0
    %p158 = por %p156, %p157
    %s159 = ssub.s32 %s15, %s22
    %p160 = scmp.eq.s32.totalorder %s159, 0
    %s162 = sadd.s32 %s161, 1
    %s163 = scalar_select %p160, %s161, %s162
    %p166 = pneg %p160
    %p167 = scmp.eq.s32.totalorder %s15, 1
    %p168 = por %p166, %p167
    %p169 = scmp.ne.s32.totalorder %s161, %s164
    %p170 = scmp.eq.s32.totalorder %s15, 0
    %p171 = por %p169, %p170
    %p172 = scmp.ne.s32.totalorder %s161, %s164
    %p173 = scmp.eq.s32.totalorder %s20, 1
    %p174 = por %p172, %p173
    %p175 = scmp.ne.s32.totalorder %s164, %s165
    %p176 = scmp.eq.s32.totalorder %s20, 0
    %p177 = por %p175, %p176
    %p178 = scmp.ne.s32.totalorder %s164, %s165
    %p179 = scmp.eq.s32.totalorder %s21, 1
    %p180 = por %p178, %p179
    %p182 = scmp.ne.s32.totalorder %s165, %s181
    %p183 = scmp.eq.s32.totalorder %s21, 0
    %p184 = por %p182, %p183
    %s185 = ssub.s32 %s15, %s22
    %p186 = scmp.eq.s32.totalorder %s185, 0
    %s188 = sadd.s32 %s187, 1
    %s189 = scalar_select %p186, %s187, %s188
    %p192 = pneg %p186
    %p193 = scmp.eq.s32.totalorder %s15, 1
    %p194 = por %p192, %p193
    %p195 = scmp.ne.s32.totalorder %s187, %s190
    %p196 = scmp.eq.s32.totalorder %s15, 0
    %p197 = por %p195, %p196
    %p198 = scmp.ne.s32.totalorder %s187, %s190
    %p199 = scmp.eq.s32.totalorder %s20, 1
    %p200 = por %p198, %p199
    %p201 = scmp.ne.s32.totalorder %s190, %s191
    %p202 = scmp.eq.s32.totalorder %s20, 0
    %p203 = por %p201, %p202
    %p204 = scmp.ne.s32.totalorder %s190, %s191
    %p205 = scmp.eq.s32.totalorder %s21, 1
    %p206 = por %p204, %p205
    %p208 = scmp.ne.s32.totalorder %s191, %s207
    %p209 = scmp.eq.s32.totalorder %s21, 0
    %p210 = por %p208, %p209
    %s211 = ssub.s32 %s15, %s22
    %p212 = scmp.eq.s32.totalorder %s211, 0
    %s214 = sadd.s32 %s213, 1
    %s215 = scalar_select %p212, %s213, %s214
    %p218 = pneg %p212
    %p219 = scmp.eq.s32.totalorder %s15, 1
    %p220 = por %p218, %p219
    %p221 = scmp.ne.s32.totalorder %s213, %s216
    %p222 = scmp.eq.s32.totalorder %s15, 0
    %p223 = por %p221, %p222
    %p224 = scmp.ne.s32.totalorder %s213, %s216
    %p225 = scmp.eq.s32.totalorder %s20, 1
    %p226 = por %p224, %p225
    %p227 = scmp.ne.s32.totalorder %s216, %s217
    %p228 = scmp.eq.s32.totalorder %s20, 0
    %p229 = por %p227, %p228
    %p230 = scmp.ne.s32.totalorder %s216, %s217
    %p231 = scmp.eq.s32.totalorder %s21, 1
    %p232 = por %p230, %p231
    %p234 = scmp.ne.s32.totalorder %s217, %s233
    %p235 = scmp.eq.s32.totalorder %s21, 0
    %p236 = por %p234, %p235
    %p237 = scmp.le.s32.totalorder 1, %s15
    %p238 = scmp.lt.s32.totalorder %s15, 3
    %p239 = pnand %p237, %p238
    %p240 = pneg %p239
    // Predicated region
    $region9: #{q_resblockbn_forward.6} parent=5 // pred_check
      _
    $region10: #{q_resblockbn_forward.6} parent=5 // pred_check_branch
      %242 = sbr.rel (%p239) target = $region12
    $region11: #{q_resblockbn_forward.6} parent=5 // pred_region
      %s243 = ssub.s32 %s15, 1
      // Predicated region
      $region13: #{q_resblockbn_forward.6} parent=11 // pred_check
        %p244 = pneg %p88
      $region14: #{q_resblockbn_forward.6} parent=11 // pred_check_branch
        %246 = sbr.rel (%p244) target = $region16
      $region15: #{q_resblockbn_forward.6} parent=11 // pred_region
        _
      $region16: #{q_resblockbn_forward.6} parent=11 // pred_fallthru
        _
      // Predicated region
      $region17: #{q_resblockbn_forward.6} parent=11 // pred_check
        %p247 = pneg %p109
      $region18: #{q_resblockbn_forward.6} parent=11 // pred_check_branch
        %249 = sbr.rel (%p247) target = $region20
      $region19: #{q_resblockbn_forward.6} parent=11 // pred_region
        _
      $region20: #{q_resblockbn_forward.6} parent=11 // pred_fallthru
        _
      // Predicated region
      $region21: #{q_resblockbn_forward.6} parent=11 // pred_check
        %p250 = pneg %p130
      $region22: #{q_resblockbn_forward.6} parent=11 // pred_check_branch
        %252 = sbr.rel (%p250) target = $region24
      $region23: #{q_resblockbn_forward.6} parent=11 // pred_region
        _
      $region24: #{q_resblockbn_forward.6} parent=11 // pred_fallthru
        _
      // Predicated region
      $region25: #{q_resblockbn_forward.6} parent=11 // pred_check
        %p253 = pneg %p151
      $region26: #{q_resblockbn_forward.6} parent=11 // pred_check_branch
        %255 = sbr.rel (%p253) target = $region28
      $region27: #{q_resblockbn_forward.6} parent=11 // pred_region
        _
      $region28: #{q_resblockbn_forward.6} parent=11 // pred_fallthru
        _
    $region12: #{q_resblockbn_forward.6} parent=5 // pred_fallthru
      _
    %p256 = scmp.lt.s32.totalorder %s15, 2
    // Predicated region
    $region29: #{q_resblockbn_forward.6} parent=5 // pred_check
      %p257 = pneg %p256
    $region30: #{q_resblockbn_forward.6} parent=5 // pred_check_branch
      %259 = sbr.rel (%p257) target = $region32
    $region31: #{q_resblockbn_forward.6} parent=5 // pred_region
      // Predicated region
      $region33: #{q_resblockbn_forward.6} parent=31 // pred_check
        %p260 = pneg %p35
      $region34: #{q_resblockbn_forward.6} parent=31 // pred_check_branch
        %262 = sbr.rel (%p260) target = $region36
      $region35: #{q_resblockbn_forward.6} parent=31 // pred_region
        %p263 = scmp.lt.s32.totalorder %s15, 1
        %s264 = scalar_select %p263, %s15, 1
        %s265 = smul.addr %s264, 2
        %s266 = smul.addr %s265, 4
        %s267 = scalar_lea.vmem %s0, %s266
      $region36: #{q_resblockbn_forward.6} parent=31 // pred_fallthru
        _
      // Predicated region
      $region37: #{q_resblockbn_forward.6} parent=31 // pred_check
        %p268 = pneg %p61
      $region38: #{q_resblockbn_forward.6} parent=31 // pred_check_branch
        %270 = sbr.rel (%p268) target = $region40
      $region39: #{q_resblockbn_forward.6} parent=31 // pred_region
        %p271 = scmp.lt.s32.totalorder %s15, 1
        %s272 = scalar_select %p271, %s15, 1
        %s273 = smul.addr %s272, 2
        %s274 = smul.addr %s273, 4
        %s275 = scalar_lea.vmem %s1, %s274
      $region40: #{q_resblockbn_forward.6} parent=31 // pred_fallthru
        _
    $region32: #{q_resblockbn_forward.6} parent=5 // pred_fallthru
      _
    %p276 = scmp.le.s32.totalorder 1, %s15
    %p277 = scmp.lt.s32.totalorder %s15, 3
    %p278 = pnand %p276, %p277
    %p279 = pneg %p278
    // Predicated region
    $region41: #{q_resblockbn_forward.6} parent=5 // pred_check
      _
    $region42: #{q_resblockbn_forward.6} parent=5 // pred_check_branch
      %281 = sbr.rel (%p278) target = $region44
    $region43: #{q_resblockbn_forward.6} parent=5 // pred_region
      %s282 = ssub.s32 %s15, 1
      %p283 = scmp.lt.s32.totalorder %s20, 1
      %s284 = scalar_select %p283, %s20, 1
      %s285 = smul.addr %s284, 2
      %s286 = smul.addr %s285, 4
      %s287 = scalar_lea.vmem %s0, %s286
      %p288 = pneg %p41
      %p289 = pneg %p38
      %p290 = scmp.lt.s32.totalorder %s20, 1
      %s291 = scalar_select %p290, %s20, 1
      %s292 = smul.addr %s291, 2
      %s293 = smul.addr %s292, 4
      %s294 = scalar_lea.vmem %s1, %s293
      %p295 = pneg %p67
      %p296 = pneg %p64
      %p297 = pneg %p88
      %p298 = pneg %p85
      %p299 = pneg %p109
      %p300 = pneg %p106
      %p301 = pneg %p130
      %p302 = pneg %p127
      %p303 = pneg %p151
      %p304 = pneg %p148
      %p305 = pneg %p177
      %p306 = pneg %p174
      %p307 = scmp.lt.s32.totalorder %s20, 1
      %s308 = scalar_select %p307, %s20, 1
      %s309 = smul.addr %s308, 2
      %s310 = smul.addr %s309, 4
      %s311 = scalar_lea.vmem %s6, %s310
      %p312 = pneg %p203
      %p313 = pneg %p200
      %p314 = scmp.lt.s32.totalorder %s20, 1
      %s315 = scalar_select %p314, %s20, 1
      %s316 = scalar_lea.vmem %s7, %s315
      %p317 = pneg %p229
      %p318 = pneg %p226
      %p319 = scmp.lt.s32.totalorder %s20, 1
      %s320 = scalar_select %p319, %s20, 1
      %s321 = scalar_lea.vmem %s8, %s320
      %p322 = scmp.lt.s32.totalorder %s20, 1
      %s323 = scalar_select %p322, %s20, 1
      %s324 = smul.addr %s323, 2
      %s325 = smul.addr %s324, 4
      %s326 = scalar_lea.vmem %s0, %s325
      %p327 = scmp.lt.s32.totalorder %s20, 1
      %s328 = scalar_select %p327, %s20, 1
      %s329 = smul.addr %s328, 2
      %s330 = smul.addr %s329, 4
      %s331 = scalar_lea.vmem %s1, %s330
      %p332 = scmp.lt.s32.totalorder %s20, 1
      %s333 = scalar_select %p332, %s20, 1
      %s334 = smul.addr %s333, 2
      %s335 = smul.addr %s334, 4
      %s336 = scalar_lea.vmem %s6, %s335
      %p337 = scmp.lt.s32.totalorder %s20, 1
      %s338 = scalar_select %p337, %s20, 1
      %s339 = scalar_lea.vmem %s7, %s338
      %p340 = scmp.lt.s32.totalorder %s20, 1
      %s341 = scalar_select %p340, %s20, 1
      %s342 = scalar_lea.vmem %s8, %s341
      %v344 = vld [vmem:[%s2] sm:$0xf]
      %v345 = vld [vmem:[%s326] sm:$0xff]
      %347 = vset.pattern.permute.xlu0 0
      %348 = vperm.xlu0 %347, %v344
      %v349 = vpop.permute.xlu0 %348
      %v351 = vunpack.c.l.s4 839922192
      %v352 = vunpack.c.0.s8 %v351
      %v353 = vlaneseq
      %v354 = vshrl.u32 %v353, 7
      %v355 = vsub.s32 %v352, %v354
      %v356 = vrot.slane %v349, %v355
      %v358 = vmul.f32 %v345, %v356
      %v359 = vround.ne.pseudo %v358
      %360 = vset.pattern.permute.xlu0 1
      %361 = vperm.xlu0 %360, %v344
      %v362 = vpop.permute.xlu0 %361
      %v364 = vunpack.c.l.s4 839922192
      %v365 = vunpack.c.0.s8 %v364
      %v366 = vlaneseq
      %v367 = vshrl.u32 %v366, 7
      %v368 = vsub.s32 %v365, %v367
      %v369 = vrot.slane %v362, %v368
      %v371 = vmul.f32 %v359, %v369
      %v372 = vround.ne.pseudo %v371
      %v373 = vmax.f32 %v372, -128.0
      %v374 = vmin.f32 %v373, 127.0
      %vm375 = vcmask 139264
      %376 = vst.msk [vmem:[#allocation2] sm:$0x1] %vm375, 0.0
      %377 = vst.msk [vmem:[#allocation2 + $0x18] sm:$0x1] %vm375, 0.0
      %378 = vst.msk [vmem:[#allocation2 + $0x30] sm:$0x1] %vm375, 0.0
      %379 = vst.msk [vmem:[#allocation2 + $0x48] sm:$0x1] %vm375, 0.0
      %380 = vst.msk [vmem:[#allocation2 + $0x11] sm:$0x1] %vm375, 0.0
      %381 = vst.msk [vmem:[#allocation2 + $0x29] sm:$0x1] %vm375, 0.0
      %382 = vst.msk [vmem:[#allocation2 + $0x41] sm:$0x1] %vm375, 0.0
      %383 = vst.msk [vmem:[#allocation2 + $0x59] sm:$0x1] %vm375, 0.0
      %vm384 = vcmask 7168
      %385 = vst.msk [vmem:[#allocation2 + $0x1] sm:$0xff] %vm384, 0.0
      %386 = vst.msk [vmem:[#allocation2 + $0x9] sm:$0xff] %vm384, 0.0
      %387 = vst.msk [vmem:[#allocation2 + $0x19] sm:$0xff] %vm384, 0.0
      %388 = vst.msk [vmem:[#allocation2 + $0x21] sm:$0xff] %vm384, 0.0
      %389 = vst.msk [vmem:[#allocation2 + $0x31] sm:$0xff] %vm384, 0.0
      %390 = vst.msk [vmem:[#allocation2 + $0x39] sm:$0xff] %vm384, 0.0
      %391 = vst.msk [vmem:[#allocation2 + $0x49] sm:$0xff] %vm384, 0.0
      %392 = vst.msk [vmem:[#allocation2 + $0x51] sm:$0xff] %vm384, 0.0
      %vm393 = vcmask 146568
      %394 = vst.msk [vmem:[#allocation2 + $0x1] sm:$0xff] %vm393, 0.0
      %395 = vst.msk [vmem:[#allocation2 + $0x9] sm:$0xff] %vm393, 0.0
      %396 = vst.msk [vmem:[#allocation2 + $0x19] sm:$0xff] %vm393, 0.0
      %397 = vst.msk [vmem:[#allocation2 + $0x21] sm:$0xff] %vm393, 0.0
      %398 = vst.msk [vmem:[#allocation2 + $0x31] sm:$0xff] %vm393, 0.0
      %399 = vst.msk [vmem:[#allocation2 + $0x39] sm:$0xff] %vm393, 0.0
      %400 = vst.msk [vmem:[#allocation2 + $0x49] sm:$0xff] %vm393, 0.0
      %401 = vst.msk [vmem:[#allocation2 + $0x51] sm:$0xff] %vm393, 0.0
      %v403 = vrot.slane %v374, 4
      %405 = vrot.lane.b32.xlu0 %v374, 112
      %v406 = vpop.permute.xlu0 %405
      %v407 = vrot.slane %v406, 4
      %409 = vrot.lane.b32.xlu0 %v374, 96
      %v410 = vpop.permute.xlu0 %409
      %v411 = vrot.slane %v410, 4
      %413 = vrot.lane.b32.xlu0 %v374, 80
      %v414 = vpop.permute.xlu0 %413
      %v415 = vrot.slane %v414, 4
      %417 = vrot.lane.b32.xlu0 %v374, 64
      %v418 = vpop.permute.xlu0 %417
      %v419 = vrot.slane %v418, 4
      %421 = vrot.lane.b32.xlu0 %v374, 48
      %v422 = vpop.permute.xlu0 %421
      %v423 = vrot.slane %v422, 4
      %425 = vrot.lane.b32.xlu0 %v374, 32
      %v426 = vpop.permute.xlu0 %425
      %v427 = vrot.slane %v426, 4
      %429 = vrot.lane.b32.xlu0 %v374, 16
      %v430 = vpop.permute.xlu0 %429
      %v431 = vrot.slane %v430, 4
      %v440 = vcombine.low %v374, %v410
      %v442 = vunpack.c.l.s4 1983009808
      %v443 = vunpack.c.0.s8 %v442
      %v444 = vlaneseq
      %v445 = vshrl.u32 %v444, 7
      %v446 = vsub.s32 %v443, %v445
      %v447 = vrot.slane %v440, %v446
      %v448 = vcombine.low %v406, %v414
      %v450 = vunpack.c.l.s4 1983009808
      %v451 = vunpack.c.0.s8 %v450
      %v452 = vlaneseq
      %v453 = vshrl.u32 %v452, 7
      %v454 = vsub.s32 %v451, %v453
      %v455 = vrot.slane %v448, %v454
      %v456 = vcombine.low %v447, %v455
      %v457 = vcombine.high %v447, %v455
      %v459 = vunpack.c.l.s4 1934713408
      %v460 = vunpack.c.0.s8 %v459
      %v461 = vlaneseq
      %v462 = vshrl.u32 %v461, 7
      %v463 = vsub.s32 %v460, %v462
      %v464 = vrot.slane %v456, %v463
      %v466 = vunpack.c.l.s4 1934713408
      %v467 = vunpack.c.0.s8 %v466
      %v468 = vlaneseq
      %v469 = vshrl.u32 %v468, 7
      %v470 = vsub.s32 %v467, %v469
      %v471 = vrot.slane %v457, %v470
      %v472 = vcombine.high %v464, 0.0
      %v473 = vcombine.high %v471, 0.0
      %v474 = vcombine.low %v418, %v426
      %v476 = vunpack.c.l.s4 1983009808
      %v477 = vunpack.c.0.s8 %v476
      %v478 = vlaneseq
      %v479 = vshrl.u32 %v478, 7
      %v480 = vsub.s32 %v477, %v479
      %v481 = vrot.slane %v474, %v480
      %v482 = vcombine.low %v422, %v430
      %v484 = vunpack.c.l.s4 1983009808
      %v485 = vunpack.c.0.s8 %v484
      %v486 = vlaneseq
      %v487 = vshrl.u32 %v486, 7
      %v488 = vsub.s32 %v485, %v487
      %v489 = vrot.slane %v482, %v488
      %v490 = vcombine.low %v481, %v489
      %v491 = vcombine.high %v481, %v489
      %v493 = vunpack.c.l.s4 1934713408
      %v494 = vunpack.c.0.s8 %v493
      %v495 = vlaneseq
      %v496 = vshrl.u32 %v495, 7
      %v497 = vsub.s32 %v494, %v496
      %v498 = vrot.slane %v490, %v497
      %v500 = vunpack.c.l.s4 1934713408
      %v501 = vunpack.c.0.s8 %v500
      %v502 = vlaneseq
      %v503 = vshrl.u32 %v502, 7
      %v504 = vsub.s32 %v501, %v503
      %v505 = vrot.slane %v491, %v504
      %v506 = vcombine.high %v498, 0.0
      %v507 = vcombine.high %v505, 0.0
      %v508 = vcombine.low %v403, %v411
      %v510 = vunpack.c.l.s4 1983009808
      %v511 = vunpack.c.0.s8 %v510
      %v512 = vlaneseq
      %v513 = vshrl.u32 %v512, 7
      %v514 = vsub.s32 %v511, %v513
      %v515 = vrot.slane %v508, %v514
      %v516 = vcombine.low %v407, %v415
      %v518 = vunpack.c.l.s4 1983009808
      %v519 = vunpack.c.0.s8 %v518
      %v520 = vlaneseq
      %v521 = vshrl.u32 %v520, 7
      %v522 = vsub.s32 %v519, %v521
      %v523 = vrot.slane %v516, %v522
      %v524 = vcombine.low %v515, %v523
      %v525 = vcombine.high %v515, %v523
      %v527 = vunpack.c.l.s4 1934713408
      %v528 = vunpack.c.0.s8 %v527
      %v529 = vlaneseq
      %v530 = vshrl.u32 %v529, 7
      %v531 = vsub.s32 %v528, %v530
      %v532 = vrot.slane %v524, %v531
      %v534 = vunpack.c.l.s4 1934713408
      %v535 = vunpack.c.0.s8 %v534
      %v536 = vlaneseq
      %v537 = vshrl.u32 %v536, 7
      %v538 = vsub.s32 %v535, %v537
      %v539 = vrot.slane %v525, %v538
      %v540 = vcombine.high %v532, 0.0
      %v541 = vcombine.high %v539, 0.0
      %v542 = vcombine.low %v419, %v427
      %v544 = vunpack.c.l.s4 1983009808
      %v545 = vunpack.c.0.s8 %v544
      %v546 = vlaneseq
      %v547 = vshrl.u32 %v546, 7
      %v548 = vsub.s32 %v545, %v547
      %v549 = vrot.slane %v542, %v548
      %v550 = vcombine.low %v423, %v431
      %v552 = vunpack.c.l.s4 1983009808
      %v553 = vunpack.c.0.s8 %v552
      %v554 = vlaneseq
      %v555 = vshrl.u32 %v554, 7
      %v556 = vsub.s32 %v553, %v555
      %v557 = vrot.slane %v550, %v556
      %v558 = vcombine.low %v549, %v557
      %v559 = vcombine.high %v549, %v557
      %v561 = vunpack.c.l.s4 1934713408
      %v562 = vunpack.c.0.s8 %v561
      %v563 = vlaneseq
      %v564 = vshrl.u32 %v563, 7
      %v565 = vsub.s32 %v562, %v564
      %v566 = vrot.slane %v558, %v565
      %v568 = vunpack.c.l.s4 1934713408
      %v569 = vunpack.c.0.s8 %v568
      %v570 = vlaneseq
      %v571 = vshrl.u32 %v570, 7
      %v572 = vsub.s32 %v569, %v571
      %v573 = vrot.slane %v559, %v572
      %v574 = vcombine.high %v566, 0.0
      %v575 = vcombine.high %v573, 0.0
      %v592 = vcombine.low %v464, %v498
      %v593 = vcombine.low %v532, %v566
      %v594 = vcombine.low %v472, %v506
      %v595 = vcombine.low %v540, %v574
      %v596 = vcombine.low %v471, %v505
      %v597 = vcombine.low %v539, %v573
      %v598 = vcombine.low %v473, %v507
      %v599 = vcombine.low %v541, %v575
      %600 = vrot.lane.b32.xlu0 %v592, 1
      %v601 = vpop.permute.xlu0 %600
      %602 = vrot.lane.b32.xlu0 %v593, 1
      %v603 = vpop.permute.xlu0 %602
      %604 = vrot.lane.b32.xlu0 %v594, 1
      %v605 = vpop.permute.xlu0 %604
      %606 = vrot.lane.b32.xlu0 %v595, 1
      %v607 = vpop.permute.xlu0 %606
      %608 = vrot.lane.b32.xlu0 %v596, 1
      %v609 = vpop.permute.xlu0 %608
      %610 = vrot.lane.b32.xlu0 %v597, 1
      %v611 = vpop.permute.xlu0 %610
      %612 = vrot.lane.b32.xlu0 %v598, 1
      %v613 = vpop.permute.xlu0 %612
      %614 = vrot.lane.b32.xlu0 %v599, 1
      %v615 = vpop.permute.xlu0 %614
      %vm624 = vcmask 138248
      %625 = vst.msk [vmem:[#allocation2 + $0x1] sm:$0xff] %vm624, %v601
      %626 = vst.msk [vmem:[#allocation2 + $0x9] sm:$0xff] %vm624, %v603
      %627 = vst.msk [vmem:[#allocation2 + $0x19] sm:$0xff] %vm624, %v605
      %628 = vst.msk [vmem:[#allocation2 + $0x21] sm:$0xff] %vm624, %v607
      %629 = vst.msk [vmem:[#allocation2 + $0x31] sm:$0xff] %vm624, %v609
      %630 = vst.msk [vmem:[#allocation2 + $0x39] sm:$0xff] %vm624, %v611
      %631 = vst.msk [vmem:[#allocation2 + $0x49] sm:$0xff] %vm624, %v613
      %632 = vst.msk [vmem:[#allocation2 + $0x51] sm:$0xff] %vm624, %v615
      %v633 = vld [vmem:[#allocation2] sm:$0xff]
      %v634 = vld [vmem:[#allocation2 + $0x8] sm:$0xff]
      %v635 = vld [vmem:[#allocation2 + $0x18] sm:$0xff]
      %v636 = vld [vmem:[#allocation2 + $0x20] sm:$0xff]
      %v637 = vld [vmem:[#allocation2 + $0x30] sm:$0xff]
      %v638 = vld [vmem:[#allocation2 + $0x38] sm:$0xff]
      %v639 = vld [vmem:[#allocation2 + $0x48] sm:$0xff]
      %v640 = vld [vmem:[#allocation2 + $0x50] sm:$0xff]
      %v641 = vcombine.low %v633, %v637
      %v642 = vcombine.high %v633, %v637
      %v644 = vunpack.c.l.s4 1983009808
      %v645 = vunpack.c.0.s8 %v644
      %v646 = vlaneseq
      %v647 = vshrl.u32 %v646, 7
      %v648 = vsub.s32 %v645, %v647
      %v649 = vrot.slane %v641, %v648
      %v651 = vunpack.c.l.s4 1983009808
      %v652 = vunpack.c.0.s8 %v651
      %v653 = vlaneseq
      %v654 = vshrl.u32 %v653, 7
      %v655 = vsub.s32 %v652, %v654
      %v656 = vrot.slane %v642, %v655
      %v657 = vcombine.low %v635, %v639
      %v658 = vcombine.high %v635, %v639
      %v660 = vunpack.c.l.s4 1983009808
      %v661 = vunpack.c.0.s8 %v660
      %v662 = vlaneseq
      %v663 = vshrl.u32 %v662, 7
      %v664 = vsub.s32 %v661, %v663
      %v665 = vrot.slane %v657, %v664
      %v667 = vunpack.c.l.s4 1983009808
      %v668 = vunpack.c.0.s8 %v667
      %v669 = vlaneseq
      %v670 = vshrl.u32 %v669, 7
      %v671 = vsub.s32 %v668, %v670
      %v672 = vrot.slane %v658, %v671
      %v673 = vcombine.low %v649, %v665
      %v674 = vcombine.high %v649, %v665
      %v676 = vunpack.c.l.s4 1934713408
      %v677 = vunpack.c.0.s8 %v676
      %v678 = vlaneseq
      %v679 = vshrl.u32 %v678, 7
      %v680 = vsub.s32 %v677, %v679
      %v681 = vrot.slane %v673, %v680
      %v683 = vunpack.c.l.s4 1934713408
      %v684 = vunpack.c.0.s8 %v683
      %v685 = vlaneseq
      %v686 = vshrl.u32 %v685, 7
      %v687 = vsub.s32 %v684, %v686
      %v688 = vrot.slane %v674, %v687
      %v689 = vcombine.low %v656, %v672
      %v690 = vcombine.high %v656, %v672
      %v692 = vunpack.c.l.s4 1934713408
      %v693 = vunpack.c.0.s8 %v692
      %v694 = vlaneseq
      %v695 = vshrl.u32 %v694, 7
      %v696 = vsub.s32 %v693, %v695
      %v697 = vrot.slane %v689, %v696
      %v699 = vunpack.c.l.s4 1934713408
      %v700 = vunpack.c.0.s8 %v699
      %v701 = vlaneseq
      %v702 = vshrl.u32 %v701, 7
      %v703 = vsub.s32 %v700, %v702
      %v704 = vrot.slane %v690, %v703
      %v705 = vcombine.high %v681, 0.0
      %v706 = vcombine.high %v688, 0.0
      %v707 = vcombine.high %v697, 0.0
      %v708 = vcombine.high %v704, 0.0
      %v709 = vcombine.low %v634, %v638
      %v710 = vcombine.high %v634, %v638
      %v712 = vunpack.c.l.s4 1983009808
      %v713 = vunpack.c.0.s8 %v712
      %v714 = vlaneseq
      %v715 = vshrl.u32 %v714, 7
      %v716 = vsub.s32 %v713, %v715
      %v717 = vrot.slane %v709, %v716
      %v719 = vunpack.c.l.s4 1983009808
      %v720 = vunpack.c.0.s8 %v719
      %v721 = vlaneseq
      %v722 = vshrl.u32 %v721, 7
      %v723 = vsub.s32 %v720, %v722
      %v724 = vrot.slane %v710, %v723
      %v725 = vcombine.low %v636, %v640
      %v726 = vcombine.high %v636, %v640
      %v728 = vunpack.c.l.s4 1983009808
      %v729 = vunpack.c.0.s8 %v728
      %v730 = vlaneseq
      %v731 = vshrl.u32 %v730, 7
      %v732 = vsub.s32 %v729, %v731
      %v733 = vrot.slane %v725, %v732
      %v735 = vunpack.c.l.s4 1983009808
      %v736 = vunpack.c.0.s8 %v735
      %v737 = vlaneseq
      %v738 = vshrl.u32 %v737, 7
      %v739 = vsub.s32 %v736, %v738
      %v740 = vrot.slane %v726, %v739
      %v741 = vcombine.low %v717, %v733
      %v742 = vcombine.high %v717, %v733
      %v744 = vunpack.c.l.s4 1934713408
      %v745 = vunpack.c.0.s8 %v744
      %v746 = vlaneseq
      %v747 = vshrl.u32 %v746, 7
      %v748 = vsub.s32 %v745, %v747
      %v749 = vrot.slane %v741, %v748
      %v751 = vunpack.c.l.s4 1934713408
      %v752 = vunpack.c.0.s8 %v751
      %v753 = vlaneseq
      %v754 = vshrl.u32 %v753, 7
      %v755 = vsub.s32 %v752, %v754
      %v756 = vrot.slane %v742, %v755
      %v757 = vcombine.low %v724, %v740
      %v758 = vcombine.high %v724, %v740
      %v760 = vunpack.c.l.s4 1934713408
      %v761 = vunpack.c.0.s8 %v760
      %v762 = vlaneseq
      %v763 = vshrl.u32 %v762, 7
      %v764 = vsub.s32 %v761, %v763
      %v765 = vrot.slane %v757, %v764
      %v767 = vunpack.c.l.s4 1934713408
      %v768 = vunpack.c.0.s8 %v767
      %v769 = vlaneseq
      %v770 = vshrl.u32 %v769, 7
      %v771 = vsub.s32 %v768, %v770
      %v772 = vrot.slane %v758, %v771
      %v773 = vcombine.high %v749, 0.0
      %v774 = vcombine.high %v756, 0.0
      %v775 = vcombine.high %v765, 0.0
      %v776 = vcombine.high %v772, 0.0
      %778 = vrot.lane.b32.xlu0 %v705, 16
      %v779 = vpop.permute.xlu0 %778
      %782 = vrot.lane.b32.xlu0 %v688, 32
      %v783 = vpop.permute.xlu0 %782
      %786 = vrot.lane.b32.xlu0 %v706, 48
      %v787 = vpop.permute.xlu0 %786
      %790 = vrot.lane.b32.xlu0 %v697, 64
      %v791 = vpop.permute.xlu0 %790
      %794 = vrot.lane.b32.xlu0 %v707, 80
      %v795 = vpop.permute.xlu0 %794
      %798 = vrot.lane.b32.xlu0 %v704, 96
      %v799 = vpop.permute.xlu0 %798
      %802 = vrot.lane.b32.xlu0 %v708, 112
      %v803 = vpop.permute.xlu0 %802
      %806 = vrot.lane.b32.xlu0 %v773, 16
      %v807 = vpop.permute.xlu0 %806
      %810 = vrot.lane.b32.xlu0 %v756, 32
      %v811 = vpop.permute.xlu0 %810
      %814 = vrot.lane.b32.xlu0 %v774, 48
      %v815 = vpop.permute.xlu0 %814
      %818 = vrot.lane.b32.xlu0 %v765, 64
      %v819 = vpop.permute.xlu0 %818
      %822 = vrot.lane.b32.xlu0 %v775, 80
      %v823 = vpop.permute.xlu0 %822
      %826 = vrot.lane.b32.xlu0 %v772, 96
      %v827 = vpop.permute.xlu0 %826
      %830 = vrot.lane.b32.xlu0 %v776, 112
      %v831 = vpop.permute.xlu0 %830
      %vm833 = vcmask 130048
      %v834 = vsel %vm833, %v681, %v779
      %vm835 = vcmask 261120
      %v836 = vsel %vm835, %v834, %v783
      %vm837 = vcmask 392192
      %v838 = vsel %vm837, %v836, %v787
      %vm839 = vcmask 523264
      %v840 = vsel %vm839, %v838, %v791
      %vm841 = vcmask 654336
      %v842 = vsel %vm841, %v840, %v795
      %vm843 = vcmask 785408
      %v844 = vsel %vm843, %v842, %v799
      %vm845 = vcmask 916480
      %v846 = vsel %vm845, %v844, %v803
      %v847 = vsel %vm833, %v749, %v807
      %v848 = vsel %vm835, %v847, %v811
      %v849 = vsel %vm837, %v848, %v815
      %v850 = vsel %vm839, %v849, %v819
      %v851 = vsel %vm841, %v850, %v823
      %v852 = vsel %vm843, %v851, %v827
      %v853 = vsel %vm845, %v852, %v831
      %854 = vst [vmem:[#allocation3] sm:$0xf] %v846
      %855 = vst [vmem:[#allocation3 + $0x8] sm:$0xf] %v853
      %v856 = vld [vmem:[#allocation2] sm:$0xff]
      %v857 = vld [vmem:[#allocation2 + $0x8] sm:$0xff]
      %v858 = vld [vmem:[#allocation2 + $0x18] sm:$0xff]
      %v859 = vld [vmem:[#allocation2 + $0x20] sm:$0xff]
      %v860 = vld [vmem:[#allocation2 + $0x30] sm:$0xff]
      %v861 = vld [vmem:[#allocation2 + $0x38] sm:$0xff]
      %v862 = vld [vmem:[#allocation2 + $0x48] sm:$0xff]
      %v863 = vld [vmem:[#allocation2 + $0x50] sm:$0xff]
      %872 = vrot.lane.b32.xlu0 %v856, 127
      %v873 = vpop.permute.xlu0 %872
      %874 = vrot.lane.b32.xlu0 %v857, 127
      %v875 = vpop.permute.xlu0 %874
      %876 = vrot.lane.b32.xlu0 %v858, 127
      %v877 = vpop.permute.xlu0 %876
      %878 = vrot.lane.b32.xlu0 %v859, 127
      %v879 = vpop.permute.xlu0 %878
      %880 = vrot.lane.b32.xlu0 %v860, 127
      %v881 = vpop.permute.xlu0 %880
      %882 = vrot.lane.b32.xlu0 %v861, 127
      %v883 = vpop.permute.xlu0 %882
      %884 = vrot.lane.b32.xlu0 %v862, 127
      %v885 = vpop.permute.xlu0 %884
      %886 = vrot.lane.b32.xlu0 %v863, 127
      %v887 = vpop.permute.xlu0 %886
      %v896 = vcombine.low %v873, %v881
      %v897 = vcombine.high %v873, %v881
      %v899 = vunpack.c.l.s4 1983009808
      %v900 = vunpack.c.0.s8 %v899
      %v901 = vlaneseq
      %v902 = vshrl.u32 %v901, 7
      %v903 = vsub.s32 %v900, %v902
      %v904 = vrot.slane %v896, %v903
      %v906 = vunpack.c.l.s4 1983009808
      %v907 = vunpack.c.0.s8 %v906
      %v908 = vlaneseq
      %v909 = vshrl.u32 %v908, 7
      %v910 = vsub.s32 %v907, %v909
      %v911 = vrot.slane %v897, %v910
      %v912 = vcombine.low %v877, %v885
      %v913 = vcombine.high %v877, %v885
      %v915 = vunpack.c.l.s4 1983009808
      %v916 = vunpack.c.0.s8 %v915
      %v917 = vlaneseq
      %v918 = vshrl.u32 %v917, 7
      %v919 = vsub.s32 %v916, %v918
      %v920 = vrot.slane %v912, %v919
      %v922 = vunpack.c.l.s4 1983009808
      %v923 = vunpack.c.0.s8 %v922
      %v924 = vlaneseq
      %v925 = vshrl.u32 %v924, 7
      %v926 = vsub.s32 %v923, %v925
      %v927 = vrot.slane %v913, %v926
      %v928 = vcombine.low %v904, %v920
      %v929 = vcombine.high %v904, %v920
      %v931 = vunpack.c.l.s4 1934713408
      %v932 = vunpack.c.0.s8 %v931
      %v933 = vlaneseq
      %v934 = vshrl.u32 %v933, 7
      %v935 = vsub.s32 %v932, %v934
      %v936 = vrot.slane %v928, %v935
      %v938 = vunpack.c.l.s4 1934713408
      %v939 = vunpack.c.0.s8 %v938
      %v940 = vlaneseq
      %v941 = vshrl.u32 %v940, 7
      %v942 = vsub.s32 %v939, %v941
      %v943 = vrot.slane %v929, %v942
      %v944 = vcombine.low %v911, %v927
      %v945 = vcombine.high %v911, %v927
      %v947 = vunpack.c.l.s4 1934713408
      %v948 = vunpack.c.0.s8 %v947
      %v949 = vlaneseq
      %v950 = vshrl.u32 %v949, 7
      %v951 = vsub.s32 %v948, %v950
      %v952 = vrot.slane %v944, %v951
      %v954 = vunpack.c.l.s4 1934713408
      %v955 = vunpack.c.0.s8 %v954
      %v956 = vlaneseq
      %v957 = vshrl.u32 %v956, 7
      %v958 = vsub.s32 %v955, %v957
      %v959 = vrot.slane %v945, %v958
      %v960 = vcombine.high %v936, 0.0
      %v961 = vcombine.high %v943, 0.0
      %v962 = vcombine.high %v952, 0.0
      %v963 = vcombine.high %v959, 0.0
      %v964 = vcombine.low %v875, %v883
      %v965 = vcombine.high %v875, %v883
      %v967 = vunpack.c.l.s4 1983009808
      %v968 = vunpack.c.0.s8 %v967
      %v969 = vlaneseq
      %v970 = vshrl.u32 %v969, 7
      %v971 = vsub.s32 %v968, %v970
      %v972 = vrot.slane %v964, %v971
      %v974 = vunpack.c.l.s4 1983009808
      %v975 = vunpack.c.0.s8 %v974
      %v976 = vlaneseq
      %v977 = vshrl.u32 %v976, 7
      %v978 = vsub.s32 %v975, %v977
      %v979 = vrot.slane %v965, %v978
      %v980 = vcombine.low %v879, %v887
      %v981 = vcombine.high %v879, %v887
      %v983 = vunpack.c.l.s4 1983009808
      %v984 = vunpack.c.0.s8 %v983
      %v985 = vlaneseq
      %v986 = vshrl.u32 %v985, 7
      %v987 = vsub.s32 %v984, %v986
      %v988 = vrot.slane %v980, %v987
      %v990 = vunpack.c.l.s4 1983009808
      %v991 = vunpack.c.0.s8 %v990
      %v992 = vlaneseq
      %v993 = vshrl.u32 %v992, 7
      %v994 = vsub.s32 %v991, %v993
      %v995 = vrot.slane %v981, %v994
      %v996 = vcombine.low %v972, %v988
      %v997 = vcombine.high %v972, %v988
      %v999 = vunpack.c.l.s4 1934713408
      %v1000 = vunpack.c.0.s8 %v999
      %v1001 = vlaneseq
      %v1002 = vshrl.u32 %v1001, 7
      %v1003 = vsub.s32 %v1000, %v1002
      %v1004 = vrot.slane %v996, %v1003
      %v1006 = vunpack.c.l.s4 1934713408
      %v1007 = vunpack.c.0.s8 %v1006
      %v1008 = vlaneseq
      %v1009 = vshrl.u32 %v1008, 7
      %v1010 = vsub.s32 %v1007, %v1009
      %v1011 = vrot.slane %v997, %v1010
      %v1012 = vcombine.low %v979, %v995
      %v1013 = vcombine.high %v979, %v995
      %v1015 = vunpack.c.l.s4 1934713408
      %v1016 = vunpack.c.0.s8 %v1015
      %v1017 = vlaneseq
      %v1018 = vshrl.u32 %v1017, 7
      %v1019 = vsub.s32 %v1016, %v1018
      %v1020 = vrot.slane %v1012, %v1019
      %v1022 = vunpack.c.l.s4 1934713408
      %v1023 = vunpack.c.0.s8 %v1022
      %v1024 = vlaneseq
      %v1025 = vshrl.u32 %v1024, 7
      %v1026 = vsub.s32 %v1023, %v1025
      %v1027 = vrot.slane %v1013, %v1026
      %v1028 = vcombine.high %v1004, 0.0
      %v1029 = vcombine.high %v1011, 0.0
      %v1030 = vcombine.high %v1020, 0.0
      %v1031 = vcombine.high %v1027, 0.0
      %1033 = vrot.lane.b32.xlu0 %v960, 16
      %v1034 = vpop.permute.xlu0 %1033
      %1037 = vrot.lane.b32.xlu0 %v943, 32
      %v1038 = vpop.permute.xlu0 %1037
      %1041 = vrot.lane.b32.xlu0 %v961, 48
      %v1042 = vpop.permute.xlu0 %1041
      %1045 = vrot.lane.b32.xlu0 %v952, 64
      %v1046 = vpop.permute.xlu0 %1045
      %1049 = vrot.lane.b32.xlu0 %v962, 80
      %v1050 = vpop.permute.xlu0 %1049
      %1053 = vrot.lane.b32.xlu0 %v959, 96
      %v1054 = vpop.permute.xlu0 %1053
      %1057 = vrot.lane.b32.xlu0 %v963, 112
      %v1058 = vpop.permute.xlu0 %1057
      %1061 = vrot.lane.b32.xlu0 %v1028, 16
      %v1062 = vpop.permute.xlu0 %1061
      %1065 = vrot.lane.b32.xlu0 %v1011, 32
      %v1066 = vpop.permute.xlu0 %1065
      %1069 = vrot.lane.b32.xlu0 %v1029, 48
      %v1070 = vpop.permute.xlu0 %1069
      %1073 = vrot.lane.b32.xlu0 %v1020, 64
      %v1074 = vpop.permute.xlu0 %1073
      %1077 = vrot.lane.b32.xlu0 %v1030, 80
      %v1078 = vpop.permute.xlu0 %1077
      %1081 = vrot.lane.b32.xlu0 %v1027, 96
      %v1082 = vpop.permute.xlu0 %1081
      %1085 = vrot.lane.b32.xlu0 %v1031, 112
      %v1086 = vpop.permute.xlu0 %1085
      %v1088 = vsel %vm833, %v936, %v1034
      %v1089 = vsel %vm835, %v1088, %v1038
      %v1090 = vsel %vm837, %v1089, %v1042
      %v1091 = vsel %vm839, %v1090, %v1046
      %v1092 = vsel %vm841, %v1091, %v1050
      %v1093 = vsel %vm843, %v1092, %v1054
      %v1094 = vsel %vm845, %v1093, %v1058
      %v1095 = vsel %vm833, %v1004, %v1062
      %v1096 = vsel %vm835, %v1095, %v1066
      %v1097 = vsel %vm837, %v1096, %v1070
      %v1098 = vsel %vm839, %v1097, %v1074
      %v1099 = vsel %vm841, %v1098, %v1078
      %v1100 = vsel %vm843, %v1099, %v1082
      %v1101 = vsel %vm845, %v1100, %v1086
      %v1104 = vrot.slane %v1094, 4
      %v1105 = vrot.slane %v1101, 4
      %1108 = vst [vmem:[#allocation3] sm:$0xf0] %v1104
      %1109 = vst [vmem:[#allocation3 + $0x8] sm:$0xf0] %v1105
      %v1110 = vld [vmem:[#allocation2] sm:$0xff]
      %v1111 = vld [vmem:[#allocation2 + $0x8] sm:$0xff]
      %v1112 = vld [vmem:[#allocation2 + $0x18] sm:$0xff]
      %v1113 = vld [vmem:[#allocation2 + $0x20] sm:$0xff]
      %v1114 = vld [vmem:[#allocation2 + $0x30] sm:$0xff]
      %v1115 = vld [vmem:[#allocation2 + $0x38] sm:$0xff]
      %v1116 = vld [vmem:[#allocation2 + $0x48] sm:$0xff]
      %v1117 = vld [vmem:[#allocation2 + $0x50] sm:$0xff]
      %1126 = vrot.lane.b32.xlu0 %v1110, 126
      %v1127 = vpop.permute.xlu0 %1126
      %1128 = vrot.lane.b32.xlu0 %v1111, 126
      %v1129 = vpop.permute.xlu0 %1128
      %1130 = vrot.lane.b32.xlu0 %v1112, 126
      %v1131 = vpop.permute.xlu0 %1130
      %1132 = vrot.lane.b32.xlu0 %v1113, 126
      %v1133 = vpop.permute.xlu0 %1132
      %1134 = vrot.lane.b32.xlu0 %v1114, 126
      %v1135 = vpop.permute.xlu0 %1134
      %1136 = vrot.lane.b32.xlu0 %v1115, 126
      %v1137 = vpop.permute.xlu0 %1136
      %1138 = vrot.lane.b32.xlu0 %v1116, 126
      %v1139 = vpop.permute.xlu0 %1138
      %1140 = vrot.lane.b32.xlu0 %v1117, 126
      %v1141 = vpop.permute.xlu0 %1140
      %v1150 = vcombine.low %v1127, %v1135
      %v1151 = vcombine.high %v1127, %v1135
      %v1153 = vunpack.c.l.s4 1983009808
      %v1154 = vunpack.c.0.s8 %v1153
      %v1155 = vlaneseq
      %v1156 = vshrl.u32 %v1155, 7
      %v1157 = vsub.s32 %v1154, %v1156
      %v1158 = vrot.slane %v1150, %v1157
      %v1160 = vunpack.c.l.s4 1983009808
      %v1161 = vunpack.c.0.s8 %v1160
      %v1162 = vlaneseq
      %v1163 = vshrl.u32 %v1162, 7
      %v1164 = vsub.s32 %v1161, %v1163
      %v1165 = vrot.slane %v1151, %v1164
      %v1166 = vcombine.low %v1131, %v1139
      %v1167 = vcombine.high %v1131, %v1139
      %v1169 = vunpack.c.l.s4 1983009808
      %v1170 = vunpack.c.0.s8 %v1169
      %v1171 = vlaneseq
      %v1172 = vshrl.u32 %v1171, 7
      %v1173 = vsub.s32 %v1170, %v1172
      %v1174 = vrot.slane %v1166, %v1173
      %v1176 = vunpack.c.l.s4 1983009808
      %v1177 = vunpack.c.0.s8 %v1176
      %v1178 = vlaneseq
      %v1179 = vshrl.u32 %v1178, 7
      %v1180 = vsub.s32 %v1177, %v1179
      %v1181 = vrot.slane %v1167, %v1180
      %v1182 = vcombine.low %v1158, %v1174
      %v1183 = vcombine.high %v1158, %v1174
      %v1185 = vunpack.c.l.s4 1934713408
      %v1186 = vunpack.c.0.s8 %v1185
      %v1187 = vlaneseq
      %v1188 = vshrl.u32 %v1187, 7
      %v1189 = vsub.s32 %v1186, %v1188
      %v1190 = vrot.slane %v1182, %v1189
      %v1192 = vunpack.c.l.s4 1934713408
      %v1193 = vunpack.c.0.s8 %v1192
      %v1194 = vlaneseq
      %v1195 = vshrl.u32 %v1194, 7
      %v1196 = vsub.s32 %v1193, %v1195
      %v1197 = vrot.slane %v1183, %v1196
      %v1198 = vcombine.low %v1165, %v1181
      %v1199 = vcombine.high %v1165, %v1181
      %v1201 = vunpack.c.l.s4 1934713408
      %v1202 = vunpack.c.0.s8 %v1201
      %v1203 = vlaneseq
      %v1204 = vshrl.u32 %v1203, 7
      %v1205 = vsub.s32 %v1202, %v1204
      %v1206 = vrot.slane %v1198, %v1205
      %v1208 = vunpack.c.l.s4 1934713408
      %v1209 = vunpack.c.0.s8 %v1208
      %v1210 = vlaneseq
      %v1211 = vshrl.u32 %v1210, 7
      %v1212 = vsub.s32 %v1209, %v1211
      %v1213 = vrot.slane %v1199, %v1212
      %v1214 = vcombine.high %v1190, 0.0
      %v1215 = vcombine.high %v1197, 0.0
      %v1216 = vcombine.high %v1206, 0.0
      %v1217 = vcombine.high %v1213, 0.0
      %v1218 = vcombine.low %v1129, %v1137
      %v1219 = vcombine.high %v1129, %v1137
      %v1221 = vunpack.c.l.s4 1983009808
      %v1222 = vunpack.c.0.s8 %v1221
      %v1223 = vlaneseq
      %v1224 = vshrl.u32 %v1223, 7
      %v1225 = vsub.s32 %v1222, %v1224
      %v1226 = vrot.slane %v1218, %v1225
      %v1228 = vunpack.c.l.s4 1983009808
      %v1229 = vunpack.c.0.s8 %v1228
      %v1230 = vlaneseq
      %v1231 = vshrl.u32 %v1230, 7
      %v1232 = vsub.s32 %v1229, %v1231
      %v1233 = vrot.slane %v1219, %v1232
      %v1234 = vcombine.low %v1133, %v1141
      %v1235 = vcombine.high %v1133, %v1141
      %v1237 = vunpack.c.l.s4 1983009808
      %v1238 = vunpack.c.0.s8 %v1237
      %v1239 = vlaneseq
      %v1240 = vshrl.u32 %v1239, 7
      %v1241 = vsub.s32 %v1238, %v1240
      %v1242 = vrot.slane %v1234, %v1241
      %v1244 = vunpack.c.l.s4 1983009808
      %v1245 = vunpack.c.0.s8 %v1244
      %v1246 = vlaneseq
      %v1247 = vshrl.u32 %v1246, 7
      %v1248 = vsub.s32 %v1245, %v1247
      %v1249 = vrot.slane %v1235, %v1248
      %v1250 = vcombine.low %v1226, %v1242
      %v1251 = vcombine.high %v1226, %v1242
      %v1253 = vunpack.c.l.s4 1934713408
      %v1254 = vunpack.c.0.s8 %v1253
      %v1255 = vlaneseq
      %v1256 = vshrl.u32 %v1255, 7
      %v1257 = vsub.s32 %v1254, %v1256
      %v1258 = vrot.slane %v1250, %v1257
      %v1260 = vunpack.c.l.s4 1934713408
      %v1261 = vunpack.c.0.s8 %v1260
      %v1262 = vlaneseq
      %v1263 = vshrl.u32 %v1262, 7
      %v1264 = vsub.s32 %v1261, %v1263
      %v1265 = vrot.slane %v1251, %v1264
      %v1266 = vcombine.low %v1233, %v1249
      %v1267 = vcombine.high %v1233, %v1249
      %v1269 = vunpack.c.l.s4 1934713408
      %v1270 = vunpack.c.0.s8 %v1269
      %v1271 = vlaneseq
      %v1272 = vshrl.u32 %v1271, 7
      %v1273 = vsub.s32 %v1270, %v1272
      %v1274 = vrot.slane %v1266, %v1273
      %v1276 = vunpack.c.l.s4 1934713408
      %v1277 = vunpack.c.0.s8 %v1276
      %v1278 = vlaneseq
      %v1279 = vshrl.u32 %v1278, 7
      %v1280 = vsub.s32 %v1277, %v1279
      %v1281 = vrot.slane %v1267, %v1280
      %v1282 = vcombine.high %v1258, 0.0
      %v1283 = vcombine.high %v1265, 0.0
      %v1284 = vcombine.high %v1274, 0.0
      %v1285 = vcombine.high %v1281, 0.0
      %1287 = vrot.lane.b32.xlu0 %v1214, 16
      %v1288 = vpop.permute.xlu0 %1287
      %1291 = vrot.lane.b32.xlu0 %v1197, 32
      %v1292 = vpop.permute.xlu0 %1291
      %1295 = vrot.lane.b32.xlu0 %v1215, 48
      %v1296 = vpop.permute.xlu0 %1295
      %1299 = vrot.lane.b32.xlu0 %v1206, 64
      %v1300 = vpop.permute.xlu0 %1299
      %1303 = vrot.lane.b32.xlu0 %v1216, 80
      %v1304 = vpop.permute.xlu0 %1303
      %1307 = vrot.lane.b32.xlu0 %v1213, 96
      %v1308 = vpop.permute.xlu0 %1307
      %1311 = vrot.lane.b32.xlu0 %v1217, 112
      %v1312 = vpop.permute.xlu0 %1311
      %1315 = vrot.lane.b32.xlu0 %v1282, 16
      %v1316 = vpop.permute.xlu0 %1315
      %1319 = vrot.lane.b32.xlu0 %v1265, 32
      %v1320 = vpop.permute.xlu0 %1319
      %1323 = vrot.lane.b32.xlu0 %v1283, 48
      %v1324 = vpop.permute.xlu0 %1323
      %1327 = vrot.lane.b32.xlu0 %v1274, 64
      %v1328 = vpop.permute.xlu0 %1327
      %1331 = vrot.lane.b32.xlu0 %v1284, 80
      %v1332 = vpop.permute.xlu0 %1331
      %1335 = vrot.lane.b32.xlu0 %v1281, 96
      %v1336 = vpop.permute.xlu0 %1335
      %1339 = vrot.lane.b32.xlu0 %v1285, 112
      %v1340 = vpop.permute.xlu0 %1339
      %v1342 = vsel %vm833, %v1190, %v1288
      %v1343 = vsel %vm835, %v1342, %v1292
      %v1344 = vsel %vm837, %v1343, %v1296
      %v1345 = vsel %vm839, %v1344, %v1300
      %v1346 = vsel %vm841, %v1345, %v1304
      %v1347 = vsel %vm843, %v1346, %v1308
      %v1348 = vsel %vm845, %v1347, %v1312
      %v1349 = vsel %vm833, %v1258, %v1316
      %v1350 = vsel %vm835, %v1349, %v1320
      %v1351 = vsel %vm837, %v1350, %v1324
      %v1352 = vsel %vm839, %v1351, %v1328
      %v1353 = vsel %vm841, %v1352, %v1332
      %v1354 = vsel %vm843, %v1353, %v1336
      %v1355 = vsel %vm845, %v1354, %v1340
      %1356 = vst [vmem:[#allocation3 + $0x10] sm:$0xf] %v1348
      %1357 = vst [vmem:[#allocation3 + $0x18] sm:$0xf] %v1355
      %v1358 = vld [vmem:[#allocation2 + $0x1] sm:$0xff]
      %v1359 = vld [vmem:[#allocation2 + $0x9] sm:$0xff]
      %v1360 = vld [vmem:[#allocation2 + $0x19] sm:$0xff]
      %v1361 = vld [vmem:[#allocation2 + $0x21] sm:$0xff]
      %v1362 = vld [vmem:[#allocation2 + $0x31] sm:$0xff]
      %v1363 = vld [vmem:[#allocation2 + $0x39] sm:$0xff]
      %v1364 = vld [vmem:[#allocation2 + $0x49] sm:$0xff]
      %v1365 = vld [vmem:[#allocation2 + $0x51] sm:$0xff]
      %v1366 = vcombine.low %v1358, %v1362
      %v1367 = vcombine.high %v1358, %v1362
      %v1369 = vunpack.c.l.s4 1983009808
      %v1370 = vunpack.c.0.s8 %v1369
      %v1371 = vlaneseq
      %v1372 = vshrl.u32 %v1371, 7
      %v1373 = vsub.s32 %v1370, %v1372
      %v1374 = vrot.slane %v1366, %v1373
      %v1376 = vunpack.c.l.s4 1983009808
      %v1377 = vunpack.c.0.s8 %v1376
      %v1378 = vlaneseq
      %v1379 = vshrl.u32 %v1378, 7
      %v1380 = vsub.s32 %v1377, %v1379
      %v1381 = vrot.slane %v1367, %v1380
      %v1382 = vcombine.low %v1360, %v1364
      %v1383 = vcombine.high %v1360, %v1364
      %v1385 = vunpack.c.l.s4 1983009808
      %v1386 = vunpack.c.0.s8 %v1385
      %v1387 = vlaneseq
      %v1388 = vshrl.u32 %v1387, 7
      %v1389 = vsub.s32 %v1386, %v1388
      %v1390 = vrot.slane %v1382, %v1389
      %v1392 = vunpack.c.l.s4 1983009808
      %v1393 = vunpack.c.0.s8 %v1392
      %v1394 = vlaneseq
      %v1395 = vshrl.u32 %v1394, 7
      %v1396 = vsub.s32 %v1393, %v1395
      %v1397 = vrot.slane %v1383, %v1396
      %v1398 = vcombine.low %v1374, %v1390
      %v1399 = vcombine.high %v1374, %v1390
      %v1401 = vunpack.c.l.s4 1934713408
      %v1402 = vunpack.c.0.s8 %v1401
      %v1403 = vlaneseq
      %v1404 = vshrl.u32 %v1403, 7
      %v1405 = vsub.s32 %v1402, %v1404
      %v1406 = vrot.slane %v1398, %v1405
      %v1408 = vunpack.c.l.s4 1934713408
      %v1409 = vunpack.c.0.s8 %v1408
      %v1410 = vlaneseq
      %v1411 = vshrl.u32 %v1410, 7
      %v1412 = vsub.s32 %v1409, %v1411
      %v1413 = vrot.slane %v1399, %v1412
      %v1414 = vcombine.low %v1381, %v1397
      %v1415 = vcombine.high %v1381, %v1397
      %v1417 = vunpack.c.l.s4 1934713408
      %v1418 = vunpack.c.0.s8 %v1417
      %v1419 = vlaneseq
      %v1420 = vshrl.u32 %v1419, 7
      %v1421 = vsub.s32 %v1418, %v1420
      %v1422 = vrot.slane %v1414, %v1421
      %v1424 = vunpack.c.l.s4 1934713408
      %v1425 = vunpack.c.0.s8 %v1424
      %v1426 = vlaneseq
      %v1427 = vshrl.u32 %v1426, 7
      %v1428 = vsub.s32 %v1425, %v1427
      %v1429 = vrot.slane %v1415, %v1428
      %v1430 = vcombine.high %v1406, 0.0
      %v1431 = vcombine.high %v1413, 0.0
      %v1432 = vcombine.high %v1422, 0.0
      %v1433 = vcombine.high %v1429, 0.0
      %v1434 = vcombine.low %v1359, %v1363
      %v1435 = vcombine.high %v1359, %v1363
      %v1437 = vunpack.c.l.s4 1983009808
      %v1438 = vunpack.c.0.s8 %v1437
      %v1439 = vlaneseq
      %v1440 = vshrl.u32 %v1439, 7
      %v1441 = vsub.s32 %v1438, %v1440
      %v1442 = vrot.slane %v1434, %v1441
      %v1444 = vunpack.c.l.s4 1983009808
      %v1445 = vunpack.c.0.s8 %v1444
      %v1446 = vlaneseq
      %v1447 = vshrl.u32 %v1446, 7
      %v1448 = vsub.s32 %v1445, %v1447
      %v1449 = vrot.slane %v1435, %v1448
      %v1450 = vcombine.low %v1361, %v1365
      %v1451 = vcombine.high %v1361, %v1365
      %v1453 = vunpack.c.l.s4 1983009808
      %v1454 = vunpack.c.0.s8 %v1453
      %v1455 = vlaneseq
      %v1456 = vshrl.u32 %v1455, 7
      %v1457 = vsub.s32 %v1454, %v1456
      %v1458 = vrot.slane %v1450, %v1457
      %v1460 = vunpack.c.l.s4 1983009808
      %v1461 = vunpack.c.0.s8 %v1460
      %v1462 = vlaneseq
      %v1463 = vshrl.u32 %v1462, 7
      %v1464 = vsub.s32 %v1461, %v1463
      %v1465 = vrot.slane %v1451, %v1464
      %v1466 = vcombine.low %v1442, %v1458
      %v1467 = vcombine.high %v1442, %v1458
      %v1469 = vunpack.c.l.s4 1934713408
      %v1470 = vunpack.c.0.s8 %v1469
      %v1471 = vlaneseq
      %v1472 = vshrl.u32 %v1471, 7
      %v1473 = vsub.s32 %v1470, %v1472
      %v1474 = vrot.slane %v1466, %v1473
      %v1476 = vunpack.c.l.s4 1934713408
      %v1477 = vunpack.c.0.s8 %v1476
      %v1478 = vlaneseq
      %v1479 = vshrl.u32 %v1478, 7
      %v1480 = vsub.s32 %v1477, %v1479
      %v1481 = vrot.slane %v1467, %v1480
      %v1482 = vcombine.low %v1449, %v1465
      %v1483 = vcombine.high %v1449, %v1465
      %v1485 = vunpack.c.l.s4 1934713408
      %v1486 = vunpack.c.0.s8 %v1485
      %v1487 = vlaneseq
      %v1488 = vshrl.u32 %v1487, 7
      %v1489 = vsub.s32 %v1486, %v1488
      %v1490 = vrot.slane %v1482, %v1489
      %v1492 = vunpack.c.l.s4 1934713408
      %v1493 = vunpack.c.0.s8 %v1492
      %v1494 = vlaneseq
      %v1495 = vshrl.u32 %v1494, 7
      %v1496 = vsub.s32 %v1493, %v1495
      %v1497 = vrot.slane %v1483, %v1496
      %v1498 = vcombine.high %v1474, 0.0
      %v1499 = vcombine.high %v1481, 0.0
      %v1500 = vcombine.high %v1490, 0.0
      %v1501 = vcombine.high %v1497, 0.0
      %1503 = vrot.lane.b32.xlu0 %v1430, 16
      %v1504 = vpop.permute.xlu0 %1503
      %1507 = vrot.lane.b32.xlu0 %v1413, 32
      %v1508 = vpop.permute.xlu0 %1507
      %1511 = vrot.lane.b32.xlu0 %v1431, 48
      %v1512 = vpop.permute.xlu0 %1511
      %1515 = vrot.lane.b32.xlu0 %v1422, 64
      %v1516 = vpop.permute.xlu0 %1515
      %1519 = vrot.lane.b32.xlu0 %v1432, 80
      %v1520 = vpop.permute.xlu0 %1519
      %1523 = vrot.lane.b32.xlu0 %v1429, 96
      %v1524 = vpop.permute.xlu0 %1523
      %1527 = vrot.lane.b32.xlu0 %v1433, 112
      %v1528 = vpop.permute.xlu0 %1527
      %1531 = vrot.lane.b32.xlu0 %v1498, 16
      %v1532 = vpop.permute.xlu0 %1531
      %1535 = vrot.lane.b32.xlu0 %v1481, 32
      %v1536 = vpop.permute.xlu0 %1535
      %1539 = vrot.lane.b32.xlu0 %v1499, 48
      %v1540 = vpop.permute.xlu0 %1539
      %1543 = vrot.lane.b32.xlu0 %v1490, 64
      %v1544 = vpop.permute.xlu0 %1543
      %1547 = vrot.lane.b32.xlu0 %v1500, 80
      %v1548 = vpop.permute.xlu0 %1547
      %1551 = vrot.lane.b32.xlu0 %v1497, 96
      %v1552 = vpop.permute.xlu0 %1551
      %1555 = vrot.lane.b32.xlu0 %v1501, 112
      %v1556 = vpop.permute.xlu0 %1555
      %v1558 = vsel %vm833, %v1406, %v1504
      %v1559 = vsel %vm835, %v1558, %v1508
      %v1560 = vsel %vm837, %v1559, %v1512
      %v1561 = vsel %vm839, %v1560, %v1516
      %v1562 = vsel %vm841, %v1561, %v1520
      %v1563 = vsel %vm843, %v1562, %v1524
      %v1564 = vsel %vm845, %v1563, %v1528
      %v1565 = vsel %vm833, %v1474, %v1532
      %v1566 = vsel %vm835, %v1565, %v1536
      %v1567 = vsel %vm837, %v1566, %v1540
      %v1568 = vsel %vm839, %v1567, %v1544
      %v1569 = vsel %vm841, %v1568, %v1548
      %v1570 = vsel %vm843, %v1569, %v1552
      %v1571 = vsel %vm845, %v1570, %v1556
      %v1574 = vrot.slane %v1564, 4
      %v1575 = vrot.slane %v1571, 4
      %1578 = vst [vmem:[#allocation3 + $0x10] sm:$0xf0] %v1574
      %1579 = vst [vmem:[#allocation3 + $0x18] sm:$0xf0] %v1575
      %v1580 = vld [vmem:[#allocation2 + $0x1] sm:$0xff]
      %v1581 = vld [vmem:[#allocation2 + $0x9] sm:$0xff]
      %v1582 = vld [vmem:[#allocation2 + $0x19] sm:$0xff]
      %v1583 = vld [vmem:[#allocation2 + $0x21] sm:$0xff]
      %v1584 = vld [vmem:[#allocation2 + $0x31] sm:$0xff]
      %v1585 = vld [vmem:[#allocation2 + $0x39] sm:$0xff]
      %v1586 = vld [vmem:[#allocation2 + $0x49] sm:$0xff]
      %v1587 = vld [vmem:[#allocation2 + $0x51] sm:$0xff]
      %1596 = vrot.lane.b32.xlu0 %v1580, 127
      %v1597 = vpop.permute.xlu0 %1596
      %1598 = vrot.lane.b32.xlu0 %v1581, 127
      %v1599 = vpop.permute.xlu0 %1598
      %1600 = vrot.lane.b32.xlu0 %v1582, 127
      %v1601 = vpop.permute.xlu0 %1600
      %1602 = vrot.lane.b32.xlu0 %v1583, 127
      %v1603 = vpop.permute.xlu0 %1602
      %1604 = vrot.lane.b32.xlu0 %v1584, 127
      %v1605 = vpop.permute.xlu0 %1604
      %1606 = vrot.lane.b32.xlu0 %v1585, 127
      %v1607 = vpop.permute.xlu0 %1606
      %1608 = vrot.lane.b32.xlu0 %v1586, 127
      %v1609 = vpop.permute.xlu0 %1608
      %1610 = vrot.lane.b32.xlu0 %v1587, 127
      %v1611 = vpop.permute.xlu0 %1610
      %v1620 = vcombine.low %v1597, %v1605
      %v1621 = vcombine.high %v1597, %v1605
      %v1623 = vunpack.c.l.s4 1983009808
      %v1624 = vunpack.c.0.s8 %v1623
      %v1625 = vlaneseq
      %v1626 = vshrl.u32 %v1625, 7
      %v1627 = vsub.s32 %v1624, %v1626
      %v1628 = vrot.slane %v1620, %v1627
      %v1630 = vunpack.c.l.s4 1983009808
      %v1631 = vunpack.c.0.s8 %v1630
      %v1632 = vlaneseq
      %v1633 = vshrl.u32 %v1632, 7
      %v1634 = vsub.s32 %v1631, %v1633
      %v1635 = vrot.slane %v1621, %v1634
      %v1636 = vcombine.low %v1601, %v1609
      %v1637 = vcombine.high %v1601, %v1609
      %v1639 = vunpack.c.l.s4 1983009808
      %v1640 = vunpack.c.0.s8 %v1639
      %v1641 = vlaneseq
      %v1642 = vshrl.u32 %v1641, 7
      %v1643 = vsub.s32 %v1640, %v1642
      %v1644 = vrot.slane %v1636, %v1643
      %v1646 = vunpack.c.l.s4 1983009808
      %v1647 = vunpack.c.0.s8 %v1646
      %v1648 = vlaneseq
      %v1649 = vshrl.u32 %v1648, 7
      %v1650 = vsub.s32 %v1647, %v1649
      %v1651 = vrot.slane %v1637, %v1650
      %v1652 = vcombine.low %v1628, %v1644
      %v1653 = vcombine.high %v1628, %v1644
      %v1655 = vunpack.c.l.s4 1934713408
      %v1656 = vunpack.c.0.s8 %v1655
      %v1657 = vlaneseq
      %v1658 = vshrl.u32 %v1657, 7
      %v1659 = vsub.s32 %v1656, %v1658
      %v1660 = vrot.slane %v1652, %v1659
      %v1662 = vunpack.c.l.s4 1934713408
      %v1663 = vunpack.c.0.s8 %v1662
      %v1664 = vlaneseq
      %v1665 = vshrl.u32 %v1664, 7
      %v1666 = vsub.s32 %v1663, %v1665
      %v1667 = vrot.slane %v1653, %v1666
      %v1668 = vcombine.low %v1635, %v1651
      %v1669 = vcombine.high %v1635, %v1651
      %v1671 = vunpack.c.l.s4 1934713408
      %v1672 = vunpack.c.0.s8 %v1671
      %v1673 = vlaneseq
      %v1674 = vshrl.u32 %v1673, 7
      %v1675 = vsub.s32 %v1672, %v1674
      %v1676 = vrot.slane %v1668, %v1675
      %v1678 = vunpack.c.l.s4 1934713408
      %v1679 = vunpack.c.0.s8 %v1678
      %v1680 = vlaneseq
      %v1681 = vshrl.u32 %v1680, 7
      %v1682 = vsub.s32 %v1679, %v1681
      %v1683 = vrot.slane %v1669, %v1682
      %v1684 = vcombine.high %v1660, 0.0
      %v1685 = vcombine.high %v1667, 0.0
      %v1686 = vcombine.high %v1676, 0.0
      %v1687 = vcombine.high %v1683, 0.0
      %v1688 = vcombine.low %v1599, %v1607
      %v1689 = vcombine.high %v1599, %v1607
      %v1691 = vunpack.c.l.s4 1983009808
      %v1692 = vunpack.c.0.s8 %v1691
      %v1693 = vlaneseq
      %v1694 = vshrl.u32 %v1693, 7
      %v1695 = vsub.s32 %v1692, %v1694
      %v1696 = vrot.slane %v1688, %v1695
      %v1698 = vunpack.c.l.s4 1983009808
      %v1699 = vunpack.c.0.s8 %v1698
      %v1700 = vlaneseq
      %v1701 = vshrl.u32 %v1700, 7
      %v1702 = vsub.s32 %v1699, %v1701
      %v1703 = vrot.slane %v1689, %v1702
      %v1704 = vcombine.low %v1603, %v1611
      %v1705 = vcombine.high %v1603, %v1611
      %v1707 = vunpack.c.l.s4 1983009808
      %v1708 = vunpack.c.0.s8 %v1707
      %v1709 = vlaneseq
      %v1710 = vshrl.u32 %v1709, 7
      %v1711 = vsub.s32 %v1708, %v1710
      %v1712 = vrot.slane %v1704, %v1711
      %v1714 = vunpack.c.l.s4 1983009808
      %v1715 = vunpack.c.0.s8 %v1714
      %v1716 = vlaneseq
      %v1717 = vshrl.u32 %v1716, 7
      %v1718 = vsub.s32 %v1715, %v1717
      %v1719 = vrot.slane %v1705, %v1718
      %v1720 = vcombine.low %v1696, %v1712
      %v1721 = vcombine.high %v1696, %v1712
      %v1723 = vunpack.c.l.s4 1934713408
      %v1724 = vunpack.c.0.s8 %v1723
      %v1725 = vlaneseq
      %v1726 = vshrl.u32 %v1725, 7
      %v1727 = vsub.s32 %v1724, %v1726
      %v1728 = vrot.slane %v1720, %v1727
      %v1730 = vunpack.c.l.s4 1934713408
      %v1731 = vunpack.c.0.s8 %v1730
      %v1732 = vlaneseq
      %v1733 = vshrl.u32 %v1732, 7
      %v1734 = vsub.s32 %v1731, %v1733
      %v1735 = vrot.slane %v1721, %v1734
      %v1736 = vcombine.low %v1703, %v1719
      %v1737 = vcombine.high %v1703, %v1719
      %v1739 = vunpack.c.l.s4 1934713408
      %v1740 = vunpack.c.0.s8 %v1739
      %v1741 = vlaneseq
      %v1742 = vshrl.u32 %v1741, 7
      %v1743 = vsub.s32 %v1740, %v1742
      %v1744 = vrot.slane %v1736, %v1743
      %v1746 = vunpack.c.l.s4 1934713408
      %v1747 = vunpack.c.0.s8 %v1746
      %v1748 = vlaneseq
      %v1749 = vshrl.u32 %v1748, 7
      %v1750 = vsub.s32 %v1747, %v1749
      %v1751 = vrot.slane %v1737, %v1750
      %v1752 = vcombine.high %v1728, 0.0
      %v1753 = vcombine.high %v1735, 0.0
      %v1754 = vcombine.high %v1744, 0.0
      %v1755 = vcombine.high %v1751, 0.0
      %1757 = vrot.lane.b32.xlu0 %v1684, 16
      %v1758 = vpop.permute.xlu0 %1757
      %1761 = vrot.lane.b32.xlu0 %v1667, 32
      %v1762 = vpop.permute.xlu0 %1761
      %1765 = vrot.lane.b32.xlu0 %v1685, 48
      %v1766 = vpop.permute.xlu0 %1765
      %1769 = vrot.lane.b32.xlu0 %v1676, 64
      %v1770 = vpop.permute.xlu0 %1769
      %1773 = vrot.lane.b32.xlu0 %v1686, 80
      %v1774 = vpop.permute.xlu0 %1773
      %1777 = vrot.lane.b32.xlu0 %v1683, 96
      %v1778 = vpop.permute.xlu0 %1777
      %1781 = vrot.lane.b32.xlu0 %v1687, 112
      %v1782 = vpop.permute.xlu0 %1781
      %1785 = vrot.lane.b32.xlu0 %v1752, 16
      %v1786 = vpop.permute.xlu0 %1785
      %1789 = vrot.lane.b32.xlu0 %v1735, 32
      %v1790 = vpop.permute.xlu0 %1789
      %1793 = vrot.lane.b32.xlu0 %v1753, 48
      %v1794 = vpop.permute.xlu0 %1793
      %1797 = vrot.lane.b32.xlu0 %v1744, 64
      %v1798 = vpop.permute.xlu0 %1797
      %1801 = vrot.lane.b32.xlu0 %v1754, 80
      %v1802 = vpop.permute.xlu0 %1801
      %1805 = vrot.lane.b32.xlu0 %v1751, 96
      %v1806 = vpop.permute.xlu0 %1805
      %1809 = vrot.lane.b32.xlu0 %v1755, 112
      %v1810 = vpop.permute.xlu0 %1809
      %v1812 = vsel %vm833, %v1660, %v1758
      %v1813 = vsel %vm835, %v1812, %v1762
      %v1814 = vsel %vm837, %v1813, %v1766
      %v1815 = vsel %vm839, %v1814, %v1770
      %v1816 = vsel %vm841, %v1815, %v1774
      %v1817 = vsel %vm843, %v1816, %v1778
      %v1818 = vsel %vm845, %v1817, %v1782
      %v1819 = vsel %vm833, %v1728, %v1786
      %v1820 = vsel %vm835, %v1819, %v1790
      %v1821 = vsel %vm837, %v1820, %v1794
      %v1822 = vsel %vm839, %v1821, %v1798
      %v1823 = vsel %vm841, %v1822, %v1802
      %v1824 = vsel %vm843, %v1823, %v1806
      %v1825 = vsel %vm845, %v1824, %v1810
      %1826 = vst [vmem:[#allocation3 + $0x20] sm:$0xf] %v1818
      %1827 = vst [vmem:[#allocation3 + $0x28] sm:$0xf] %v1825
      %v1828 = vld [vmem:[#allocation2 + $0x1] sm:$0xff]
      %v1829 = vld [vmem:[#allocation2 + $0x9] sm:$0xff]
      %v1830 = vld [vmem:[#allocation2 + $0x19] sm:$0xff]
      %v1831 = vld [vmem:[#allocation2 + $0x21] sm:$0xff]
      %v1832 = vld [vmem:[#allocation2 + $0x31] sm:$0xff]
      %v1833 = vld [vmem:[#allocation2 + $0x39] sm:$0xff]
      %v1834 = vld [vmem:[#allocation2 + $0x49] sm:$0xff]
      %v1835 = vld [vmem:[#allocation2 + $0x51] sm:$0xff]
      %1844 = vrot.lane.b32.xlu0 %v1828, 126
      %v1845 = vpop.permute.xlu0 %1844
      %1846 = vrot.lane.b32.xlu0 %v1829, 126
      %v1847 = vpop.permute.xlu0 %1846
      %1848 = vrot.lane.b32.xlu0 %v1830, 126
      %v1849 = vpop.permute.xlu0 %1848
      %1850 = vrot.lane.b32.xlu0 %v1831, 126
      %v1851 = vpop.permute.xlu0 %1850
      %1852 = vrot.lane.b32.xlu0 %v1832, 126
      %v1853 = vpop.permute.xlu0 %1852
      %1854 = vrot.lane.b32.xlu0 %v1833, 126
      %v1855 = vpop.permute.xlu0 %1854
      %1856 = vrot.lane.b32.xlu0 %v1834, 126
      %v1857 = vpop.permute.xlu0 %1856
      %1858 = vrot.lane.b32.xlu0 %v1835, 126
      %v1859 = vpop.permute.xlu0 %1858
      %v1868 = vcombine.low %v1845, %v1853
      %v1869 = vcombine.high %v1845, %v1853
      %v1871 = vunpack.c.l.s4 1983009808
      %v1872 = vunpack.c.0.s8 %v1871
      %v1873 = vlaneseq
      %v1874 = vshrl.u32 %v1873, 7
      %v1875 = vsub.s32 %v1872, %v1874
      %v1876 = vrot.slane %v1868, %v1875
      %v1878 = vunpack.c.l.s4 1983009808
      %v1879 = vunpack.c.0.s8 %v1878
      %v1880 = vlaneseq
      %v1881 = vshrl.u32 %v1880, 7
      %v1882 = vsub.s32 %v1879, %v1881
      %v1883 = vrot.slane %v1869, %v1882
      %v1884 = vcombine.low %v1849, %v1857
      %v1885 = vcombine.high %v1849, %v1857
      %v1887 = vunpack.c.l.s4 1983009808
      %v1888 = vunpack.c.0.s8 %v1887
      %v1889 = vlaneseq
      %v1890 = vshrl.u32 %v1889, 7
      %v1891 = vsub.s32 %v1888, %v1890
      %v1892 = vrot.slane %v1884, %v1891
      %v1894 = vunpack.c.l.s4 1983009808
      %v1895 = vunpack.c.0.s8 %v1894
      %v1896 = vlaneseq
      %v1897 = vshrl.u32 %v1896, 7
      %v1898 = vsub.s32 %v1895, %v1897
      %v1899 = vrot.slane %v1885, %v1898
      %v1900 = vcombine.low %v1876, %v1892
      %v1901 = vcombine.high %v1876, %v1892
      %v1903 = vunpack.c.l.s4 1934713408
      %v1904 = vunpack.c.0.s8 %v1903
      %v1905 = vlaneseq
      %v1906 = vshrl.u32 %v1905, 7
      %v1907 = vsub.s32 %v1904, %v1906
      %v1908 = vrot.slane %v1900, %v1907
      %v1910 = vunpack.c.l.s4 1934713408
      %v1911 = vunpack.c.0.s8 %v1910
      %v1912 = vlaneseq
      %v1913 = vshrl.u32 %v1912, 7
      %v1914 = vsub.s32 %v1911, %v1913
      %v1915 = vrot.slane %v1901, %v1914
      %v1916 = vcombine.low %v1883, %v1899
      %v1917 = vcombine.high %v1883, %v1899
      %v1919 = vunpack.c.l.s4 1934713408
      %v1920 = vunpack.c.0.s8 %v1919
      %v1921 = vlaneseq
      %v1922 = vshrl.u32 %v1921, 7
      %v1923 = vsub.s32 %v1920, %v1922
      %v1924 = vrot.slane %v1916, %v1923
      %v1926 = vunpack.c.l.s4 1934713408
      %v1927 = vunpack.c.0.s8 %v1926
      %v1928 = vlaneseq
      %v1929 = vshrl.u32 %v1928, 7
      %v1930 = vsub.s32 %v1927, %v1929
      %v1931 = vrot.slane %v1917, %v1930
      %v1932 = vcombine.high %v1908, 0.0
      %v1933 = vcombine.high %v1915, 0.0
      %v1934 = vcombine.high %v1924, 0.0
      %v1935 = vcombine.high %v1931, 0.0
      %v1936 = vcombine.low %v1847, %v1855
      %v1937 = vcombine.high %v1847, %v1855
      %v1939 = vunpack.c.l.s4 1983009808
      %v1940 = vunpack.c.0.s8 %v1939
      %v1941 = vlaneseq
      %v1942 = vshrl.u32 %v1941, 7
      %v1943 = vsub.s32 %v1940, %v1942
      %v1944 = vrot.slane %v1936, %v1943
      %v1946 = vunpack.c.l.s4 1983009808
      %v1947 = vunpack.c.0.s8 %v1946
      %v1948 = vlaneseq
      %v1949 = vshrl.u32 %v1948, 7
      %v1950 = vsub.s32 %v1947, %v1949
      %v1951 = vrot.slane %v1937, %v1950
      %v1952 = vcombine.low %v1851, %v1859
      %v1953 = vcombine.high %v1851, %v1859
      %v1955 = vunpack.c.l.s4 1983009808
      %v1956 = vunpack.c.0.s8 %v1955
      %v1957 = vlaneseq
      %v1958 = vshrl.u32 %v1957, 7
      %v1959 = vsub.s32 %v1956, %v1958
      %v1960 = vrot.slane %v1952, %v1959
      %v1962 = vunpack.c.l.s4 1983009808
      %v1963 = vunpack.c.0.s8 %v1962
      %v1964 = vlaneseq
      %v1965 = vshrl.u32 %v1964, 7
      %v1966 = vsub.s32 %v1963, %v1965
      %v1967 = vrot.slane %v1953, %v1966
      %v1968 = vcombine.low %v1944, %v1960
      %v1969 = vcombine.high %v1944, %v1960
      %v1971 = vunpack.c.l.s4 1934713408
      %v1972 = vunpack.c.0.s8 %v1971
      %v1973 = vlaneseq
      %v1974 = vshrl.u32 %v1973, 7
      %v1975 = vsub.s32 %v1972, %v1974
      %v1976 = vrot.slane %v1968, %v1975
      %v1978 = vunpack.c.l.s4 1934713408
      %v1979 = vunpack.c.0.s8 %v1978
      %v1980 = vlaneseq
      %v1981 = vshrl.u32 %v1980, 7
      %v1982 = vsub.s32 %v1979, %v1981
      %v1983 = vrot.slane %v1969, %v1982
      %v1984 = vcombine.low %v1951, %v1967
      %v1985 = vcombine.high %v1951, %v1967
      %v1987 = vunpack.c.l.s4 1934713408
      %v1988 = vunpack.c.0.s8 %v1987
      %v1989 = vlaneseq
      %v1990 = vshrl.u32 %v1989, 7
      %v1991 = vsub.s32 %v1988, %v1990
      %v1992 = vrot.slane %v1984, %v1991
      %v1994 = vunpack.c.l.s4 1934713408
      %v1995 = vunpack.c.0.s8 %v1994
      %v1996 = vlaneseq
      %v1997 = vshrl.u32 %v1996, 7
      %v1998 = vsub.s32 %v1995, %v1997
      %v1999 = vrot.slane %v1985, %v1998
      %v2000 = vcombine.high %v1976, 0.0
      %v2001 = vcombine.high %v1983, 0.0
      %v2002 = vcombine.high %v1992, 0.0
      %v2003 = vcombine.high %v1999, 0.0
      %2005 = vrot.lane.b32.xlu0 %v1932, 16
      %v2006 = vpop.permute.xlu0 %2005
      %2009 = vrot.lane.b32.xlu0 %v1915, 32
      %v2010 = vpop.permute.xlu0 %2009
      %2013 = vrot.lane.b32.xlu0 %v1933, 48
      %v2014 = vpop.permute.xlu0 %2013
      %2017 = vrot.lane.b32.xlu0 %v1924, 64
      %v2018 = vpop.permute.xlu0 %2017
      %2021 = vrot.lane.b32.xlu0 %v1934, 80
      %v2022 = vpop.permute.xlu0 %2021
      %2025 = vrot.lane.b32.xlu0 %v1931, 96
      %v2026 = vpop.permute.xlu0 %2025
      %2029 = vrot.lane.b32.xlu0 %v1935, 112
      %v2030 = vpop.permute.xlu0 %2029
      %2033 = vrot.lane.b32.xlu0 %v2000, 16
      %v2034 = vpop.permute.xlu0 %2033
      %2037 = vrot.lane.b32.xlu0 %v1983, 32
      %v2038 = vpop.permute.xlu0 %2037
      %2041 = vrot.lane.b32.xlu0 %v2001, 48
      %v2042 = vpop.permute.xlu0 %2041
      %2045 = vrot.lane.b32.xlu0 %v1992, 64
      %v2046 = vpop.permute.xlu0 %2045
      %2049 = vrot.lane.b32.xlu0 %v2002, 80
      %v2050 = vpop.permute.xlu0 %2049
      %2053 = vrot.lane.b32.xlu0 %v1999, 96
      %v2054 = vpop.permute.xlu0 %2053
      %2057 = vrot.lane.b32.xlu0 %v2003, 112
      %v2058 = vpop.permute.xlu0 %2057
      %v2060 = vsel %vm833, %v1908, %v2006
      %v2061 = vsel %vm835, %v2060, %v2010
      %v2062 = vsel %vm837, %v2061, %v2014
      %v2063 = vsel %vm839, %v2062, %v2018
      %v2064 = vsel %vm841, %v2063, %v2022
      %v2065 = vsel %vm843, %v2064, %v2026
      %v2066 = vsel %vm845, %v2065, %v2030
      %v2067 = vsel %vm833, %v1976, %v2034
      %v2068 = vsel %vm835, %v2067, %v2038
      %v2069 = vsel %vm837, %v2068, %v2042
      %v2070 = vsel %vm839, %v2069, %v2046
      %v2071 = vsel %vm841, %v2070, %v2050
      %v2072 = vsel %vm843, %v2071, %v2054
      %v2073 = vsel %vm845, %v2072, %v2058
      %v2076 = vrot.slane %v2066, 4
      %v2077 = vrot.slane %v2073, 4
      %2080 = vst [vmem:[#allocation3 + $0x20] sm:$0xf0] %v2076
      %2081 = vst [vmem:[#allocation3 + $0x28] sm:$0xf0] %v2077
      %v2082 = vld [vmem:[#allocation2 + $0x2] sm:$0xff]
      %v2083 = vld [vmem:[#allocation2 + $0xa] sm:$0xff]
      %v2084 = vld [vmem:[#allocation2 + $0x1a] sm:$0xff]
      %v2085 = vld [vmem:[#allocation2 + $0x22] sm:$0xff]
      %v2086 = vld [vmem:[#allocation2 + $0x32] sm:$0xff]
      %v2087 = vld [vmem:[#allocation2 + $0x3a] sm:$0xff]
      %v2088 = vld [vmem:[#allocation2 + $0x4a] sm:$0xff]
      %v2089 = vld [vmem:[#allocation2 + $0x52] sm:$0xff]
      %v2090 = vcombine.low %v2082, %v2086
      %v2091 = vcombine.high %v2082, %v2086
      %v2093 = vunpack.c.l.s4 1983009808
      %v2094 = vunpack.c.0.s8 %v2093
      %v2095 = vlaneseq
      %v2096 = vshrl.u32 %v2095, 7
      %v2097 = vsub.s32 %v2094, %v2096
      %v2098 = vrot.slane %v2090, %v2097
      %v2100 = vunpack.c.l.s4 1983009808
      %v2101 = vunpack.c.0.s8 %v2100
      %v2102 = vlaneseq
      %v2103 = vshrl.u32 %v2102, 7
      %v2104 = vsub.s32 %v2101, %v2103
      %v2105 = vrot.slane %v2091, %v2104
      %v2106 = vcombine.low %v2084, %v2088
      %v2107 = vcombine.high %v2084, %v2088
      %v2109 = vunpack.c.l.s4 1983009808
      %v2110 = vunpack.c.0.s8 %v2109
      %v2111 = vlaneseq
      %v2112 = vshrl.u32 %v2111, 7
      %v2113 = vsub.s32 %v2110, %v2112
      %v2114 = vrot.slane %v2106, %v2113
      %v2116 = vunpack.c.l.s4 1983009808
      %v2117 = vunpack.c.0.s8 %v2116
      %v2118 = vlaneseq
      %v2119 = vshrl.u32 %v2118, 7
      %v2120 = vsub.s32 %v2117, %v2119
      %v2121 = vrot.slane %v2107, %v2120
      %v2122 = vcombine.low %v2098, %v2114
      %v2123 = vcombine.high %v2098, %v2114
      %v2125 = vunpack.c.l.s4 1934713408
      %v2126 = vunpack.c.0.s8 %v2125
      %v2127 = vlaneseq
      %v2128 = vshrl.u32 %v2127, 7
      %v2129 = vsub.s32 %v2126, %v2128
      %v2130 = vrot.slane %v2122, %v2129
      %v2132 = vunpack.c.l.s4 1934713408
      %v2133 = vunpack.c.0.s8 %v2132
      %v2134 = vlaneseq
      %v2135 = vshrl.u32 %v2134, 7
      %v2136 = vsub.s32 %v2133, %v2135
      %v2137 = vrot.slane %v2123, %v2136
      %v2138 = vcombine.low %v2105, %v2121
      %v2139 = vcombine.high %v2105, %v2121
      %v2141 = vunpack.c.l.s4 1934713408
      %v2142 = vunpack.c.0.s8 %v2141
      %v2143 = vlaneseq
      %v2144 = vshrl.u32 %v2143, 7
      %v2145 = vsub.s32 %v2142, %v2144
      %v2146 = vrot.slane %v2138, %v2145
      %v2148 = vunpack.c.l.s4 1934713408
      %v2149 = vunpack.c.0.s8 %v2148
      %v2150 = vlaneseq
      %v2151 = vshrl.u32 %v2150, 7
      %v2152 = vsub.s32 %v2149, %v2151
      %v2153 = vrot.slane %v2139, %v2152
      %v2154 = vcombine.high %v2130, 0.0
      %v2155 = vcombine.high %v2137, 0.0
      %v2156 = vcombine.high %v2146, 0.0
      %v2157 = vcombine.high %v2153, 0.0
      %v2158 = vcombine.low %v2083, %v2087
      %v2159 = vcombine.high %v2083, %v2087
      %v2161 = vunpack.c.l.s4 1983009808
      %v2162 = vunpack.c.0.s8 %v2161
      %v2163 = vlaneseq
      %v2164 = vshrl.u32 %v2163, 7
      %v2165 = vsub.s32 %v2162, %v2164
      %v2166 = vrot.slane %v2158, %v2165
      %v2168 = vunpack.c.l.s4 1983009808
      %v2169 = vunpack.c.0.s8 %v2168
      %v2170 = vlaneseq
      %v2171 = vshrl.u32 %v2170, 7
      %v2172 = vsub.s32 %v2169, %v2171
      %v2173 = vrot.slane %v2159, %v2172
      %v2174 = vcombine.low %v2085, %v2089
      %v2175 = vcombine.high %v2085, %v2089
      %v2177 = vunpack.c.l.s4 1983009808
      %v2178 = vunpack.c.0.s8 %v2177
      %v2179 = vlaneseq
      %v2180 = vshrl.u32 %v2179, 7
      %v2181 = vsub.s32 %v2178, %v2180
      %v2182 = vrot.slane %v2174, %v2181
      %v2184 = vunpack.c.l.s4 1983009808
      %v2185 = vunpack.c.0.s8 %v2184
      %v2186 = vlaneseq
      %v2187 = vshrl.u32 %v2186, 7
      %v2188 = vsub.s32 %v2185, %v2187
      %v2189 = vrot.slane %v2175, %v2188
      %v2190 = vcombine.low %v2166, %v2182
      %v2191 = vcombine.high %v2166, %v2182
      %v2193 = vunpack.c.l.s4 1934713408
      %v2194 = vunpack.c.0.s8 %v2193
      %v2195 = vlaneseq
      %v2196 = vshrl.u32 %v2195, 7
      %v2197 = vsub.s32 %v2194, %v2196
      %v2198 = vrot.slane %v2190, %v2197
      %v2200 = vunpack.c.l.s4 1934713408
      %v2201 = vunpack.c.0.s8 %v2200
      %v2202 = vlaneseq
      %v2203 = vshrl.u32 %v2202, 7
      %v2204 = vsub.s32 %v2201, %v2203
      %v2205 = vrot.slane %v2191, %v2204
      %v2206 = vcombine.low %v2173, %v2189
      %v2207 = vcombine.high %v2173, %v2189
      %v2209 = vunpack.c.l.s4 1934713408
      %v2210 = vunpack.c.0.s8 %v2209
      %v2211 = vlaneseq
      %v2212 = vshrl.u32 %v2211, 7
      %v2213 = vsub.s32 %v2210, %v2212
      %v2214 = vrot.slane %v2206, %v2213
      %v2216 = vunpack.c.l.s4 1934713408
      %v2217 = vunpack.c.0.s8 %v2216
      %v2218 = vlaneseq
      %v2219 = vshrl.u32 %v2218, 7
      %v2220 = vsub.s32 %v2217, %v2219
      %v2221 = vrot.slane %v2207, %v2220
      %v2222 = vcombine.high %v2198, 0.0
      %v2223 = vcombine.high %v2205, 0.0
      %v2224 = vcombine.high %v2214, 0.0
      %v2225 = vcombine.high %v2221, 0.0
      %2227 = vrot.lane.b32.xlu0 %v2154, 16
      %v2228 = vpop.permute.xlu0 %2227
      %2231 = vrot.lane.b32.xlu0 %v2137, 32
      %v2232 = vpop.permute.xlu0 %2231
      %2235 = vrot.lane.b32.xlu0 %v2155, 48
      %v2236 = vpop.permute.xlu0 %2235
      %2239 = vrot.lane.b32.xlu0 %v2146, 64
      %v2240 = vpop.permute.xlu0 %2239
      %2243 = vrot.lane.b32.xlu0 %v2156, 80
      %v2244 = vpop.permute.xlu0 %2243
      %2247 = vrot.lane.b32.xlu0 %v2153, 96
      %v2248 = vpop.permute.xlu0 %2247
      %2251 = vrot.lane.b32.xlu0 %v2157, 112
      %v2252 = vpop.permute.xlu0 %2251
      %2255 = vrot.lane.b32.xlu0 %v2222, 16
      %v2256 = vpop.permute.xlu0 %2255
      %2259 = vrot.lane.b32.xlu0 %v2205, 32
      %v2260 = vpop.permute.xlu0 %2259
      %2263 = vrot.lane.b32.xlu0 %v2223, 48
      %v2264 = vpop.permute.xlu0 %2263
      %2267 = vrot.lane.b32.xlu0 %v2214, 64
      %v2268 = vpop.permute.xlu0 %2267
      %2271 = vrot.lane.b32.xlu0 %v2224, 80
      %v2272 = vpop.permute.xlu0 %2271
      %2275 = vrot.lane.b32.xlu0 %v2221, 96
      %v2276 = vpop.permute.xlu0 %2275
      %2279 = vrot.lane.b32.xlu0 %v2225, 112
      %v2280 = vpop.permute.xlu0 %2279
      %v2282 = vsel %vm833, %v2130, %v2228
      %v2283 = vsel %vm835, %v2282, %v2232
      %v2284 = vsel %vm837, %v2283, %v2236
      %v2285 = vsel %vm839, %v2284, %v2240
      %v2286 = vsel %vm841, %v2285, %v2244
      %v2287 = vsel %vm843, %v2286, %v2248
      %v2288 = vsel %vm845, %v2287, %v2252
      %v2289 = vsel %vm833, %v2198, %v2256
      %v2290 = vsel %vm835, %v2289, %v2260
      %v2291 = vsel %vm837, %v2290, %v2264
      %v2292 = vsel %vm839, %v2291, %v2268
      %v2293 = vsel %vm841, %v2292, %v2272
      %v2294 = vsel %vm843, %v2293, %v2276
      %v2295 = vsel %vm845, %v2294, %v2280
      %2296 = vst [vmem:[#allocation3 + $0x30] sm:$0xf] %v2288
      %2297 = vst [vmem:[#allocation3 + $0x38] sm:$0xf] %v2295
      %v2298 = vld [vmem:[#allocation2 + $0x2] sm:$0xff]
      %v2299 = vld [vmem:[#allocation2 + $0xa] sm:$0xff]
      %v2300 = vld [vmem:[#allocation2 + $0x1a] sm:$0xff]
      %v2301 = vld [vmem:[#allocation2 + $0x22] sm:$0xff]
      %v2302 = vld [vmem:[#allocation2 + $0x32] sm:$0xff]
      %v2303 = vld [vmem:[#allocation2 + $0x3a] sm:$0xff]
      %v2304 = vld [vmem:[#allocation2 + $0x4a] sm:$0xff]
      %v2305 = vld [vmem:[#allocation2 + $0x52] sm:$0xff]
      %2314 = vrot.lane.b32.xlu0 %v2298, 127
      %v2315 = vpop.permute.xlu0 %2314
      %2316 = vrot.lane.b32.xlu0 %v2299, 127
      %v2317 = vpop.permute.xlu0 %2316
      %2318 = vrot.lane.b32.xlu0 %v2300, 127
      %v2319 = vpop.permute.xlu0 %2318
      %2320 = vrot.lane.b32.xlu0 %v2301, 127
      %v2321 = vpop.permute.xlu0 %2320
      %2322 = vrot.lane.b32.xlu0 %v2302, 127
      %v2323 = vpop.permute.xlu0 %2322
      %2324 = vrot.lane.b32.xlu0 %v2303, 127
      %v2325 = vpop.permute.xlu0 %2324
      %2326 = vrot.lane.b32.xlu0 %v2304, 127
      %v2327 = vpop.permute.xlu0 %2326
      %2328 = vrot.lane.b32.xlu0 %v2305, 127
      %v2329 = vpop.permute.xlu0 %2328
      %v2338 = vcombine.low %v2315, %v2323
      %v2339 = vcombine.high %v2315, %v2323
      %v2341 = vunpack.c.l.s4 1983009808
      %v2342 = vunpack.c.0.s8 %v2341
      %v2343 = vlaneseq
      %v2344 = vshrl.u32 %v2343, 7
      %v2345 = vsub.s32 %v2342, %v2344
      %v2346 = vrot.slane %v2338, %v2345
      %v2348 = vunpack.c.l.s4 1983009808
      %v2349 = vunpack.c.0.s8 %v2348
      %v2350 = vlaneseq
      %v2351 = vshrl.u32 %v2350, 7
      %v2352 = vsub.s32 %v2349, %v2351
      %v2353 = vrot.slane %v2339, %v2352
      %v2354 = vcombine.low %v2319, %v2327
      %v2355 = vcombine.high %v2319, %v2327
      %v2357 = vunpack.c.l.s4 1983009808
      %v2358 = vunpack.c.0.s8 %v2357
      %v2359 = vlaneseq
      %v2360 = vshrl.u32 %v2359, 7
      %v2361 = vsub.s32 %v2358, %v2360
      %v2362 = vrot.slane %v2354, %v2361
      %v2364 = vunpack.c.l.s4 1983009808
      %v2365 = vunpack.c.0.s8 %v2364
      %v2366 = vlaneseq
      %v2367 = vshrl.u32 %v2366, 7
      %v2368 = vsub.s32 %v2365, %v2367
      %v2369 = vrot.slane %v2355, %v2368
      %v2370 = vcombine.low %v2346, %v2362
      %v2371 = vcombine.high %v2346, %v2362
      %v2373 = vunpack.c.l.s4 1934713408
      %v2374 = vunpack.c.0.s8 %v2373
      %v2375 = vlaneseq
      %v2376 = vshrl.u32 %v2375, 7
      %v2377 = vsub.s32 %v2374, %v2376
      %v2378 = vrot.slane %v2370, %v2377
      %v2380 = vunpack.c.l.s4 1934713408
      %v2381 = vunpack.c.0.s8 %v2380
      %v2382 = vlaneseq
      %v2383 = vshrl.u32 %v2382, 7
      %v2384 = vsub.s32 %v2381, %v2383
      %v2385 = vrot.slane %v2371, %v2384
      %v2386 = vcombine.low %v2353, %v2369
      %v2387 = vcombine.high %v2353, %v2369
      %v2389 = vunpack.c.l.s4 1934713408
      %v2390 = vunpack.c.0.s8 %v2389
      %v2391 = vlaneseq
      %v2392 = vshrl.u32 %v2391, 7
      %v2393 = vsub.s32 %v2390, %v2392
      %v2394 = vrot.slane %v2386, %v2393
      %v2396 = vunpack.c.l.s4 1934713408
      %v2397 = vunpack.c.0.s8 %v2396
      %v2398 = vlaneseq
      %v2399 = vshrl.u32 %v2398, 7
      %v2400 = vsub.s32 %v2397, %v2399
      %v2401 = vrot.slane %v2387, %v2400
      %v2402 = vcombine.high %v2378, 0.0
      %v2403 = vcombine.high %v2385, 0.0
      %v2404 = vcombine.high %v2394, 0.0
      %v2405 = vcombine.high %v2401, 0.0
      %v2406 = vcombine.low %v2317, %v2325
      %v2407 = vcombine.high %v2317, %v2325
      %v2409 = vunpack.c.l.s4 1983009808
      %v2410 = vunpack.c.0.s8 %v2409
      %v2411 = vlaneseq
      %v2412 = vshrl.u32 %v2411, 7
      %v2413 = vsub.s32 %v2410, %v2412
      %v2414 = vrot.slane %v2406, %v2413
      %v2416 = vunpack.c.l.s4 1983009808
      %v2417 = vunpack.c.0.s8 %v2416
      %v2418 = vlaneseq
      %v2419 = vshrl.u32 %v2418, 7
      %v2420 = vsub.s32 %v2417, %v2419
      %v2421 = vrot.slane %v2407, %v2420
      %v2422 = vcombine.low %v2321, %v2329
      %v2423 = vcombine.high %v2321, %v2329
      %v2425 = vunpack.c.l.s4 1983009808
      %v2426 = vunpack.c.0.s8 %v2425
      %v2427 = vlaneseq
      %v2428 = vshrl.u32 %v2427, 7
      %v2429 = vsub.s32 %v2426, %v2428
      %v2430 = vrot.slane %v2422, %v2429
      %v2432 = vunpack.c.l.s4 1983009808
      %v2433 = vunpack.c.0.s8 %v2432
      %v2434 = vlaneseq
      %v2435 = vshrl.u32 %v2434, 7
      %v2436 = vsub.s32 %v2433, %v2435
      %v2437 = vrot.slane %v2423, %v2436
      %v2438 = vcombine.low %v2414, %v2430
      %v2439 = vcombine.high %v2414, %v2430
      %v2441 = vunpack.c.l.s4 1934713408
      %v2442 = vunpack.c.0.s8 %v2441
      %v2443 = vlaneseq
      %v2444 = vshrl.u32 %v2443, 7
      %v2445 = vsub.s32 %v2442, %v2444
      %v2446 = vrot.slane %v2438, %v2445
      %v2448 = vunpack.c.l.s4 1934713408
      %v2449 = vunpack.c.0.s8 %v2448
      %v2450 = vlaneseq
      %v2451 = vshrl.u32 %v2450, 7
      %v2452 = vsub.s32 %v2449, %v2451
      %v2453 = vrot.slane %v2439, %v2452
      %v2454 = vcombine.low %v2421, %v2437
      %v2455 = vcombine.high %v2421, %v2437
      %v2457 = vunpack.c.l.s4 1934713408
      %v2458 = vunpack.c.0.s8 %v2457
      %v2459 = vlaneseq
      %v2460 = vshrl.u32 %v2459, 7
      %v2461 = vsub.s32 %v2458, %v2460
      %v2462 = vrot.slane %v2454, %v2461
      %v2464 = vunpack.c.l.s4 1934713408
      %v2465 = vunpack.c.0.s8 %v2464
      %v2466 = vlaneseq
      %v2467 = vshrl.u32 %v2466, 7
      %v2468 = vsub.s32 %v2465, %v2467
      %v2469 = vrot.slane %v2455, %v2468
      %v2470 = vcombine.high %v2446, 0.0
      %v2471 = vcombine.high %v2453, 0.0
      %v2472 = vcombine.high %v2462, 0.0
      %v2473 = vcombine.high %v2469, 0.0
      %2475 = vrot.lane.b32.xlu0 %v2402, 16
      %v2476 = vpop.permute.xlu0 %2475
      %2479 = vrot.lane.b32.xlu0 %v2385, 32
      %v2480 = vpop.permute.xlu0 %2479
      %2483 = vrot.lane.b32.xlu0 %v2403, 48
      %v2484 = vpop.permute.xlu0 %2483
      %2487 = vrot.lane.b32.xlu0 %v2394, 64
      %v2488 = vpop.permute.xlu0 %2487
      %2491 = vrot.lane.b32.xlu0 %v2404, 80
      %v2492 = vpop.permute.xlu0 %2491
      %2495 = vrot.lane.b32.xlu0 %v2401, 96
      %v2496 = vpop.permute.xlu0 %2495
      %2499 = vrot.lane.b32.xlu0 %v2405, 112
      %v2500 = vpop.permute.xlu0 %2499
      %2503 = vrot.lane.b32.xlu0 %v2470, 16
      %v2504 = vpop.permute.xlu0 %2503
      %2507 = vrot.lane.b32.xlu0 %v2453, 32
      %v2508 = vpop.permute.xlu0 %2507
      %2511 = vrot.lane.b32.xlu0 %v2471, 48
      %v2512 = vpop.permute.xlu0 %2511
      %2515 = vrot.lane.b32.xlu0 %v2462, 64
      %v2516 = vpop.permute.xlu0 %2515
      %2519 = vrot.lane.b32.xlu0 %v2472, 80
      %v2520 = vpop.permute.xlu0 %2519
      %2523 = vrot.lane.b32.xlu0 %v2469, 96
      %v2524 = vpop.permute.xlu0 %2523
      %2527 = vrot.lane.b32.xlu0 %v2473, 112
      %v2528 = vpop.permute.xlu0 %2527
      %v2530 = vsel %vm833, %v2378, %v2476
      %v2531 = vsel %vm835, %v2530, %v2480
      %v2532 = vsel %vm837, %v2531, %v2484
      %v2533 = vsel %vm839, %v2532, %v2488
      %v2534 = vsel %vm841, %v2533, %v2492
      %v2535 = vsel %vm843, %v2534, %v2496
      %v2536 = vsel %vm845, %v2535, %v2500
      %v2537 = vsel %vm833, %v2446, %v2504
      %v2538 = vsel %vm835, %v2537, %v2508
      %v2539 = vsel %vm837, %v2538, %v2512
      %v2540 = vsel %vm839, %v2539, %v2516
      %v2541 = vsel %vm841, %v2540, %v2520
      %v2542 = vsel %vm843, %v2541, %v2524
      %v2543 = vsel %vm845, %v2542, %v2528
      %v2546 = vrot.slane %v2536, 4
      %v2547 = vrot.slane %v2543, 4
      %2550 = vst [vmem:[#allocation3 + $0x30] sm:$0xf0] %v2546
      %2551 = vst [vmem:[#allocation3 + $0x38] sm:$0xf0] %v2547
      %v2552 = vld [vmem:[#allocation2 + $0x2] sm:$0xff]
      %v2553 = vld [vmem:[#allocation2 + $0xa] sm:$0xff]
      %v2554 = vld [vmem:[#allocation2 + $0x1a] sm:$0xff]
      %v2555 = vld [vmem:[#allocation2 + $0x22] sm:$0xff]
      %v2556 = vld [vmem:[#allocation2 + $0x32] sm:$0xff]
      %v2557 = vld [vmem:[#allocation2 + $0x3a] sm:$0xff]
      %v2558 = vld [vmem:[#allocation2 + $0x4a] sm:$0xff]
      %v2559 = vld [vmem:[#allocation2 + $0x52] sm:$0xff]
      %2568 = vrot.lane.b32.xlu0 %v2552, 126
      %v2569 = vpop.permute.xlu0 %2568
      %2570 = vrot.lane.b32.xlu0 %v2553, 126
      %v2571 = vpop.permute.xlu0 %2570
      %2572 = vrot.lane.b32.xlu0 %v2554, 126
      %v2573 = vpop.permute.xlu0 %2572
      %2574 = vrot.lane.b32.xlu0 %v2555, 126
      %v2575 = vpop.permute.xlu0 %2574
      %2576 = vrot.lane.b32.xlu0 %v2556, 126
      %v2577 = vpop.permute.xlu0 %2576
      %2578 = vrot.lane.b32.xlu0 %v2557, 126
      %v2579 = vpop.permute.xlu0 %2578
      %2580 = vrot.lane.b32.xlu0 %v2558, 126
      %v2581 = vpop.permute.xlu0 %2580
      %2582 = vrot.lane.b32.xlu0 %v2559, 126
      %v2583 = vpop.permute.xlu0 %2582
      %v2592 = vcombine.low %v2569, %v2577
      %v2593 = vcombine.high %v2569, %v2577
      %v2595 = vunpack.c.l.s4 1983009808
      %v2596 = vunpack.c.0.s8 %v2595
      %v2597 = vlaneseq
      %v2598 = vshrl.u32 %v2597, 7
      %v2599 = vsub.s32 %v2596, %v2598
      %v2600 = vrot.slane %v2592, %v2599
      %v2602 = vunpack.c.l.s4 1983009808
      %v2603 = vunpack.c.0.s8 %v2602
      %v2604 = vlaneseq
      %v2605 = vshrl.u32 %v2604, 7
      %v2606 = vsub.s32 %v2603, %v2605
      %v2607 = vrot.slane %v2593, %v2606
      %v2608 = vcombine.low %v2573, %v2581
      %v2609 = vcombine.high %v2573, %v2581
      %v2611 = vunpack.c.l.s4 1983009808
      %v2612 = vunpack.c.0.s8 %v2611
      %v2613 = vlaneseq
      %v2614 = vshrl.u32 %v2613, 7
      %v2615 = vsub.s32 %v2612, %v2614
      %v2616 = vrot.slane %v2608, %v2615
      %v2618 = vunpack.c.l.s4 1983009808
      %v2619 = vunpack.c.0.s8 %v2618
      %v2620 = vlaneseq
      %v2621 = vshrl.u32 %v2620, 7
      %v2622 = vsub.s32 %v2619, %v2621
      %v2623 = vrot.slane %v2609, %v2622
      %v2624 = vcombine.low %v2600, %v2616
      %v2625 = vcombine.high %v2600, %v2616
      %v2627 = vunpack.c.l.s4 1934713408
      %v2628 = vunpack.c.0.s8 %v2627
      %v2629 = vlaneseq
      %v2630 = vshrl.u32 %v2629, 7
      %v2631 = vsub.s32 %v2628, %v2630
      %v2632 = vrot.slane %v2624, %v2631
      %v2634 = vunpack.c.l.s4 1934713408
      %v2635 = vunpack.c.0.s8 %v2634
      %v2636 = vlaneseq
      %v2637 = vshrl.u32 %v2636, 7
      %v2638 = vsub.s32 %v2635, %v2637
      %v2639 = vrot.slane %v2625, %v2638
      %v2640 = vcombine.low %v2607, %v2623
      %v2641 = vcombine.high %v2607, %v2623
      %v2643 = vunpack.c.l.s4 1934713408
      %v2644 = vunpack.c.0.s8 %v2643
      %v2645 = vlaneseq
      %v2646 = vshrl.u32 %v2645, 7
      %v2647 = vsub.s32 %v2644, %v2646
      %v2648 = vrot.slane %v2640, %v2647
      %v2650 = vunpack.c.l.s4 1934713408
      %v2651 = vunpack.c.0.s8 %v2650
      %v2652 = vlaneseq
      %v2653 = vshrl.u32 %v2652, 7
      %v2654 = vsub.s32 %v2651, %v2653
      %v2655 = vrot.slane %v2641, %v2654
      %v2656 = vcombine.high %v2632, 0.0
      %v2657 = vcombine.high %v2639, 0.0
      %v2658 = vcombine.high %v2648, 0.0
      %v2659 = vcombine.high %v2655, 0.0
      %v2660 = vcombine.low %v2571, %v2579
      %v2661 = vcombine.high %v2571, %v2579
      %v2663 = vunpack.c.l.s4 1983009808
      %v2664 = vunpack.c.0.s8 %v2663
      %v2665 = vlaneseq
      %v2666 = vshrl.u32 %v2665, 7
      %v2667 = vsub.s32 %v2664, %v2666
      %v2668 = vrot.slane %v2660, %v2667
      %v2670 = vunpack.c.l.s4 1983009808
      %v2671 = vunpack.c.0.s8 %v2670
      %v2672 = vlaneseq
      %v2673 = vshrl.u32 %v2672, 7
      %v2674 = vsub.s32 %v2671, %v2673
      %v2675 = vrot.slane %v2661, %v2674
      %v2676 = vcombine.low %v2575, %v2583
      %v2677 = vcombine.high %v2575, %v2583
      %v2679 = vunpack.c.l.s4 1983009808
      %v2680 = vunpack.c.0.s8 %v2679
      %v2681 = vlaneseq
      %v2682 = vshrl.u32 %v2681, 7
      %v2683 = vsub.s32 %v2680, %v2682
      %v2684 = vrot.slane %v2676, %v2683
      %v2686 = vunpack.c.l.s4 1983009808
      %v2687 = vunpack.c.0.s8 %v2686
      %v2688 = vlaneseq
      %v2689 = vshrl.u32 %v2688, 7
      %v2690 = vsub.s32 %v2687, %v2689
      %v2691 = vrot.slane %v2677, %v2690
      %v2692 = vcombine.low %v2668, %v2684
      %v2693 = vcombine.high %v2668, %v2684
      %v2695 = vunpack.c.l.s4 1934713408
      %v2696 = vunpack.c.0.s8 %v2695
      %v2697 = vlaneseq
      %v2698 = vshrl.u32 %v2697, 7
      %v2699 = vsub.s32 %v2696, %v2698
      %v2700 = vrot.slane %v2692, %v2699
      %v2702 = vunpack.c.l.s4 1934713408
      %v2703 = vunpack.c.0.s8 %v2702
      %v2704 = vlaneseq
      %v2705 = vshrl.u32 %v2704, 7
      %v2706 = vsub.s32 %v2703, %v2705
      %v2707 = vrot.slane %v2693, %v2706
      %v2708 = vcombine.low %v2675, %v2691
      %v2709 = vcombine.high %v2675, %v2691
      %v2711 = vunpack.c.l.s4 1934713408
      %v2712 = vunpack.c.0.s8 %v2711
      %v2713 = vlaneseq
      %v2714 = vshrl.u32 %v2713, 7
      %v2715 = vsub.s32 %v2712, %v2714
      %v2716 = vrot.slane %v2708, %v2715
      %v2718 = vunpack.c.l.s4 1934713408
      %v2719 = vunpack.c.0.s8 %v2718
      %v2720 = vlaneseq
      %v2721 = vshrl.u32 %v2720, 7
      %v2722 = vsub.s32 %v2719, %v2721
      %v2723 = vrot.slane %v2709, %v2722
      %v2724 = vcombine.high %v2700, 0.0
      %v2725 = vcombine.high %v2707, 0.0
      %v2726 = vcombine.high %v2716, 0.0
      %v2727 = vcombine.high %v2723, 0.0
      %2729 = vrot.lane.b32.xlu0 %v2656, 16
      %v2730 = vpop.permute.xlu0 %2729
      %2733 = vrot.lane.b32.xlu0 %v2639, 32
      %v2734 = vpop.permute.xlu0 %2733
      %2737 = vrot.lane.b32.xlu0 %v2657, 48
      %v2738 = vpop.permute.xlu0 %2737
      %2741 = vrot.lane.b32.xlu0 %v2648, 64
      %v2742 = vpop.permute.xlu0 %2741
      %2745 = vrot.lane.b32.xlu0 %v2658, 80
      %v2746 = vpop.permute.xlu0 %2745
      %2749 = vrot.lane.b32.xlu0 %v2655, 96
      %v2750 = vpop.permute.xlu0 %2749
      %2753 = vrot.lane.b32.xlu0 %v2659, 112
      %v2754 = vpop.permute.xlu0 %2753
      %2757 = vrot.lane.b32.xlu0 %v2724, 16
      %v2758 = vpop.permute.xlu0 %2757
      %2761 = vrot.lane.b32.xlu0 %v2707, 32
      %v2762 = vpop.permute.xlu0 %2761
      %2765 = vrot.lane.b32.xlu0 %v2725, 48
      %v2766 = vpop.permute.xlu0 %2765
      %2769 = vrot.lane.b32.xlu0 %v2716, 64
      %v2770 = vpop.permute.xlu0 %2769
      %2773 = vrot.lane.b32.xlu0 %v2726, 80
      %v2774 = vpop.permute.xlu0 %2773
      %2777 = vrot.lane.b32.xlu0 %v2723, 96
      %v2778 = vpop.permute.xlu0 %2777
      %2781 = vrot.lane.b32.xlu0 %v2727, 112
      %v2782 = vpop.permute.xlu0 %2781
      %v2784 = vsel %vm833, %v2632, %v2730
      %v2785 = vsel %vm835, %v2784, %v2734
      %v2786 = vsel %vm837, %v2785, %v2738
      %v2787 = vsel %vm839, %v2786, %v2742
      %v2788 = vsel %vm841, %v2787, %v2746
      %v2789 = vsel %vm843, %v2788, %v2750
      %v2790 = vsel %vm845, %v2789, %v2754
      %v2791 = vsel %vm833, %v2700, %v2758
      %v2792 = vsel %vm835, %v2791, %v2762
      %v2793 = vsel %vm837, %v2792, %v2766
      %v2794 = vsel %vm839, %v2793, %v2770
      %v2795 = vsel %vm841, %v2794, %v2774
      %v2796 = vsel %vm843, %v2795, %v2778
      %v2797 = vsel %vm845, %v2796, %v2782
      %2798 = vst [vmem:[#allocation3 + $0x40] sm:$0xf] %v2790
      %2799 = vst [vmem:[#allocation3 + $0x48] sm:$0xf] %v2797
      %v2800 = vld [vmem:[%s3] sm:$0x3]
      %v2801 = vld [vmem:[#allocation3] sm:$0xff]
      %v2802 = vld [vmem:[#allocation3 + $0x8] sm:$0xff]
      %v2803 = vld [vmem:[#allocation3 + $0x10] sm:$0xff]
      %v2804 = vld [vmem:[#allocation3 + $0x18] sm:$0xff]
      %v2805 = vld [vmem:[#allocation3 + $0x20] sm:$0xff]
      %v2806 = vld [vmem:[#allocation3 + $0x28] sm:$0xff]
      %v2807 = vld [vmem:[#allocation3 + $0x30] sm:$0xff]
      %v2808 = vld [vmem:[#allocation3 + $0x38] sm:$0xff]
      %v2809 = vld [vmem:[#allocation3 + $0x40] sm:$0xf]
      %v2810 = vld [vmem:[#allocation3 + $0x48] sm:$0xf]
      %v2811 = vpack.c.bf16 %v2803, %v2801
      %v2812 = vpack.c.bf16 %v2804, %v2802
      %v2813 = vpack.c.bf16 %v2807, %v2805
      %v2814 = vpack.c.bf16 %v2808, %v2806
      %v2815 = vpack.c.bf16 %v2809, %v2809
      %v2816 = vpack.c.bf16 %v2810, %v2810
      %v2817 = vld [vmem:[%s4] sm:$0xf]
      %2819 = vset.pattern.permute.xlu0 0
      %2820 = vperm.xlu0 %2819, %v2817
      %v2821 = vpop.permute.xlu0 %2820
      %vm2823 = vcmask 293888
      %v2825 = vsel %vm2823, %v2800, 0
      %vm2827 = vcmask 1041408
      %v2829 = vsel %vm2827, %v2815, 0
      %v2832 = vsel %vm2827, %v2816, 0
      %2834 = vmatprep.subr.bf16.mxu0 %v2812
      %2835 = vmatpush1.bf16.msra.mxu0 %v2811
      %2836 = vmatprep.subr.bf16.mxu0 %v2814
      %2837 = vmatpush1.bf16.msra.mxu0 %v2813
      %2838 = vmatprep.subr.bf16.mxu0 %v2832
      %2839 = vmatpush1.bf16.msra.mxu0 %v2829
      %2840 = vmatprep.subr.bf16.mxu0 0
      %2841 = vmatpush1.bf16.msra.mxu0 0
      %2842 = vmatprep.subr.bf16.mxu0 0
      %2843 = vmatpush1.bf16.msra.mxu0 0
      %2844 = vmatprep.subr.bf16.mxu0 0
      %2845 = vmatpush1.bf16.msra.mxu0 0
      %2846 = vmatprep.subr.bf16.mxu0 0
      %2847 = vmatpush1.bf16.msra.mxu0 0
      %2848 = vmatprep.subr.bf16.mxu0 0
      %2849 = vmatpush1.bf16.msra.mxu0 0
      %2850 = vmatprep.subr.bf16.mxu0 0
      %2851 = vmatpush1.bf16.msra.mxu0 0
      %2852 = vmatprep.subr.bf16.mxu0 0
      %2853 = vmatpush1.bf16.msra.mxu0 0
      %2854 = vmatprep.subr.bf16.mxu0 0
      %2855 = vmatpush1.bf16.msra.mxu0 0
      %2856 = vmatprep.subr.bf16.mxu0 0
      %2857 = vmatpush1.bf16.msra.mxu0 0
      %2858 = vmatprep.subr.bf16.mxu0 0
      %2859 = vmatpush1.bf16.msra.mxu0 0
      %2860 = vmatprep.subr.bf16.mxu0 0
      %2861 = vmatpush1.bf16.msra.mxu0 0
      %2862 = vmatprep.subr.bf16.mxu0 0
      %2863 = vmatpush1.bf16.msra.mxu0 0
      %2864 = vmatprep.subr.bf16.mxu0 0
      %2865 = vmatpush1.bf16.msra.mxu0 0
      %2866 = vmatprep.mubr.bf16.mxu0 0
      %2867 = vmatmul.mubr.bf16.gmra.mrb[0].mxu0 %v2825
      %v2868 = vpop.f32.mrb[0].mxu0
      %v2869 = vadd.f32 %v2821, %v2868
      %v2870 = vpop.f32.mrb[0].mxu0
      %v2871 = vadd.f32 %v2821, %v2870
      %v2872 = vpop.f32.mrb[0].mxu0
      %v2873 = vpop.f32.mrb[0].mxu0
      %2874 = vdwg.mxu0
      %v2877 = vcombine.low %v2869, %v2871
      %2879 = vst [vmem:[%s336] sm:$0xff] %v2877
      %v2880 = vld [vmem:[%s5] sm:$0xf]
      %2882 = vset.pattern.permute.xlu0 0
      %2883 = vperm.xlu0 %2882, %v2880
      %v2884 = vpop.permute.xlu0 %2883
      %v2886 = vmul.f32 %v2869, %v2884
      %v2887 = vmul.f32 %v2871, %v2884
      %v2888 = vld [vmem:[%s331] sm:$0xff]
      %v2890 = vcombine.high %v2888, %v2888
      %v2892 = vadd.f32 %v2886, %v2888
      %v2893 = vadd.f32 %v2887, %v2890
      %vm2894 = vcmask 1043456
      %v2895 = vsel %vm2894, %v2892, inf
      %v2896 = vsel %vm2894, %v2893, inf
      %v2897 = vmin.f32 %v2895, %v2896
      %2898 = vmin.xlane.f32.xlu0 %v2897
      %v2899 = vpop.xlane.xlu0 %2898
      %v2900 = vrot.slane %v2899, 4
      %v2901 = vmin.f32 %v2899, %v2900
      %v2902 = vrot.slane %v2901, 2
      %v2903 = vmin.f32 %v2901, %v2902
      %v2904 = vrot.slane %v2903, 1
      %v2905 = vmin.f32 %v2903, %v2904
      %s2906 = vtos %v2905
      %v2907 = vstv %s2906
      %2908 = vst [vmem:[%s339] sm:$0x1] %v2907
      %v2909 = vsel %vm2894, %v2892, -inf
      %v2910 = vsel %vm2894, %v2893, -inf
      %v2911 = vmax.f32 %v2909, %v2910
      %2912 = vmax.xlane.f32.xlu0 %v2911
      %v2913 = vpop.xlane.xlu0 %2912
      %v2914 = vrot.slane %v2913, 4
      %v2915 = vmax.f32 %v2913, %v2914
      %v2916 = vrot.slane %v2915, 2
      %v2917 = vmax.f32 %v2915, %v2916
      %v2918 = vrot.slane %v2917, 1
      %v2919 = vmax.f32 %v2917, %v2918
      %s2920 = vtos %v2919
      %v2921 = vstv %s2920
      %2922 = vst [vmem:[%s342] sm:$0x1] %v2921
      %p2923 = scmp.lt.s32.totalorder %s20, 1
      %s2924 = scalar_select %p2923, %s20, 1
      %s2925 = smul.addr %s2924, 2
      %s2926 = smul.addr %s2925, 4
      %s2927 = scalar_lea.vmem %s6, %s2926
      %p2928 = scmp.lt.s32.totalorder %s20, 1
      %s2929 = scalar_select %p2928, %s20, 1
      %s2930 = scalar_lea.vmem %s7, %s2929
      %p2931 = scmp.lt.s32.totalorder %s20, 1
      %s2932 = scalar_select %p2931, %s20, 1
      %s2933 = scalar_lea.vmem %s8, %s2932
      // Predicated region
      $region45: #{q_resblockbn_forward.6} parent=43 // pred_check
        %p2934 = pneg %p174
      $region46: #{q_resblockbn_forward.6} parent=43 // pred_check_branch
        %2936 = sbr.rel (%p2934) target = $region48
      $region47: #{q_resblockbn_forward.6} parent=43 // pred_region
        _
      $region48: #{q_resblockbn_forward.6} parent=43 // pred_fallthru
        _
      // Predicated region
      $region49: #{q_resblockbn_forward.6} parent=43 // pred_check
        %p2937 = pneg %p200
      $region50: #{q_resblockbn_forward.6} parent=43 // pred_check_branch
        %2939 = sbr.rel (%p2937) target = $region52
      $region51: #{q_resblockbn_forward.6} parent=43 // pred_region
        _
      $region52: #{q_resblockbn_forward.6} parent=43 // pred_fallthru
        _
      // Predicated region
      $region53: #{q_resblockbn_forward.6} parent=43 // pred_check
        %p2940 = pneg %p226
      $region54: #{q_resblockbn_forward.6} parent=43 // pred_check_branch
        %2942 = sbr.rel (%p2940) target = $region56
      $region55: #{q_resblockbn_forward.6} parent=43 // pred_region
        _
      $region56: #{q_resblockbn_forward.6} parent=43 // pred_fallthru
        _
    $region44: #{q_resblockbn_forward.6} parent=5 // pred_fallthru
      _
    %p2943 = scmp.le.s32.totalorder 2, %s15
    // Predicated region
    $region57: #{q_resblockbn_forward.6} parent=5 // pred_check
      %p2944 = pneg %p2943
    $region58: #{q_resblockbn_forward.6} parent=5 // pred_check_branch
      %2946 = sbr.rel (%p2944) target = $region60
    $region59: #{q_resblockbn_forward.6} parent=5 // pred_region
      %s2947 = ssub.s32 %s15, 2
      // Predicated region
      $region61: #{q_resblockbn_forward.6} parent=59 // pred_check
        %p2948 = pneg %p180
      $region62: #{q_resblockbn_forward.6} parent=59 // pred_check_branch
        %2950 = sbr.rel (%p2948) target = $region64
      $region63: #{q_resblockbn_forward.6} parent=59 // pred_region
        %p2951 = scmp.lt.s32.totalorder %s21, 1
        %s2952 = scalar_select %p2951, %s21, 1
        %s2953 = smul.addr %s2952, 2
        %s2954 = smul.addr %s2953, 4
        %s2955 = scalar_lea.vmem %s6, %s2954
      $region64: #{q_resblockbn_forward.6} parent=59 // pred_fallthru
        _
      // Predicated region
      $region65: #{q_resblockbn_forward.6} parent=59 // pred_check
        %p2956 = pneg %p206
      $region66: #{q_resblockbn_forward.6} parent=59 // pred_check_branch
        %2958 = sbr.rel (%p2956) target = $region68
      $region67: #{q_resblockbn_forward.6} parent=59 // pred_region
        %p2959 = scmp.lt.s32.totalorder %s21, 1
        %s2960 = scalar_select %p2959, %s21, 1
        %s2961 = scalar_lea.vmem %s7, %s2960
      $region68: #{q_resblockbn_forward.6} parent=59 // pred_fallthru
        _
      // Predicated region
      $region69: #{q_resblockbn_forward.6} parent=59 // pred_check
        %p2962 = pneg %p232
      $region70: #{q_resblockbn_forward.6} parent=59 // pred_check_branch
        %2964 = sbr.rel (%p2962) target = $region72
      $region71: #{q_resblockbn_forward.6} parent=59 // pred_region
        %p2965 = scmp.lt.s32.totalorder %s21, 1
        %s2966 = scalar_select %p2965, %s21, 1
        %s2967 = scalar_lea.vmem %s8, %s2966
      $region72: #{q_resblockbn_forward.6} parent=59 // pred_fallthru
        _
    $region60: #{q_resblockbn_forward.6} parent=5 // pred_fallthru
      _
  $region6: #{q_resblockbn_forward.6} parent=0 // loop_footer
    %s19 = sadd.s32 1, %s15
  $region7: #{q_resblockbn_forward.6} parent=0 // loop_footer_branch
    %14 = sbr.rel target = $region3
  $region8: #{q_resblockbn_forward.6} parent=0 // loop_exit
    _

</llo_original>
